<compile_context>
chip_gen: v5e
topology: v5e:2x2
jax: 0.10.0
libtpu: 0.0.40
codegen_flags: <defaults>
</compile_context>

<pallas_src>
import jax
import jax.numpy as jnp
from jax.experimental import pallas as pl
from jax.experimental.pallas import tpu as pltpu

# ------------------------------- sizes --------------------------------------
B = 2          # batch of images
H = W = 16     # image spatial size
N = 8          # contour lines per image
L = 128        # samples per contour line
CIN_IMG = 4    # rgb + binary mask
CIN_LIN = 3    # rgb
D_CTX = 32     # context vector dim
D_HID = 32     # hidden channels of the line segmentation model

_IMAGENET_MEAN = (0.485, 0.456, 0.406)
_IMAGENET_STD = (0.229, 0.224, 0.225)
# x_norm = x/255/std - mean/std  ==  x * LINE_SCALE + LINE_SHIFT
LINE_SCALE = tuple(1.0 / (255.0 * s) for s in _IMAGENET_STD)
LINE_SHIFT = tuple(-m / s for m, s in zip(_IMAGENET_MEAN, _IMAGENET_STD))


# ----------------------------- kernel helpers --------------------------------
def _row_to_col(row):
    """(1, D) row vector -> (D, 1) column vector using only broadcast/iota/reduce."""
    d = row.shape[-1]
    i = jax.lax.broadcasted_iota(jnp.int32, (d, d), 0)
    j = jax.lax.broadcasted_iota(jnp.int32, (d, d), 1)
    diag = jnp.where(i == j, row, 0.0)                 # (D, D), row broadcast over sublanes
    return jnp.sum(diag, axis=1, keepdims=True)        # (D, 1)


def _shift_zero(x, direction, lane_idx):
    """Shift along the lane axis with zero fill (implements zero padding).

    direction=+1: result[l] = x[l-1] (zero at l=0); direction=-1: result[l] = x[l+1].
    """
    if direction > 0:
        rolled = pltpu.roll(x, shift=1, axis=1)
        return jnp.where(lane_idx == 0, 0.0, rolled)
    else:
        rolled = pltpu.roll(x, shift=L - 1, axis=1)
        return jnp.where(lane_idx == L - 1, 0.0, rolled)


# ------------------------------ fused kernel ---------------------------------
def fused_kernel(img_ref, cl_ref, nsc_ref, nsh_ref,
                 wimg_ref, bimg_ref, wg_ref, bg_ref, wb_ref, bb_ref,
                 w1_ref, b1_ref, w2_ref, b2_ref,
                 out_ref, xpad_ref):
    """One grid step = one image: context vector + its N contour lines.

    img_ref : (1, H, W, 4) f32 raw rgb(+mask), normalization applied in-kernel
    cl_ref  : (1, 3, N, L) f32 raw contour lines (native layout, L on lanes)
    nsc/nsh : (1, 4) per-channel normalize scale / shift (mask: 1 / 0)
    wimg    : (36, 32) im2col context-conv weights, bimg (1, 32)
    wg/bg, wb/bb : FiLM projections (32,32)/(1,32)
    w1      : (9, 32, 1) line conv1 weights (tap*3+chan, d, 1), b1 (32, 1)
    w2      : (3, 32) line conv2 weights, b2 (1,1) scalar in SMEM
    out_ref : (1, N, L)  (lane-dense output block)
    xpad_ref: VMEM scratch (H+2, W+2, 4)
    """
    # ---------------- phase 1: context vector (im2col + MXU) ----------------
    xn_img = img_ref[0] * nsc_ref[...] + nsh_ref[...]          # (H, W, 4) normalized
    xpad_ref[...] = jnp.zeros_like(xpad_ref)
    xpad_ref[1:H + 1, 1:W + 1, :] = xn_img                     # zero "same" padding
    xp = xpad_ref[...]

    patches = [xp[dy:dy + H, dx:dx + W, :]                     # 9 x (H, W, 4)
               for dy in range(3) for dx in range(3)]
    xcat = jnp.concatenate(patches, axis=-1)                   # (H, W, 36)
    xcol = xcat.reshape(H * W, 9 * CIN_IMG)                    # (256, 36)

    feat = jnp.dot(xcol, wimg_ref[...],
                   preferred_element_type=jnp.float32)         # (256, 32) MXU
    feat = jnp.maximum(feat + bimg_ref[...], 0.0)
    ctx = jnp.mean(feat, axis=0, keepdims=True)                # (1, D_CTX) global avg pool

    # FiLM conditioning (computed once per image, never written to HBM).
    gamma = jnp.dot(ctx, wg_ref[...], preferred_element_type=jnp.float32) + bg_ref[...]
    beta = jnp.dot(ctx, wb_ref[...], preferred_element_type=jnp.float32) + bb_ref[...]
    gamma_c = _row_to_col(gamma)                               # (D_HID, 1)
    beta_c = _row_to_col(beta)                                 # (D_HID, 1)

    # Fold the FiLM scale into the conv1 weights / bias:
    #   relu((conv + b1) * gamma + beta) == relu(conv_with(w1*gamma) + (b1*gamma + beta))
    w1f = [w1_ref[r] * gamma_c for r in range(9)]              # 9 x (D_HID, 1)
    bfilm = b1_ref[...] * gamma_c + beta_c                     # (D_HID, 1)

    # ---------------- phase 2: contour-line segmentation ---------------------
    x = cl_ref[0]                                              # (3, N, L), L on lanes
    lane_nl = jax.lax.broadcasted_iota(jnp.int32, (N, L), 1)
    lane_1l = jax.lax.broadcasted_iota(jnp.int32, (1, L), 1)

    # Per-channel normalization with compile-time constants (VPU, in-register).
    xn = [x[c] * LINE_SCALE[c] + LINE_SHIFT[c] for c in range(CIN_LIN)]   # 3 x (N, L)

    # Shifted (zero-padded) taps for the k=3 "same" conv, all lane-dense.
    xs = []                                                    # index = k*3 + c
    for k in range(3):
        for c in range(CIN_LIN):
            if k == 0:
                xs.append(_shift_zero(xn[c], +1, lane_nl))     # x[l-1]
            elif k == 1:
                xs.append(xn[c])                               # x[l]
            else:
                xs.append(_shift_zero(xn[c], -1, lane_nl))     # x[l+1]

    b2 = b2_ref[0, 0]                                          # scalar from SMEM
    for n in range(N):                                         # N=8, fully unrolled
        # conv1 + FiLM + ReLU: h (D_HID, L), built from (D_HID,1)x(1,L) outer products.
        h = w1f[0] * xs[0][n:n + 1, :]
        for r in range(1, 9):
            h = h + w1f[r] * xs[r][n:n + 1, :]
        h = jnp.maximum(h + bfilm, 0.0)                        # (D_HID, L)

        # conv2 (D_HID -> 1, k=3 "same") as one MXU matmul + shifted tap adds.
        p = jnp.dot(w2_ref[...], h, preferred_element_type=jnp.float32)   # (3, L)
        left = _shift_zero(p[0:1, :], +1, lane_1l)             # tap k=0 -> uses h[l-1]
        right = _shift_zero(p[2:3, :], -1, lane_1l)            # tap k=2 -> uses h[l+1]
        o = p[1:2, :] + left + right + b2                      # (1, L)
        out_ref[0, n:n + 1, :] = jax.nn.sigmoid(o)


# ------------------------------ JAX wrapper ----------------------------------
@jax.jit
def probabilistic_segmentation_unet_forward(rgb_images, binary_masks, clines_rgbs, params):
    """Full forward: context vectors + per-line probabilistic segmentation.

    rgb_images (B,3,H,W) uint8, binary_masks (B,H,W) float32,
    clines_rgbs (B,3,N,L) uint8  ->  (B, N, L) float32 probabilities.
    """
    # TODO(synk): ColorJitter/GaussianBlur branch (training-only augmentation)
    # has no deterministic Pallas equivalent; identity path is used (module default).

    # Minimal wrapper prep: cast + layout only. Normalization / padding / the
    # context->lines hand-off all happen inside the single fused kernel.
    imgs = jnp.concatenate(
        [jnp.transpose(rgb_images.astype(jnp.float32), (0, 2, 3, 1)),
         binary_masks.astype(jnp.float32)[..., None]], axis=-1)          # (B, H, W, 4)
    clines = clines_rgbs.astype(jnp.float32)                             # (B, 3, N, L)

    # Parameter re-layout (tiny, weight-sized tensors).
    wimg = params["w_img"].reshape(9 * CIN_IMG, D_CTX)                   # (36, 32)
    w1col = params["w1_line"].reshape(9, D_HID)[..., None]               # (9, 32, 1)
    b1col = params["b1_line"].reshape(D_HID, 1)                          # (32, 1)
    nscale = jnp.array([[*LINE_SCALE, 1.0]], dtype=jnp.float32)          # (1, 4)
    nshift = jnp.array([[*LINE_SHIFT, 0.0]], dtype=jnp.float32)          # (1, 4)

    return pl.pallas_call(
        fused_kernel,
        out_shape=jax.ShapeDtypeStruct((B, N, L), jnp.float32),
        grid=(B,),
        in_specs=[
            pl.BlockSpec((1, H, W, CIN_IMG), lambda b: (b, 0, 0, 0)),
            pl.BlockSpec((1, CIN_LIN, N, L), lambda b: (b, 0, 0, 0)),
            pl.BlockSpec((1, CIN_IMG), lambda b: (0, 0)),
            pl.BlockSpec((1, CIN_IMG), lambda b: (0, 0)),
            pl.BlockSpec((9 * CIN_IMG, D_CTX), lambda b: (0, 0)),
            pl.BlockSpec((1, D_CTX), lambda b: (0, 0)),
            pl.BlockSpec((D_CTX, D_HID), lambda b: (0, 0)),
            pl.BlockSpec((1, D_HID), lambda b: (0, 0)),
            pl.BlockSpec((D_CTX, D_HID), lambda b: (0, 0)),
            pl.BlockSpec((1, D_HID), lambda b: (0, 0)),
            pl.BlockSpec((9, D_HID, 1), lambda b: (0, 0, 0)),
            pl.BlockSpec((D_HID, 1), lambda b: (0, 0)),
            pl.BlockSpec((3, D_HID), lambda b: (0, 0)),
            pl.BlockSpec(memory_space=pltpu.MemorySpace.SMEM),           # b2 (1,1) scalar
        ],
        out_specs=pl.BlockSpec((1, N, L), lambda b: (b, 0, 0)),
        scratch_shapes=[pltpu.VMEM((H + 2, W + 2, CIN_IMG), jnp.float32)],
        compiler_params=pltpu.CompilerParams(dimension_semantics=("parallel",)),
    )(imgs, clines, nscale, nshift, wimg, params["b_img"],
      params["wg"], params["bg"], params["wb"], params["bb"],
      w1col, b1col, params["w2_line"], params["b2_line"])


# --------------------------- deterministic params ----------------------------
def init_params(key):
    ks = jax.random.split(key, 5)
    s = 0.1
    return {
        "w_img": s * jax.random.normal(ks[0], (3, 3, CIN_IMG, D_CTX), jnp.float32),
        "b_img": jnp.zeros((1, D_CTX), jnp.float32),
        "w1_line": s * jax.random.normal(ks[1], (3, CIN_LIN, D_HID), jnp.float32),
        "b1_line": jnp.zeros((1, D_HID), jnp.float32),
        "wg": s * jax.random.normal(ks[2], (D_CTX, D_HID), jnp.float32),
        "bg": jnp.ones((1, D_HID), jnp.float32),
        "wb": s * jax.random.normal(ks[3], (D_CTX, D_HID), jnp.float32),
        "bb": jnp.zeros((1, D_HID), jnp.float32),
        "w2_line": s * jax.random.normal(ks[4], (3, D_HID), jnp.float32),
        "b2_line": jnp.zeros((1, 1), jnp.float32),
    }


# ------------------------------------ main -----------------------------------
if __name__ == "__main__":
    key = jax.random.PRNGKey(0)
    k_rgb, k_mask, k_lines, k_params = jax.random.split(key, 4)

    # Inputs as documented by the module: uint8 [0,255] images / lines, 0/1 masks.
    rgb_images = jax.random.randint(k_rgb, (B, 3, H, W), 0, 256, dtype=jnp.int32).astype(jnp.uint8)
    binary_masks = jax.random.bernoulli(k_mask, 0.5, (B, H, W)).astype(jnp.float32)
    clines_rgbs = jax.random.randint(k_lines, (B, 3, N, L), 0, 256, dtype=jnp.int32).astype(jnp.uint8)

    params = init_params(k_params)

    out = probabilistic_segmentation_unet_forward(rgb_images, binary_masks, clines_rgbs, params)
    out = jax.block_until_ready(out)

    assert out.shape == (B, N, L), out.shape
    assert out.dtype == jnp.float32, out.dtype
    assert bool(jnp.all(jnp.isfinite(out)))
    assert bool(jnp.all((out >= 0.0) & (out <= 1.0)))
    print("KERNEL_OK")
</pallas_src>

<mosaic_0001>
module attributes {stable_mosaic.version = 11 : i64} {
  func.func @fused_kernel(%arg0: i32, %arg1: memref<1x16x16x4xf32, #tpu.memory_space<vmem>>, %arg2: memref<1x3x8x128xf32, #tpu.memory_space<vmem>>, %arg3: memref<1x4xf32, #tpu.memory_space<vmem>>, %arg4: memref<1x4xf32, #tpu.memory_space<vmem>>, %arg5: memref<36x32xf32, #tpu.memory_space<vmem>>, %arg6: memref<1x32xf32, #tpu.memory_space<vmem>>, %arg7: memref<32x32xf32, #tpu.memory_space<vmem>>, %arg8: memref<1x32xf32, #tpu.memory_space<vmem>>, %arg9: memref<32x32xf32, #tpu.memory_space<vmem>>, %arg10: memref<1x32xf32, #tpu.memory_space<vmem>>, %arg11: memref<9x32x1xf32, #tpu.memory_space<vmem>>, %arg12: memref<32x1xf32, #tpu.memory_space<vmem>>, %arg13: memref<3x32xf32, #tpu.memory_space<vmem>>, %arg14: memref<1x1xf32, #tpu.memory_space<smem>>, %arg15: memref<1x8x128xf32, #tpu.memory_space<vmem>>, %arg16: memref<18x18x4xf32, #tpu.memory_space<vmem>>) attributes {dimension_semantics = [#tpu.dimension_semantics<parallel>], iteration_bounds = array<i64: 2>, scalar_prefetch = 0 : i64, scratch_operands = 1 : i64, tpu.core_type = #tpu.core_type<tc>, window_params = [{transform_indices = @transform_0, window_bounds = array<i64: 1, 16, 16, 4>}, {transform_indices = @transform_1, window_bounds = array<i64: 1, 3, 8, 128>}, {pipeline_mode = #tpu.pipeline_mode<synchronous>, transform_indices = @transform_2, window_bounds = array<i64: 1, 4>}, {pipeline_mode = #tpu.pipeline_mode<synchronous>, transform_indices = @transform_3, window_bounds = array<i64: 1, 4>}, {pipeline_mode = #tpu.pipeline_mode<synchronous>, transform_indices = @transform_4, window_bounds = array<i64: 36, 32>}, {pipeline_mode = #tpu.pipeline_mode<synchronous>, transform_indices = @transform_5, window_bounds = array<i64: 1, 32>}, {pipeline_mode = #tpu.pipeline_mode<synchronous>, transform_indices = @transform_6, window_bounds = array<i64: 32, 32>}, {pipeline_mode = #tpu.pipeline_mode<synchronous>, transform_indices = @transform_7, window_bounds = array<i64: 1, 32>}, {pipeline_mode = #tpu.pipeline_mode<synchronous>, transform_indices = @transform_8, window_bounds = array<i64: 32, 32>}, {pipeline_mode = #tpu.pipeline_mode<synchronous>, transform_indices = @transform_9, window_bounds = array<i64: 1, 32>}, {pipeline_mode = #tpu.pipeline_mode<synchronous>, transform_indices = @transform_10, window_bounds = array<i64: 9, 32, 1>}, {pipeline_mode = #tpu.pipeline_mode<synchronous>, transform_indices = @transform_11, window_bounds = array<i64: 32, 1>}, {pipeline_mode = #tpu.pipeline_mode<synchronous>, transform_indices = @transform_12, window_bounds = array<i64: 3, 32>}, {transform_indices = @transform_13, window_bounds = array<i64: 1, 1>}, {transform_indices = @transform_14, window_bounds = array<i64: 1, 8, 128>}]} {
    %c0 = arith.constant 0 : index
    %c0_0 = arith.constant 0 : index
    %c0_1 = arith.constant 0 : index
    %c0_2 = arith.constant 0 : index
    %0 = vector.load %arg1[%c0, %c0_0, %c0_1, %c0_2] : memref<1x16x16x4xf32, #tpu.memory_space<vmem>>, vector<1x16x16x4xf32>
    %1 = vector.shape_cast %0 : vector<1x16x16x4xf32> to vector<16x16x4xf32>
    %c0_3 = arith.constant 0 : index
    %c0_4 = arith.constant 0 : index
    %2 = vector.load %arg3[%c0_3, %c0_4] : memref<1x4xf32, #tpu.memory_space<vmem>>, vector<1x4xf32>
    %3 = vector.shape_cast %2 : vector<1x4xf32> to vector<1x1x4xf32>
    %4 = vector.broadcast %3 : vector<1x1x4xf32> to vector<16x16x4xf32>
    %5 = arith.mulf %1, %4 : vector<16x16x4xf32>
    %c0_5 = arith.constant 0 : index
    %c0_6 = arith.constant 0 : index
    %6 = vector.load %arg4[%c0_5, %c0_6] : memref<1x4xf32, #tpu.memory_space<vmem>>, vector<1x4xf32>
    %7 = vector.shape_cast %6 : vector<1x4xf32> to vector<1x1x4xf32>
    %8 = vector.broadcast %7 : vector<1x1x4xf32> to vector<16x16x4xf32>
    %9 = arith.addf %5, %8 : vector<16x16x4xf32>
    %cst = arith.constant 0.000000e+00 : f32
    %10 = vector.broadcast %cst : f32 to vector<18x18x4xf32>
    %c0_7 = arith.constant 0 : index
    %c0_8 = arith.constant 0 : index
    %c0_9 = arith.constant 0 : index
    %11 = vector.load %arg16[%c0_7, %c0_8, %c0_9] : memref<18x18x4xf32, #tpu.memory_space<vmem>>, vector<18x18x4xf32>
    tpu.vector_store %arg16[%c0_7, %c0_8, %c0_9], %10 {strides = array<i32>} : memref<18x18x4xf32, #tpu.memory_space<vmem>>, vector<18x18x4xf32>,
    %c1 = arith.constant 1 : index
    %c1_10 = arith.constant 1 : index
    %c0_11 = arith.constant 0 : index
    %12 = vector.load %arg16[%c1, %c1_10, %c0_11] : memref<18x18x4xf32, #tpu.memory_space<vmem>>, vector<16x16x4xf32>
    tpu.vector_store %arg16[%c1, %c1_10, %c0_11], %9 {strides = array<i32>} : memref<18x18x4xf32, #tpu.memory_space<vmem>>, vector<16x16x4xf32>,
    %c0_12 = arith.constant 0 : index
    %c0_13 = arith.constant 0 : index
    %c0_14 = arith.constant 0 : index
    %13 = vector.load %arg16[%c0_12, %c0_13, %c0_14] : memref<18x18x4xf32, #tpu.memory_space<vmem>>, vector<18x18x4xf32>
    %14 = vector.extract_strided_slice %13 {offsets = [0, 0, 0], sizes = [16, 16, 4], strides = [1, 1, 1]} : vector<18x18x4xf32> to vector<16x16x4xf32>
    %15 = vector.extract_strided_slice %13 {offsets = [0, 1, 0], sizes = [16, 16, 4], strides = [1, 1, 1]} : vector<18x18x4xf32> to vector<16x16x4xf32>
    %16 = vector.extract_strided_slice %13 {offsets = [0, 2, 0], sizes = [16, 16, 4], strides = [1, 1, 1]} : vector<18x18x4xf32> to vector<16x16x4xf32>
    %17 = vector.extract_strided_slice %13 {offsets = [1, 0, 0], sizes = [16, 16, 4], strides = [1, 1, 1]} : vector<18x18x4xf32> to vector<16x16x4xf32>
    %18 = vector.extract_strided_slice %13 {offsets = [1, 1, 0], sizes = [16, 16, 4], strides = [1, 1, 1]} : vector<18x18x4xf32> to vector<16x16x4xf32>
    %19 = vector.extract_strided_slice %13 {offsets = [1, 2, 0], sizes = [16, 16, 4], strides = [1, 1, 1]} : vector<18x18x4xf32> to vector<16x16x4xf32>
    %20 = vector.extract_strided_slice %13 {offsets = [2, 0, 0], sizes = [16, 16, 4], strides = [1, 1, 1]} : vector<18x18x4xf32> to vector<16x16x4xf32>
    %21 = vector.extract_strided_slice %13 {offsets = [2, 1, 0], sizes = [16, 16, 4], strides = [1, 1, 1]} : vector<18x18x4xf32> to vector<16x16x4xf32>
    %22 = vector.extract_strided_slice %13 {offsets = [2, 2, 0], sizes = [16, 16, 4], strides = [1, 1, 1]} : vector<18x18x4xf32> to vector<16x16x4xf32>
    %23 = tpu.concatenate %14, %15, %16, %17, %18, %19, %20, %21, %22 in 2 : vector<16x16x4xf32>, vector<16x16x4xf32>, vector<16x16x4xf32>, vector<16x16x4xf32>, vector<16x16x4xf32>, vector<16x16x4xf32>, vector<16x16x4xf32>, vector<16x16x4xf32>, vector<16x16x4xf32> -> vector<16x16x36xf32>
    %24 = vector.shape_cast %23 : vector<16x16x36xf32> to vector<256x36xf32>
    %c0_15 = arith.constant 0 : index
    %c0_16 = arith.constant 0 : index
    %25 = vector.load %arg5[%c0_15, %c0_16] : memref<36x32xf32, #tpu.memory_space<vmem>>, vector<36x32xf32>
    %cst_17 = arith.constant dense<0.000000e+00> : vector<256x32xf32>
    %26 = tpu.matmul %24, %25, %cst_17 {dimension_numbers = #tpu.dot_dimension_numbers<[1], [0], [0], [1], [0, 0, 1, 1], [], []>} : vector<256x36xf32>, vector<36x32xf32>, vector<256x32xf32> -> vector<256x32xf32>
    %c0_18 = arith.constant 0 : index
    %c0_19 = arith.constant 0 : index
    %27 = vector.load %arg6[%c0_18, %c0_19] : memref<1x32xf32, #tpu.memory_space<vmem>>, vector<1x32xf32>
    %28 = vector.broadcast %27 : vector<1x32xf32> to vector<256x32xf32>
    %29 = arith.addf %26, %28 : vector<256x32xf32>
    %cst_20 = arith.constant 0.000000e+00 : f32
    %30 = vector.broadcast %cst_20 : f32 to vector<256x32xf32>
    %31 = arith.maximumf %29, %30 : vector<256x32xf32>
    %cst_21 = arith.constant dense<0.000000e+00> : vector<32xf32>
    %32 = vector.multi_reduction <add>, %31, %cst_21 [0] : vector<256x32xf32> to vector<32xf32>
    %33 = vector.shape_cast %32 : vector<32xf32> to vector<1x32xf32>
    %cst_22 = arith.constant 2.560000e+02 : f32
    %34 = vector.broadcast %cst_22 : f32 to vector<1x32xf32>
    %35 = arith.divf %33, %34 : vector<1x32xf32>
    %c0_23 = arith.constant 0 : index
    %c0_24 = arith.constant 0 : index
    %36 = vector.load %arg7[%c0_23, %c0_24] : memref<32x32xf32, #tpu.memory_space<vmem>>, vector<32x32xf32>
    %cst_25 = arith.constant dense<0.000000e+00> : vector<1x32xf32>
    %37 = tpu.matmul %35, %36, %cst_25 {dimension_numbers = #tpu.dot_dimension_numbers<[1], [0], [0], [1], [0, 0, 1, 1], [], []>} : vector<1x32xf32>, vector<32x32xf32>, vector<1x32xf32> -> vector<1x32xf32>
    %c0_26 = arith.constant 0 : index
    %c0_27 = arith.constant 0 : index
    %38 = vector.load %arg8[%c0_26, %c0_27] : memref<1x32xf32, #tpu.memory_space<vmem>>, vector<1x32xf32>
    %39 = arith.addf %37, %38 : vector<1x32xf32>
    %c0_28 = arith.constant 0 : index
    %c0_29 = arith.constant 0 : index
    %40 = vector.load %arg9[%c0_28, %c0_29] : memref<32x32xf32, #tpu.memory_space<vmem>>, vector<32x32xf32>
    %cst_30 = arith.constant dense<0.000000e+00> : vector<1x32xf32>
    %41 = tpu.matmul %35, %40, %cst_30 {dimension_numbers = #tpu.dot_dimension_numbers<[1], [0], [0], [1], [0, 0, 1, 1], [], []>} : vector<1x32xf32>, vector<32x32xf32>, vector<1x32xf32> -> vector<1x32xf32>
    %c0_31 = arith.constant 0 : index
    %c0_32 = arith.constant 0 : index
    %42 = vector.load %arg10[%c0_31, %c0_32] : memref<1x32xf32, #tpu.memory_space<vmem>>, vector<1x32xf32>
    %43 = arith.addf %41, %42 : vector<1x32xf32>
    %44 = tpu.iota {dimensions = array<i32: 0>} : vector<32x32xi32>
    %45 = tpu.iota {dimensions = array<i32: 1>} : vector<32x32xi32>
    %46 = arith.cmpi eq, %44, %45 : vector<32x32xi32>
    %cst_33 = arith.constant 0.000000e+00 : f32
    %47 = vector.shape_cast %39 : vector<1x32xf32> to vector<1x32xf32>
    %48 = vector.broadcast %47 : vector<1x32xf32> to vector<32x32xf32>
    %49 = vector.broadcast %cst_33 : f32 to vector<32x32xf32>
    %50 = arith.select %46, %48, %49 : vector<32x32xi1>, vector<32x32xf32>
    %cst_34 = arith.constant dense<0.000000e+00> : vector<32xf32>
    %51 = vector.multi_reduction <add>, %50, %cst_34 [1] : vector<32x32xf32> to vector<32xf32>
    %52 = vector.shape_cast %51 : vector<32xf32> to vector<32x1xf32>
    %53 = tpu.iota {dimensions = array<i32: 0>} : vector<32x32xi32>
    %54 = tpu.iota {dimensions = array<i32: 1>} : vector<32x32xi32>
    %55 = arith.cmpi eq, %53, %54 : vector<32x32xi32>
    %cst_35 = arith.constant 0.000000e+00 : f32
    %56 = vector.shape_cast %43 : vector<1x32xf32> to vector<1x32xf32>
    %57 = vector.broadcast %56 : vector<1x32xf32> to vector<32x32xf32>
    %58 = vector.broadcast %cst_35 : f32 to vector<32x32xf32>
    %59 = arith.select %55, %57, %58 : vector<32x32xi1>, vector<32x32xf32>
    %cst_36 = arith.constant dense<0.000000e+00> : vector<32xf32>
    %60 = vector.multi_reduction <add>, %59, %cst_36 [1] : vector<32x32xf32> to vector<32xf32>
    %61 = vector.shape_cast %60 : vector<32xf32> to vector<32x1xf32>
    %c0_37 = arith.constant 0 : index
    %c0_38 = arith.constant 0 : index
    %c0_39 = arith.constant 0 : index
    %62 = vector.load %arg11[%c0_37, %c0_38, %c0_39] : memref<9x32x1xf32, #tpu.memory_space<vmem>>, vector<1x32x1xf32>
    %63 = vector.shape_cast %62 : vector<1x32x1xf32> to vector<32x1xf32>
    %64 = arith.mulf %63, %52 : vector<32x1xf32>
    %c1_40 = arith.constant 1 : index
    %c0_41 = arith.constant 0 : index
    %c0_42 = arith.constant 0 : index
    %65 = vector.load %arg11[%c1_40, %c0_41, %c0_42] : memref<9x32x1xf32, #tpu.memory_space<vmem>>, vector<1x32x1xf32>
    %66 = vector.shape_cast %65 : vector<1x32x1xf32> to vector<32x1xf32>
    %67 = arith.mulf %66, %52 : vector<32x1xf32>
    %c2 = arith.constant 2 : index
    %c0_43 = arith.constant 0 : index
    %c0_44 = arith.constant 0 : index
    %68 = vector.load %arg11[%c2, %c0_43, %c0_44] : memref<9x32x1xf32, #tpu.memory_space<vmem>>, vector<1x32x1xf32>
    %69 = vector.shape_cast %68 : vector<1x32x1xf32> to vector<32x1xf32>
    %70 = arith.mulf %69, %52 : vector<32x1xf32>
    %c3 = arith.constant 3 : index
    %c0_45 = arith.constant 0 : index
    %c0_46 = arith.constant 0 : index
    %71 = vector.load %arg11[%c3, %c0_45, %c0_46] : memref<9x32x1xf32, #tpu.memory_space<vmem>>, vector<1x32x1xf32>
    %72 = vector.shape_cast %71 : vector<1x32x1xf32> to vector<32x1xf32>
    %73 = arith.mulf %72, %52 : vector<32x1xf32>
    %c4 = arith.constant 4 : index
    %c0_47 = arith.constant 0 : index
    %c0_48 = arith.constant 0 : index
    %74 = vector.load %arg11[%c4, %c0_47, %c0_48] : memref<9x32x1xf32, #tpu.memory_space<vmem>>, vector<1x32x1xf32>
    %75 = vector.shape_cast %74 : vector<1x32x1xf32> to vector<32x1xf32>
    %76 = arith.mulf %75, %52 : vector<32x1xf32>
    %c5 = arith.constant 5 : index
    %c0_49 = arith.constant 0 : index
    %c0_50 = arith.constant 0 : index
    %77 = vector.load %arg11[%c5, %c0_49, %c0_50] : memref<9x32x1xf32, #tpu.memory_space<vmem>>, vector<1x32x1xf32>
    %78 = vector.shape_cast %77 : vector<1x32x1xf32> to vector<32x1xf32>
    %79 = arith.mulf %78, %52 : vector<32x1xf32>
    %c6 = arith.constant 6 : index
    %c0_51 = arith.constant 0 : index
    %c0_52 = arith.constant 0 : index
    %80 = vector.load %arg11[%c6, %c0_51, %c0_52] : memref<9x32x1xf32, #tpu.memory_space<vmem>>, vector<1x32x1xf32>
    %81 = vector.shape_cast %80 : vector<1x32x1xf32> to vector<32x1xf32>
    %82 = arith.mulf %81, %52 : vector<32x1xf32>
    %c7 = arith.constant 7 : index
    %c0_53 = arith.constant 0 : index
    %c0_54 = arith.constant 0 : index
    %83 = vector.load %arg11[%c7, %c0_53, %c0_54] : memref<9x32x1xf32, #tpu.memory_space<vmem>>, vector<1x32x1xf32>
    %84 = vector.shape_cast %83 : vector<1x32x1xf32> to vector<32x1xf32>
    %85 = arith.mulf %84, %52 : vector<32x1xf32>
    %c8 = arith.constant 8 : index
    %c0_55 = arith.constant 0 : index
    %c0_56 = arith.constant 0 : index
    %86 = vector.load %arg11[%c8, %c0_55, %c0_56] : memref<9x32x1xf32, #tpu.memory_space<vmem>>, vector<1x32x1xf32>
    %87 = vector.shape_cast %86 : vector<1x32x1xf32> to vector<32x1xf32>
    %88 = arith.mulf %87, %52 : vector<32x1xf32>
    %c0_57 = arith.constant 0 : index
    %c0_58 = arith.constant 0 : index
    %89 = vector.load %arg12[%c0_57, %c0_58] : memref<32x1xf32, #tpu.memory_space<vmem>>, vector<32x1xf32>
    %90 = arith.mulf %89, %52 : vector<32x1xf32>
    %91 = arith.addf %90, %61 : vector<32x1xf32>
    %c0_59 = arith.constant 0 : index
    %c0_60 = arith.constant 0 : index
    %c0_61 = arith.constant 0 : index
    %c0_62 = arith.constant 0 : index
    %92 = vector.load %arg2[%c0_59, %c0_60, %c0_61, %c0_62] : memref<1x3x8x128xf32, #tpu.memory_space<vmem>>, vector<1x3x8x128xf32>
    %93 = vector.shape_cast %92 : vector<1x3x8x128xf32> to vector<3x8x128xf32>
    %94 = tpu.iota {dimensions = array<i32: 1>} : vector<8x128xi32>
    %95 = tpu.iota {dimensions = array<i32: 1>} : vector<1x128xi32>
    %96 = vector.extract_strided_slice %93 {offsets = [0, 0, 0], sizes = [1, 8, 128], strides = [1, 1, 1]} : vector<3x8x128xf32> to vector<1x8x128xf32>
    %97 = vector.shape_cast %96 : vector<1x8x128xf32> to vector<8x128xf32>
    %cst_63 = arith.constant 0.0171247534 : f32
    %98 = vector.broadcast %cst_63 : f32 to vector<8x128xf32>
    %99 = arith.mulf %97, %98 : vector<8x128xf32>
    %cst_64 = arith.constant -2.11790395 : f32
    %100 = vector.broadcast %cst_64 : f32 to vector<8x128xf32>
    %101 = arith.addf %99, %100 : vector<8x128xf32>
    %102 = vector.extract_strided_slice %93 {offsets = [1, 0, 0], sizes = [1, 8, 128], strides = [1, 1, 1]} : vector<3x8x128xf32> to vector<1x8x128xf32>
    %103 = vector.shape_cast %102 : vector<1x8x128xf32> to vector<8x128xf32>
    %cst_65 = arith.constant 0.0175070036 : f32
    %104 = vector.broadcast %cst_65 : f32 to vector<8x128xf32>
    %105 = arith.mulf %103, %104 : vector<8x128xf32>
    %cst_66 = arith.constant -2.03571439 : f32
    %106 = vector.broadcast %cst_66 : f32 to vector<8x128xf32>
    %107 = arith.addf %105, %106 : vector<8x128xf32>
    %108 = vector.extract_strided_slice %93 {offsets = [2, 0, 0], sizes = [1, 8, 128], strides = [1, 1, 1]} : vector<3x8x128xf32> to vector<1x8x128xf32>
    %109 = vector.shape_cast %108 : vector<1x8x128xf32> to vector<8x128xf32>
    %cst_67 = arith.constant 0.0174291935 : f32
    %110 = vector.broadcast %cst_67 : f32 to vector<8x128xf32>
    %111 = arith.mulf %109, %110 : vector<8x128xf32>
    %cst_68 = arith.constant -1.80444443 : f32
    %112 = vector.broadcast %cst_68 : f32 to vector<8x128xf32>
    %113 = arith.addf %111, %112 : vector<8x128xf32>
    %c1_i32 = arith.constant 1 : i32
    %114 = tpu.dynamic_rotate %101 by %c1_i32 dim 1 : vector<8x128xf32>, i32 -> vector<8x128xf32>
    %c0_i32 = arith.constant 0 : i32
    %115 = vector.broadcast %c0_i32 : i32 to vector<8x128xi32>
    %116 = arith.cmpi eq, %94, %115 : vector<8x128xi32>
    %cst_69 = arith.constant 0.000000e+00 : f32
    %117 = vector.broadcast %cst_69 : f32 to vector<8x128xf32>
    %118 = arith.select %116, %117, %114 : vector<8x128xi1>, vector<8x128xf32>
    %c1_i32_70 = arith.constant 1 : i32
    %119 = tpu.dynamic_rotate %107 by %c1_i32_70 dim 1 : vector<8x128xf32>, i32 -> vector<8x128xf32>
    %c0_i32_71 = arith.constant 0 : i32
    %120 = vector.broadcast %c0_i32_71 : i32 to vector<8x128xi32>
    %121 = arith.cmpi eq, %94, %120 : vector<8x128xi32>
    %cst_72 = arith.constant 0.000000e+00 : f32
    %122 = vector.broadcast %cst_72 : f32 to vector<8x128xf32>
    %123 = arith.select %121, %122, %119 : vector<8x128xi1>, vector<8x128xf32>
    %c1_i32_73 = arith.constant 1 : i32
    %124 = tpu.dynamic_rotate %113 by %c1_i32_73 dim 1 : vector<8x128xf32>, i32 -> vector<8x128xf32>
    %c0_i32_74 = arith.constant 0 : i32
    %125 = vector.broadcast %c0_i32_74 : i32 to vector<8x128xi32>
    %126 = arith.cmpi eq, %94, %125 : vector<8x128xi32>
    %cst_75 = arith.constant 0.000000e+00 : f32
    %127 = vector.broadcast %cst_75 : f32 to vector<8x128xf32>
    %128 = arith.select %126, %127, %124 : vector<8x128xi1>, vector<8x128xf32>
    %c127_i32 = arith.constant 127 : i32
    %129 = tpu.dynamic_rotate %101 by %c127_i32 dim 1 : vector<8x128xf32>, i32 -> vector<8x128xf32>
    %c127_i32_76 = arith.constant 127 : i32
    %130 = vector.broadcast %c127_i32_76 : i32 to vector<8x128xi32>
    %131 = arith.cmpi eq, %94, %130 : vector<8x128xi32>
    %cst_77 = arith.constant 0.000000e+00 : f32
    %132 = vector.broadcast %cst_77 : f32 to vector<8x128xf32>
    %133 = arith.select %131, %132, %129 : vector<8x128xi1>, vector<8x128xf32>
    %c127_i32_78 = arith.constant 127 : i32
    %134 = tpu.dynamic_rotate %107 by %c127_i32_78 dim 1 : vector<8x128xf32>, i32 -> vector<8x128xf32>
    %c127_i32_79 = arith.constant 127 : i32
    %135 = vector.broadcast %c127_i32_79 : i32 to vector<8x128xi32>
    %136 = arith.cmpi eq, %94, %135 : vector<8x128xi32>
    %cst_80 = arith.constant 0.000000e+00 : f32
    %137 = vector.broadcast %cst_80 : f32 to vector<8x128xf32>
    %138 = arith.select %136, %137, %134 : vector<8x128xi1>, vector<8x128xf32>
    %c127_i32_81 = arith.constant 127 : i32
    %139 = tpu.dynamic_rotate %113 by %c127_i32_81 dim 1 : vector<8x128xf32>, i32 -> vector<8x128xf32>
    %c127_i32_82 = arith.constant 127 : i32
    %140 = vector.broadcast %c127_i32_82 : i32 to vector<8x128xi32>
    %141 = arith.cmpi eq, %94, %140 : vector<8x128xi32>
    %cst_83 = arith.constant 0.000000e+00 : f32
    %142 = vector.broadcast %cst_83 : f32 to vector<8x128xf32>
    %143 = arith.select %141, %142, %139 : vector<8x128xi1>, vector<8x128xf32>
    %c0_84 = arith.constant 0 : index
    %c0_85 = arith.constant 0 : index
    %144 = memref.load %arg14[%c0_84, %c0_85] : memref<1x1xf32, #tpu.memory_space<smem>>
    %145 = vector.extract_strided_slice %118 {offsets = [0, 0], sizes = [1, 128], strides = [1, 1]} : vector<8x128xf32> to vector<1x128xf32>
    %146 = vector.broadcast %64 : vector<32x1xf32> to vector<32x128xf32>
    %147 = vector.broadcast %145 : vector<1x128xf32> to vector<32x128xf32>
    %148 = arith.mulf %146, %147 : vector<32x128xf32>
    %149 = vector.extract_strided_slice %123 {offsets = [0, 0], sizes = [1, 128], strides = [1, 1]} : vector<8x128xf32> to vector<1x128xf32>
    %150 = vector.broadcast %67 : vector<32x1xf32> to vector<32x128xf32>
    %151 = vector.broadcast %149 : vector<1x128xf32> to vector<32x128xf32>
    %152 = arith.mulf %150, %151 : vector<32x128xf32>
    %153 = arith.addf %148, %152 : vector<32x128xf32>
    %154 = vector.extract_strided_slice %128 {offsets = [0, 0], sizes = [1, 128], strides = [1, 1]} : vector<8x128xf32> to vector<1x128xf32>
    %155 = vector.broadcast %70 : vector<32x1xf32> to vector<32x128xf32>
    %156 = vector.broadcast %154 : vector<1x128xf32> to vector<32x128xf32>
    %157 = arith.mulf %155, %156 : vector<32x128xf32>
    %158 = arith.addf %153, %157 : vector<32x128xf32>
    %159 = vector.extract_strided_slice %101 {offsets = [0, 0], sizes = [1, 128], strides = [1, 1]} : vector<8x128xf32> to vector<1x128xf32>
    %160 = vector.broadcast %73 : vector<32x1xf32> to vector<32x128xf32>
    %161 = vector.broadcast %159 : vector<1x128xf32> to vector<32x128xf32>
    %162 = arith.mulf %160, %161 : vector<32x128xf32>
    %163 = arith.addf %158, %162 : vector<32x128xf32>
    %164 = vector.extract_strided_slice %107 {offsets = [0, 0], sizes = [1, 128], strides = [1, 1]} : vector<8x128xf32> to vector<1x128xf32>
    %165 = vector.broadcast %76 : vector<32x1xf32> to vector<32x128xf32>
    %166 = vector.broadcast %164 : vector<1x128xf32> to vector<32x128xf32>
    %167 = arith.mulf %165, %166 : vector<32x128xf32>
    %168 = arith.addf %163, %167 : vector<32x128xf32>
    %169 = vector.extract_strided_slice %113 {offsets = [0, 0], sizes = [1, 128], strides = [1, 1]} : vector<8x128xf32> to vector<1x128xf32>
    %170 = vector.broadcast %79 : vector<32x1xf32> to vector<32x128xf32>
    %171 = vector.broadcast %169 : vector<1x128xf32> to vector<32x128xf32>
    %172 = arith.mulf %170, %171 : vector<32x128xf32>
    %173 = arith.addf %168, %172 : vector<32x128xf32>
    %174 = vector.extract_strided_slice %133 {offsets = [0, 0], sizes = [1, 128], strides = [1, 1]} : vector<8x128xf32> to vector<1x128xf32>
    %175 = vector.broadcast %82 : vector<32x1xf32> to vector<32x128xf32>
    %176 = vector.broadcast %174 : vector<1x128xf32> to vector<32x128xf32>
    %177 = arith.mulf %175, %176 : vector<32x128xf32>
    %178 = arith.addf %173, %177 : vector<32x128xf32>
    %179 = vector.extract_strided_slice %138 {offsets = [0, 0], sizes = [1, 128], strides = [1, 1]} : vector<8x128xf32> to vector<1x128xf32>
    %180 = vector.broadcast %85 : vector<32x1xf32> to vector<32x128xf32>
    %181 = vector.broadcast %179 : vector<1x128xf32> to vector<32x128xf32>
    %182 = arith.mulf %180, %181 : vector<32x128xf32>
    %183 = arith.addf %178, %182 : vector<32x128xf32>
    %184 = vector.extract_strided_slice %143 {offsets = [0, 0], sizes = [1, 128], strides = [1, 1]} : vector<8x128xf32> to vector<1x128xf32>
    %185 = vector.broadcast %88 : vector<32x1xf32> to vector<32x128xf32>
    %186 = vector.broadcast %184 : vector<1x128xf32> to vector<32x128xf32>
    %187 = arith.mulf %185, %186 : vector<32x128xf32>
    %188 = arith.addf %183, %187 : vector<32x128xf32>
    %189 = vector.broadcast %91 : vector<32x1xf32> to vector<32x128xf32>
    %190 = arith.addf %188, %189 : vector<32x128xf32>
    %cst_86 = arith.constant 0.000000e+00 : f32
    %191 = vector.broadcast %cst_86 : f32 to vector<32x128xf32>
    %192 = arith.maximumf %190, %191 : vector<32x128xf32>
    %c0_87 = arith.constant 0 : index
    %c0_88 = arith.constant 0 : index
    %193 = vector.load %arg13[%c0_87, %c0_88] : memref<3x32xf32, #tpu.memory_space<vmem>>, vector<3x32xf32>
    %cst_89 = arith.constant dense<0.000000e+00> : vector<3x128xf32>
    %194 = tpu.matmul %193, %192, %cst_89 {dimension_numbers = #tpu.dot_dimension_numbers<[1], [0], [0], [1], [0, 0, 1, 1], [], []>} : vector<3x32xf32>, vector<32x128xf32>, vector<3x128xf32> -> vector<3x128xf32>
    %195 = vector.extract_strided_slice %194 {offsets = [0, 0], sizes = [1, 128], strides = [1, 1]} : vector<3x128xf32> to vector<1x128xf32>
    %c1_i32_90 = arith.constant 1 : i32
    %196 = tpu.dynamic_rotate %195 by %c1_i32_90 dim 1 : vector<1x128xf32>, i32 -> vector<1x128xf32>
    %c0_i32_91 = arith.constant 0 : i32
    %197 = vector.broadcast %c0_i32_91 : i32 to vector<1x128xi32>
    %198 = arith.cmpi eq, %95, %197 : vector<1x128xi32>
    %cst_92 = arith.constant 0.000000e+00 : f32
    %199 = vector.broadcast %cst_92 : f32 to vector<1x128xf32>
    %200 = arith.select %198, %199, %196 : vector<1x128xi1>, vector<1x128xf32>
    %201 = vector.extract_strided_slice %194 {offsets = [2, 0], sizes = [1, 128], strides = [1, 1]} : vector<3x128xf32> to vector<1x128xf32>
    %c127_i32_93 = arith.constant 127 : i32
    %202 = tpu.dynamic_rotate %201 by %c127_i32_93 dim 1 : vector<1x128xf32>, i32 -> vector<1x128xf32>
    %c127_i32_94 = arith.constant 127 : i32
    %203 = vector.broadcast %c127_i32_94 : i32 to vector<1x128xi32>
    %204 = arith.cmpi eq, %95, %203 : vector<1x128xi32>
    %cst_95 = arith.constant 0.000000e+00 : f32
    %205 = vector.broadcast %cst_95 : f32 to vector<1x128xf32>
    %206 = arith.select %204, %205, %202 : vector<1x128xi1>, vector<1x128xf32>
    %207 = vector.extract_strided_slice %194 {offsets = [1, 0], sizes = [1, 128], strides = [1, 1]} : vector<3x128xf32> to vector<1x128xf32>
    %208 = arith.addf %207, %200 : vector<1x128xf32>
    %209 = arith.addf %208, %206 : vector<1x128xf32>
    %210 = vector.broadcast %144 : f32 to vector<1x128xf32>
    %211 = arith.addf %209, %210 : vector<1x128xf32>
    %212 = arith.negf %211 : vector<1x128xf32>
    %213 = math.exp %212 : vector<1x128xf32>
    %cst_96 = arith.constant 1.000000e+00 : f32
    %214 = vector.broadcast %cst_96 : f32 to vector<1x128xf32>
    %215 = arith.addf %214, %213 : vector<1x128xf32>
    %216 = arith.divf %214, %215 : vector<1x128xf32>
    %c0_97 = arith.constant 0 : index
    %c0_98 = arith.constant 0 : index
    %c0_99 = arith.constant 0 : index
    %217 = vector.load %arg15[%c0_97, %c0_98, %c0_99] : memref<1x8x128xf32, #tpu.memory_space<vmem>>, vector<1x1x128xf32>
    %218 = vector.shape_cast %217 : vector<1x1x128xf32> to vector<1x128xf32>
    %219 = vector.shape_cast %216 : vector<1x128xf32> to vector<1x1x128xf32>
    tpu.vector_store %arg15[%c0_97, %c0_98, %c0_99], %219 {strides = array<i32>} : memref<1x8x128xf32, #tpu.memory_space<vmem>>, vector<1x1x128xf32>,
    %220 = vector.extract_strided_slice %118 {offsets = [1, 0], sizes = [1, 128], strides = [1, 1]} : vector<8x128xf32> to vector<1x128xf32>
    %221 = vector.broadcast %64 : vector<32x1xf32> to vector<32x128xf32>
    %222 = vector.broadcast %220 : vector<1x128xf32> to vector<32x128xf32>
    %223 = arith.mulf %221, %222 : vector<32x128xf32>
    %224 = vector.extract_strided_slice %123 {offsets = [1, 0], sizes = [1, 128], strides = [1, 1]} : vector<8x128xf32> to vector<1x128xf32>
    %225 = vector.broadcast %67 : vector<32x1xf32> to vector<32x128xf32>
    %226 = vector.broadcast %224 : vector<1x128xf32> to vector<32x128xf32>
    %227 = arith.mulf %225, %226 : vector<32x128xf32>
    %228 = arith.addf %223, %227 : vector<32x128xf32>
    %229 = vector.extract_strided_slice %128 {offsets = [1, 0], sizes = [1, 128], strides = [1, 1]} : vector<8x128xf32> to vector<1x128xf32>
    %230 = vector.broadcast %70 : vector<32x1xf32> to vector<32x128xf32>
    %231 = vector.broadcast %229 : vector<1x128xf32> to vector<32x128xf32>
    %232 = arith.mulf %230, %231 : vector<32x128xf32>
    %233 = arith.addf %228, %232 : vector<32x128xf32>
    %234 = vector.extract_strided_slice %101 {offsets = [1, 0], sizes = [1, 128], strides = [1, 1]} : vector<8x128xf32> to vector<1x128xf32>
    %235 = vector.broadcast %73 : vector<32x1xf32> to vector<32x128xf32>
    %236 = vector.broadcast %234 : vector<1x128xf32> to vector<32x128xf32>
    %237 = arith.mulf %235, %236 : vector<32x128xf32>
    %238 = arith.addf %233, %237 : vector<32x128xf32>
    %239 = vector.extract_strided_slice %107 {offsets = [1, 0], sizes = [1, 128], strides = [1, 1]} : vector<8x128xf32> to vector<1x128xf32>
    %240 = vector.broadcast %76 : vector<32x1xf32> to vector<32x128xf32>
    %241 = vector.broadcast %239 : vector<1x128xf32> to vector<32x128xf32>
    %242 = arith.mulf %240, %241 : vector<32x128xf32>
    %243 = arith.addf %238, %242 : vector<32x128xf32>
    %244 = vector.extract_strided_slice %113 {offsets = [1, 0], sizes = [1, 128], strides = [1, 1]} : vector<8x128xf32> to vector<1x128xf32>
    %245 = vector.broadcast %79 : vector<32x1xf32> to vector<32x128xf32>
    %246 = vector.broadcast %244 : vector<1x128xf32> to vector<32x128xf32>
    %247 = arith.mulf %245, %246 : vector<32x128xf32>
    %248 = arith.addf %243, %247 : vector<32x128xf32>
    %249 = vector.extract_strided_slice %133 {offsets = [1, 0], sizes = [1, 128], strides = [1, 1]} : vector<8x128xf32> to vector<1x128xf32>
    %250 = vector.broadcast %82 : vector<32x1xf32> to vector<32x128xf32>
    %251 = vector.broadcast %249 : vector<1x128xf32> to vector<32x128xf32>
    %252 = arith.mulf %250, %251 : vector<32x128xf32>
    %253 = arith.addf %248, %252 : vector<32x128xf32>
    %254 = vector.extract_strided_slice %138 {offsets = [1, 0], sizes = [1, 128], strides = [1, 1]} : vector<8x128xf32> to vector<1x128xf32>
    %255 = vector.broadcast %85 : vector<32x1xf32> to vector<32x128xf32>
    %256 = vector.broadcast %254 : vector<1x128xf32> to vector<32x128xf32>
    %257 = arith.mulf %255, %256 : vector<32x128xf32>
    %258 = arith.addf %253, %257 : vector<32x128xf32>
    %259 = vector.extract_strided_slice %143 {offsets = [1, 0], sizes = [1, 128], strides = [1, 1]} : vector<8x128xf32> to vector<1x128xf32>
    %260 = vector.broadcast %88 : vector<32x1xf32> to vector<32x128xf32>
    %261 = vector.broadcast %259 : vector<1x128xf32> to vector<32x128xf32>
    %262 = arith.mulf %260, %261 : vector<32x128xf32>
    %263 = arith.addf %258, %262 : vector<32x128xf32>
    %264 = vector.broadcast %91 : vector<32x1xf32> to vector<32x128xf32>
    %265 = arith.addf %263, %264 : vector<32x128xf32>
    %cst_100 = arith.constant 0.000000e+00 : f32
    %266 = vector.broadcast %cst_100 : f32 to vector<32x128xf32>
    %267 = arith.maximumf %265, %266 : vector<32x128xf32>
    %c0_101 = arith.constant 0 : index
    %c0_102 = arith.constant 0 : index
    %268 = vector.load %arg13[%c0_101, %c0_102] : memref<3x32xf32, #tpu.memory_space<vmem>>, vector<3x32xf32>
    %cst_103 = arith.constant dense<0.000000e+00> : vector<3x128xf32>
    %269 = tpu.matmul %268, %267, %cst_103 {dimension_numbers = #tpu.dot_dimension_numbers<[1], [0], [0], [1], [0, 0, 1, 1], [], []>} : vector<3x32xf32>, vector<32x128xf32>, vector<3x128xf32> -> vector<3x128xf32>
    %270 = vector.extract_strided_slice %269 {offsets = [0, 0], sizes = [1, 128], strides = [1, 1]} : vector<3x128xf32> to vector<1x128xf32>
    %c1_i32_104 = arith.constant 1 : i32
    %271 = tpu.dynamic_rotate %270 by %c1_i32_104 dim 1 : vector<1x128xf32>, i32 -> vector<1x128xf32>
    %c0_i32_105 = arith.constant 0 : i32
    %272 = vector.broadcast %c0_i32_105 : i32 to vector<1x128xi32>
    %273 = arith.cmpi eq, %95, %272 : vector<1x128xi32>
    %cst_106 = arith.constant 0.000000e+00 : f32
    %274 = vector.broadcast %cst_106 : f32 to vector<1x128xf32>
    %275 = arith.select %273, %274, %271 : vector<1x128xi1>, vector<1x128xf32>
    %276 = vector.extract_strided_slice %269 {offsets = [2, 0], sizes = [1, 128], strides = [1, 1]} : vector<3x128xf32> to vector<1x128xf32>
    %c127_i32_107 = arith.constant 127 : i32
    %277 = tpu.dynamic_rotate %276 by %c127_i32_107 dim 1 : vector<1x128xf32>, i32 -> vector<1x128xf32>
    %c127_i32_108 = arith.constant 127 : i32
    %278 = vector.broadcast %c127_i32_108 : i32 to vector<1x128xi32>
    %279 = arith.cmpi eq, %95, %278 : vector<1x128xi32>
    %cst_109 = arith.constant 0.000000e+00 : f32
    %280 = vector.broadcast %cst_109 : f32 to vector<1x128xf32>
    %281 = arith.select %279, %280, %277 : vector<1x128xi1>, vector<1x128xf32>
    %282 = vector.extract_strided_slice %269 {offsets = [1, 0], sizes = [1, 128], strides = [1, 1]} : vector<3x128xf32> to vector<1x128xf32>
    %283 = arith.addf %282, %275 : vector<1x128xf32>
    %284 = arith.addf %283, %281 : vector<1x128xf32>
    %285 = vector.broadcast %144 : f32 to vector<1x128xf32>
    %286 = arith.addf %284, %285 : vector<1x128xf32>
    %287 = arith.negf %286 : vector<1x128xf32>
    %288 = math.exp %287 : vector<1x128xf32>
    %cst_110 = arith.constant 1.000000e+00 : f32
    %289 = vector.broadcast %cst_110 : f32 to vector<1x128xf32>
    %290 = arith.addf %289, %288 : vector<1x128xf32>
    %291 = arith.divf %289, %290 : vector<1x128xf32>
    %c0_111 = arith.constant 0 : index
    %c1_112 = arith.constant 1 : index
    %c0_113 = arith.constant 0 : index
    %292 = vector.load %arg15[%c0_111, %c1_112, %c0_113] : memref<1x8x128xf32, #tpu.memory_space<vmem>>, vector<1x1x128xf32>
    %293 = vector.shape_cast %292 : vector<1x1x128xf32> to vector<1x128xf32>
    %294 = vector.shape_cast %291 : vector<1x128xf32> to vector<1x1x128xf32>
    tpu.vector_store %arg15[%c0_111, %c1_112, %c0_113], %294 {strides = array<i32>} : memref<1x8x128xf32, #tpu.memory_space<vmem>>, vector<1x1x128xf32>,
    %295 = vector.extract_strided_slice %118 {offsets = [2, 0], sizes = [1, 128], strides = [1, 1]} : vector<8x128xf32> to vector<1x128xf32>
    %296 = vector.broadcast %64 : vector<32x1xf32> to vector<32x128xf32>
    %297 = vector.broadcast %295 : vector<1x128xf32> to vector<32x128xf32>
    %298 = arith.mulf %296, %297 : vector<32x128xf32>
    %299 = vector.extract_strided_slice %123 {offsets = [2, 0], sizes = [1, 128], strides = [1, 1]} : vector<8x128xf32> to vector<1x128xf32>
    %300 = vector.broadcast %67 : vector<32x1xf32> to vector<32x128xf32>
    %301 = vector.broadcast %299 : vector<1x128xf32> to vector<32x128xf32>
    %302 = arith.mulf %300, %301 : vector<32x128xf32>
    %303 = arith.addf %298, %302 : vector<32x128xf32>
    %304 = vector.extract_strided_slice %128 {offsets = [2, 0], sizes = [1, 128], strides = [1, 1]} : vector<8x128xf32> to vector<1x128xf32>
    %305 = vector.broadcast %70 : vector<32x1xf32> to vector<32x128xf32>
    %306 = vector.broadcast %304 : vector<1x128xf32> to vector<32x128xf32>
    %307 = arith.mulf %305, %306 : vector<32x128xf32>
    %308 = arith.addf %303, %307 : vector<32x128xf32>
    %309 = vector.extract_strided_slice %101 {offsets = [2, 0], sizes = [1, 128], strides = [1, 1]} : vector<8x128xf32> to vector<1x128xf32>
    %310 = vector.broadcast %73 : vector<32x1xf32> to vector<32x128xf32>
    %311 = vector.broadcast %309 : vector<1x128xf32> to vector<32x128xf32>
    %312 = arith.mulf %310, %311 : vector<32x128xf32>
    %313 = arith.addf %308, %312 : vector<32x128xf32>
    %314 = vector.extract_strided_slice %107 {offsets = [2, 0], sizes = [1, 128], strides = [1, 1]} : vector<8x128xf32> to vector<1x128xf32>
    %315 = vector.broadcast %76 : vector<32x1xf32> to vector<32x128xf32>
    %316 = vector.broadcast %314 : vector<1x128xf32> to vector<32x128xf32>
    %317 = arith.mulf %315, %316 : vector<32x128xf32>
    %318 = arith.addf %313, %317 : vector<32x128xf32>
    %319 = vector.extract_strided_slice %113 {offsets = [2, 0], sizes = [1, 128], strides = [1, 1]} : vector<8x128xf32> to vector<1x128xf32>
    %320 = vector.broadcast %79 : vector<32x1xf32> to vector<32x128xf32>
    %321 = vector.broadcast %319 : vector<1x128xf32> to vector<32x128xf32>
    %322 = arith.mulf %320, %321 : vector<32x128xf32>
    %323 = arith.addf %318, %322 : vector<32x128xf32>
    %324 = vector.extract_strided_slice %133 {offsets = [2, 0], sizes = [1, 128], strides = [1, 1]} : vector<8x128xf32> to vector<1x128xf32>
    %325 = vector.broadcast %82 : vector<32x1xf32> to vector<32x128xf32>
    %326 = vector.broadcast %324 : vector<1x128xf32> to vector<32x128xf32>
    %327 = arith.mulf %325, %326 : vector<32x128xf32>
    %328 = arith.addf %323, %327 : vector<32x128xf32>
    %329 = vector.extract_strided_slice %138 {offsets = [2, 0], sizes = [1, 128], strides = [1, 1]} : vector<8x128xf32> to vector<1x128xf32>
    %330 = vector.broadcast %85 : vector<32x1xf32> to vector<32x128xf32>
    %331 = vector.broadcast %329 : vector<1x128xf32> to vector<32x128xf32>
    %332 = arith.mulf %330, %331 : vector<32x128xf32>
    %333 = arith.addf %328, %332 : vector<32x128xf32>
    %334 = vector.extract_strided_slice %143 {offsets = [2, 0], sizes = [1, 128], strides = [1, 1]} : vector<8x128xf32> to vector<1x128xf32>
    %335 = vector.broadcast %88 : vector<32x1xf32> to vector<32x128xf32>
    %336 = vector.broadcast %334 : vector<1x128xf32> to vector<32x128xf32>
    %337 = arith.mulf %335, %336 : vector<32x128xf32>
    %338 = arith.addf %333, %337 : vector<32x128xf32>
    %339 = vector.broadcast %91 : vector<32x1xf32> to vector<32x128xf32>
    %340 = arith.addf %338, %339 : vector<32x128xf32>
    %cst_114 = arith.constant 0.000000e+00 : f32
    %341 = vector.broadcast %cst_114 : f32 to vector<32x128xf32>
    %342 = arith.maximumf %340, %341 : vector<32x128xf32>
    %c0_115 = arith.constant 0 : index
    %c0_116 = arith.constant 0 : index
    %343 = vector.load %arg13[%c0_115, %c0_116] : memref<3x32xf32, #tpu.memory_space<vmem>>, vector<3x32xf32>
    %cst_117 = arith.constant dense<0.000000e+00> : vector<3x128xf32>
    %344 = tpu.matmul %343, %342, %cst_117 {dimension_numbers = #tpu.dot_dimension_numbers<[1], [0], [0], [1], [0, 0, 1, 1], [], []>} : vector<3x32xf32>, vector<32x128xf32>, vector<3x128xf32> -> vector<3x128xf32>
    %345 = vector.extract_strided_slice %344 {offsets = [0, 0], sizes = [1, 128], strides = [1, 1]} : vector<3x128xf32> to vector<1x128xf32>
    %c1_i32_118 = arith.constant 1 : i32
    %346 = tpu.dynamic_rotate %345 by %c1_i32_118 dim 1 : vector<1x128xf32>, i32 -> vector<1x128xf32>
    %c0_i32_119 = arith.constant 0 : i32
    %347 = vector.broadcast %c0_i32_119 : i32 to vector<1x128xi32>
    %348 = arith.cmpi eq, %95, %347 : vector<1x128xi32>
    %cst_120 = arith.constant 0.000000e+00 : f32
    %349 = vector.broadcast %cst_120 : f32 to vector<1x128xf32>
    %350 = arith.select %348, %349, %346 : vector<1x128xi1>, vector<1x128xf32>
    %351 = vector.extract_strided_slice %344 {offsets = [2, 0], sizes = [1, 128], strides = [1, 1]} : vector<3x128xf32> to vector<1x128xf32>
    %c127_i32_121 = arith.constant 127 : i32
    %352 = tpu.dynamic_rotate %351 by %c127_i32_121 dim 1 : vector<1x128xf32>, i32 -> vector<1x128xf32>
    %c127_i32_122 = arith.constant 127 : i32
    %353 = vector.broadcast %c127_i32_122 : i32 to vector<1x128xi32>
    %354 = arith.cmpi eq, %95, %353 : vector<1x128xi32>
    %cst_123 = arith.constant 0.000000e+00 : f32
    %355 = vector.broadcast %cst_123 : f32 to vector<1x128xf32>
    %356 = arith.select %354, %355, %352 : vector<1x128xi1>, vector<1x128xf32>
    %357 = vector.extract_strided_slice %344 {offsets = [1, 0], sizes = [1, 128], strides = [1, 1]} : vector<3x128xf32> to vector<1x128xf32>
    %358 = arith.addf %357, %350 : vector<1x128xf32>
    %359 = arith.addf %358, %356 : vector<1x128xf32>
    %360 = vector.broadcast %144 : f32 to vector<1x128xf32>
    %361 = arith.addf %359, %360 : vector<1x128xf32>
    %362 = arith.negf %361 : vector<1x128xf32>
    %363 = math.exp %362 : vector<1x128xf32>
    %cst_124 = arith.constant 1.000000e+00 : f32
    %364 = vector.broadcast %cst_124 : f32 to vector<1x128xf32>
    %365 = arith.addf %364, %363 : vector<1x128xf32>
    %366 = arith.divf %364, %365 : vector<1x128xf32>
    %c0_125 = arith.constant 0 : index
    %c2_126 = arith.constant 2 : index
    %c0_127 = arith.constant 0 : index
    %367 = vector.load %arg15[%c0_125, %c2_126, %c0_127] : memref<1x8x128xf32, #tpu.memory_space<vmem>>, vector<1x1x128xf32>
    %368 = vector.shape_cast %367 : vector<1x1x128xf32> to vector<1x128xf32>
    %369 = vector.shape_cast %366 : vector<1x128xf32> to vector<1x1x128xf32>
    tpu.vector_store %arg15[%c0_125, %c2_126, %c0_127], %369 {strides = array<i32>} : memref<1x8x128xf32, #tpu.memory_space<vmem>>, vector<1x1x128xf32>,
    %370 = vector.extract_strided_slice %118 {offsets = [3, 0], sizes = [1, 128], strides = [1, 1]} : vector<8x128xf32> to vector<1x128xf32>
    %371 = vector.broadcast %64 : vector<32x1xf32> to vector<32x128xf32>
    %372 = vector.broadcast %370 : vector<1x128xf32> to vector<32x128xf32>
    %373 = arith.mulf %371, %372 : vector<32x128xf32>
    %374 = vector.extract_strided_slice %123 {offsets = [3, 0], sizes = [1, 128], strides = [1, 1]} : vector<8x128xf32> to vector<1x128xf32>
    %375 = vector.broadcast %67 : vector<32x1xf32> to vector<32x128xf32>
    %376 = vector.broadcast %374 : vector<1x128xf32> to vector<32x128xf32>
    %377 = arith.mulf %375, %376 : vector<32x128xf32>
    %378 = arith.addf %373, %377 : vector<32x128xf32>
    %379 = vector.extract_strided_slice %128 {offsets = [3, 0], sizes = [1, 128], strides = [1, 1]} : vector<8x128xf32> to vector<1x128xf32>
    %380 = vector.broadcast %70 : vector<32x1xf32> to vector<32x128xf32>
    %381 = vector.broadcast %379 : vector<1x128xf32> to vector<32x128xf32>
    %382 = arith.mulf %380, %381 : vector<32x128xf32>
    %383 = arith.addf %378, %382 : vector<32x128xf32>
    %384 = vector.extract_strided_slice %101 {offsets = [3, 0], sizes = [1, 128], strides = [1, 1]} : vector<8x128xf32> to vector<1x128xf32>
    %385 = vector.broadcast %73 : vector<32x1xf32> to vector<32x128xf32>
    %386 = vector.broadcast %384 : vector<1x128xf32> to vector<32x128xf32>
    %387 = arith.mulf %385, %386 : vector<32x128xf32>
    %388 = arith.addf %383, %387 : vector<32x128xf32>
    %389 = vector.extract_strided_slice %107 {offsets = [3, 0], sizes = [1, 128], strides = [1, 1]} : vector<8x128xf32> to vector<1x128xf32>
    %390 = vector.broadcast %76 : vector<32x1xf32> to vector<32x128xf32>
    %391 = vector.broadcast %389 : vector<1x128xf32> to vector<32x128xf32>
    %392 = arith.mulf %390, %391 : vector<32x128xf32>
    %393 = arith.addf %388, %392 : vector<32x128xf32>
    %394 = vector.extract_strided_slice %113 {offsets = [3, 0], sizes = [1, 128], strides = [1, 1]} : vector<8x128xf32> to vector<1x128xf32>
    %395 = vector.broadcast %79 : vector<32x1xf32> to vector<32x128xf32>
    %396 = vector.broadcast %394 : vector<1x128xf32> to vector<32x128xf32>
    %397 = arith.mulf %395, %396 : vector<32x128xf32>
    %398 = arith.addf %393, %397 : vector<32x128xf32>
    %399 = vector.extract_strided_slice %133 {offsets = [3, 0], sizes = [1, 128], strides = [1, 1]} : vector<8x128xf32> to vector<1x128xf32>
    %400 = vector.broadcast %82 : vector<32x1xf32> to vector<32x128xf32>
    %401 = vector.broadcast %399 : vector<1x128xf32> to vector<32x128xf32>
    %402 = arith.mulf %400, %401 : vector<32x128xf32>
    %403 = arith.addf %398, %402 : vector<32x128xf32>
    %404 = vector.extract_strided_slice %138 {offsets = [3, 0], sizes = [1, 128], strides = [1, 1]} : vector<8x128xf32> to vector<1x128xf32>
    %405 = vector.broadcast %85 : vector<32x1xf32> to vector<32x128xf32>
    %406 = vector.broadcast %404 : vector<1x128xf32> to vector<32x128xf32>
    %407 = arith.mulf %405, %406 : vector<32x128xf32>
    %408 = arith.addf %403, %407 : vector<32x128xf32>
    %409 = vector.extract_strided_slice %143 {offsets = [3, 0], sizes = [1, 128], strides = [1, 1]} : vector<8x128xf32> to vector<1x128xf32>
    %410 = vector.broadcast %88 : vector<32x1xf32> to vector<32x128xf32>
    %411 = vector.broadcast %409 : vector<1x128xf32> to vector<32x128xf32>
    %412 = arith.mulf %410, %411 : vector<32x128xf32>
    %413 = arith.addf %408, %412 : vector<32x128xf32>
    %414 = vector.broadcast %91 : vector<32x1xf32> to vector<32x128xf32>
    %415 = arith.addf %413, %414 : vector<32x128xf32>
    %cst_128 = arith.constant 0.000000e+00 : f32
    %416 = vector.broadcast %cst_128 : f32 to vector<32x128xf32>
    %417 = arith.maximumf %415, %416 : vector<32x128xf32>
    %c0_129 = arith.constant 0 : index
    %c0_130 = arith.constant 0 : index
    %418 = vector.load %arg13[%c0_129, %c0_130] : memref<3x32xf32, #tpu.memory_space<vmem>>, vector<3x32xf32>
    %cst_131 = arith.constant dense<0.000000e+00> : vector<3x128xf32>
    %419 = tpu.matmul %418, %417, %cst_131 {dimension_numbers = #tpu.dot_dimension_numbers<[1], [0], [0], [1], [0, 0, 1, 1], [], []>} : vector<3x32xf32>, vector<32x128xf32>, vector<3x128xf32> -> vector<3x128xf32>
    %420 = vector.extract_strided_slice %419 {offsets = [0, 0], sizes = [1, 128], strides = [1, 1]} : vector<3x128xf32> to vector<1x128xf32>
    %c1_i32_132 = arith.constant 1 : i32
    %421 = tpu.dynamic_rotate %420 by %c1_i32_132 dim 1 : vector<1x128xf32>, i32 -> vector<1x128xf32>
    %c0_i32_133 = arith.constant 0 : i32
    %422 = vector.broadcast %c0_i32_133 : i32 to vector<1x128xi32>
    %423 = arith.cmpi eq, %95, %422 : vector<1x128xi32>
    %cst_134 = arith.constant 0.000000e+00 : f32
    %424 = vector.broadcast %cst_134 : f32 to vector<1x128xf32>
    %425 = arith.select %423, %424, %421 : vector<1x128xi1>, vector<1x128xf32>
    %426 = vector.extract_strided_slice %419 {offsets = [2, 0], sizes = [1, 128], strides = [1, 1]} : vector<3x128xf32> to vector<1x128xf32>
    %c127_i32_135 = arith.constant 127 : i32
    %427 = tpu.dynamic_rotate %426 by %c127_i32_135 dim 1 : vector<1x128xf32>, i32 -> vector<1x128xf32>
    %c127_i32_136 = arith.constant 127 : i32
    %428 = vector.broadcast %c127_i32_136 : i32 to vector<1x128xi32>
    %429 = arith.cmpi eq, %95, %428 : vector<1x128xi32>
    %cst_137 = arith.constant 0.000000e+00 : f32
    %430 = vector.broadcast %cst_137 : f32 to vector<1x128xf32>
    %431 = arith.select %429, %430, %427 : vector<1x128xi1>, vector<1x128xf32>
    %432 = vector.extract_strided_slice %419 {offsets = [1, 0], sizes = [1, 128], strides = [1, 1]} : vector<3x128xf32> to vector<1x128xf32>
    %433 = arith.addf %432, %425 : vector<1x128xf32>
    %434 = arith.addf %433, %431 : vector<1x128xf32>
    %435 = vector.broadcast %144 : f32 to vector<1x128xf32>
    %436 = arith.addf %434, %435 : vector<1x128xf32>
    %437 = arith.negf %436 : vector<1x128xf32>
    %438 = math.exp %437 : vector<1x128xf32>
    %cst_138 = arith.constant 1.000000e+00 : f32
    %439 = vector.broadcast %cst_138 : f32 to vector<1x128xf32>
    %440 = arith.addf %439, %438 : vector<1x128xf32>
    %441 = arith.divf %439, %440 : vector<1x128xf32>
    %c0_139 = arith.constant 0 : index
    %c3_140 = arith.constant 3 : index
    %c0_141 = arith.constant 0 : index
    %442 = vector.load %arg15[%c0_139, %c3_140, %c0_141] : memref<1x8x128xf32, #tpu.memory_space<vmem>>, vector<1x1x128xf32>
    %443 = vector.shape_cast %442 : vector<1x1x128xf32> to vector<1x128xf32>
    %444 = vector.shape_cast %441 : vector<1x128xf32> to vector<1x1x128xf32>
    tpu.vector_store %arg15[%c0_139, %c3_140, %c0_141], %444 {strides = array<i32>} : memref<1x8x128xf32, #tpu.memory_space<vmem>>, vector<1x1x128xf32>,
    %445 = vector.extract_strided_slice %118 {offsets = [4, 0], sizes = [1, 128], strides = [1, 1]} : vector<8x128xf32> to vector<1x128xf32>
    %446 = vector.broadcast %64 : vector<32x1xf32> to vector<32x128xf32>
    %447 = vector.broadcast %445 : vector<1x128xf32> to vector<32x128xf32>
    %448 = arith.mulf %446, %447 : vector<32x128xf32>
    %449 = vector.extract_strided_slice %123 {offsets = [4, 0], sizes = [1, 128], strides = [1, 1]} : vector<8x128xf32> to vector<1x128xf32>
    %450 = vector.broadcast %67 : vector<32x1xf32> to vector<32x128xf32>
    %451 = vector.broadcast %449 : vector<1x128xf32> to vector<32x128xf32>
    %452 = arith.mulf %450, %451 : vector<32x128xf32>
    %453 = arith.addf %448, %452 : vector<32x128xf32>
    %454 = vector.extract_strided_slice %128 {offsets = [4, 0], sizes = [1, 128], strides = [1, 1]} : vector<8x128xf32> to vector<1x128xf32>
    %455 = vector.broadcast %70 : vector<32x1xf32> to vector<32x128xf32>
    %456 = vector.broadcast %454 : vector<1x128xf32> to vector<32x128xf32>
    %457 = arith.mulf %455, %456 : vector<32x128xf32>
    %458 = arith.addf %453, %457 : vector<32x128xf32>
    %459 = vector.extract_strided_slice %101 {offsets = [4, 0], sizes = [1, 128], strides = [1, 1]} : vector<8x128xf32> to vector<1x128xf32>
    %460 = vector.broadcast %73 : vector<32x1xf32> to vector<32x128xf32>
    %461 = vector.broadcast %459 : vector<1x128xf32> to vector<32x128xf32>
    %462 = arith.mulf %460, %461 : vector<32x128xf32>
    %463 = arith.addf %458, %462 : vector<32x128xf32>
    %464 = vector.extract_strided_slice %107 {offsets = [4, 0], sizes = [1, 128], strides = [1, 1]} : vector<8x128xf32> to vector<1x128xf32>
    %465 = vector.broadcast %76 : vector<32x1xf32> to vector<32x128xf32>
    %466 = vector.broadcast %464 : vector<1x128xf32> to vector<32x128xf32>
    %467 = arith.mulf %465, %466 : vector<32x128xf32>
    %468 = arith.addf %463, %467 : vector<32x128xf32>
    %469 = vector.extract_strided_slice %113 {offsets = [4, 0], sizes = [1, 128], strides = [1, 1]} : vector<8x128xf32> to vector<1x128xf32>
    %470 = vector.broadcast %79 : vector<32x1xf32> to vector<32x128xf32>
    %471 = vector.broadcast %469 : vector<1x128xf32> to vector<32x128xf32>
    %472 = arith.mulf %470, %471 : vector<32x128xf32>
    %473 = arith.addf %468, %472 : vector<32x128xf32>
    %474 = vector.extract_strided_slice %133 {offsets = [4, 0], sizes = [1, 128], strides = [1, 1]} : vector<8x128xf32> to vector<1x128xf32>
    %475 = vector.broadcast %82 : vector<32x1xf32> to vector<32x128xf32>
    %476 = vector.broadcast %474 : vector<1x128xf32> to vector<32x128xf32>
    %477 = arith.mulf %475, %476 : vector<32x128xf32>
    %478 = arith.addf %473, %477 : vector<32x128xf32>
    %479 = vector.extract_strided_slice %138 {offsets = [4, 0], sizes = [1, 128], strides = [1, 1]} : vector<8x128xf32> to vector<1x128xf32>
    %480 = vector.broadcast %85 : vector<32x1xf32> to vector<32x128xf32>
    %481 = vector.broadcast %479 : vector<1x128xf32> to vector<32x128xf32>
    %482 = arith.mulf %480, %481 : vector<32x128xf32>
    %483 = arith.addf %478, %482 : vector<32x128xf32>
    %484 = vector.extract_strided_slice %143 {offsets = [4, 0], sizes = [1, 128], strides = [1, 1]} : vector<8x128xf32> to vector<1x128xf32>
    %485 = vector.broadcast %88 : vector<32x1xf32> to vector<32x128xf32>
    %486 = vector.broadcast %484 : vector<1x128xf32> to vector<32x128xf32>
    %487 = arith.mulf %485, %486 : vector<32x128xf32>
    %488 = arith.addf %483, %487 : vector<32x128xf32>
    %489 = vector.broadcast %91 : vector<32x1xf32> to vector<32x128xf32>
    %490 = arith.addf %488, %489 : vector<32x128xf32>
    %cst_142 = arith.constant 0.000000e+00 : f32
    %491 = vector.broadcast %cst_142 : f32 to vector<32x128xf32>
    %492 = arith.maximumf %490, %491 : vector<32x128xf32>
    %c0_143 = arith.constant 0 : index
    %c0_144 = arith.constant 0 : index
    %493 = vector.load %arg13[%c0_143, %c0_144] : memref<3x32xf32, #tpu.memory_space<vmem>>, vector<3x32xf32>
    %cst_145 = arith.constant dense<0.000000e+00> : vector<3x128xf32>
    %494 = tpu.matmul %493, %492, %cst_145 {dimension_numbers = #tpu.dot_dimension_numbers<[1], [0], [0], [1], [0, 0, 1, 1], [], []>} : vector<3x32xf32>, vector<32x128xf32>, vector<3x128xf32> -> vector<3x128xf32>
    %495 = vector.extract_strided_slice %494 {offsets = [0, 0], sizes = [1, 128], strides = [1, 1]} : vector<3x128xf32> to vector<1x128xf32>
    %c1_i32_146 = arith.constant 1 : i32
    %496 = tpu.dynamic_rotate %495 by %c1_i32_146 dim 1 : vector<1x128xf32>, i32 -> vector<1x128xf32>
    %c0_i32_147 = arith.constant 0 : i32
    %497 = vector.broadcast %c0_i32_147 : i32 to vector<1x128xi32>
    %498 = arith.cmpi eq, %95, %497 : vector<1x128xi32>
    %cst_148 = arith.constant 0.000000e+00 : f32
    %499 = vector.broadcast %cst_148 : f32 to vector<1x128xf32>
    %500 = arith.select %498, %499, %496 : vector<1x128xi1>, vector<1x128xf32>
    %501 = vector.extract_strided_slice %494 {offsets = [2, 0], sizes = [1, 128], strides = [1, 1]} : vector<3x128xf32> to vector<1x128xf32>
    %c127_i32_149 = arith.constant 127 : i32
    %502 = tpu.dynamic_rotate %501 by %c127_i32_149 dim 1 : vector<1x128xf32>, i32 -> vector<1x128xf32>
    %c127_i32_150 = arith.constant 127 : i32
    %503 = vector.broadcast %c127_i32_150 : i32 to vector<1x128xi32>
    %504 = arith.cmpi eq, %95, %503 : vector<1x128xi32>
    %cst_151 = arith.constant 0.000000e+00 : f32
    %505 = vector.broadcast %cst_151 : f32 to vector<1x128xf32>
    %506 = arith.select %504, %505, %502 : vector<1x128xi1>, vector<1x128xf32>
    %507 = vector.extract_strided_slice %494 {offsets = [1, 0], sizes = [1, 128], strides = [1, 1]} : vector<3x128xf32> to vector<1x128xf32>
    %508 = arith.addf %507, %500 : vector<1x128xf32>
    %509 = arith.addf %508, %506 : vector<1x128xf32>
    %510 = vector.broadcast %144 : f32 to vector<1x128xf32>
    %511 = arith.addf %509, %510 : vector<1x128xf32>
    %512 = arith.negf %511 : vector<1x128xf32>
    %513 = math.exp %512 : vector<1x128xf32>
    %cst_152 = arith.constant 1.000000e+00 : f32
    %514 = vector.broadcast %cst_152 : f32 to vector<1x128xf32>
    %515 = arith.addf %514, %513 : vector<1x128xf32>
    %516 = arith.divf %514, %515 : vector<1x128xf32>
    %c0_153 = arith.constant 0 : index
    %c4_154 = arith.constant 4 : index
    %c0_155 = arith.constant 0 : index
    %517 = vector.load %arg15[%c0_153, %c4_154, %c0_155] : memref<1x8x128xf32, #tpu.memory_space<vmem>>, vector<1x1x128xf32>
    %518 = vector.shape_cast %517 : vector<1x1x128xf32> to vector<1x128xf32>
    %519 = vector.shape_cast %516 : vector<1x128xf32> to vector<1x1x128xf32>
    tpu.vector_store %arg15[%c0_153, %c4_154, %c0_155], %519 {strides = array<i32>} : memref<1x8x128xf32, #tpu.memory_space<vmem>>, vector<1x1x128xf32>,
    %520 = vector.extract_strided_slice %118 {offsets = [5, 0], sizes = [1, 128], strides = [1, 1]} : vector<8x128xf32> to vector<1x128xf32>
    %521 = vector.broadcast %64 : vector<32x1xf32> to vector<32x128xf32>
    %522 = vector.broadcast %520 : vector<1x128xf32> to vector<32x128xf32>
    %523 = arith.mulf %521, %522 : vector<32x128xf32>
    %524 = vector.extract_strided_slice %123 {offsets = [5, 0], sizes = [1, 128], strides = [1, 1]} : vector<8x128xf32> to vector<1x128xf32>
    %525 = vector.broadcast %67 : vector<32x1xf32> to vector<32x128xf32>
    %526 = vector.broadcast %524 : vector<1x128xf32> to vector<32x128xf32>
    %527 = arith.mulf %525, %526 : vector<32x128xf32>
    %528 = arith.addf %523, %527 : vector<32x128xf32>
    %529 = vector.extract_strided_slice %128 {offsets = [5, 0], sizes = [1, 128], strides = [1, 1]} : vector<8x128xf32> to vector<1x128xf32>
    %530 = vector.broadcast %70 : vector<32x1xf32> to vector<32x128xf32>
    %531 = vector.broadcast %529 : vector<1x128xf32> to vector<32x128xf32>
    %532 = arith.mulf %530, %531 : vector<32x128xf32>
    %533 = arith.addf %528, %532 : vector<32x128xf32>
    %534 = vector.extract_strided_slice %101 {offsets = [5, 0], sizes = [1, 128], strides = [1, 1]} : vector<8x128xf32> to vector<1x128xf32>
    %535 = vector.broadcast %73 : vector<32x1xf32> to vector<32x128xf32>
    %536 = vector.broadcast %534 : vector<1x128xf32> to vector<32x128xf32>
    %537 = arith.mulf %535, %536 : vector<32x128xf32>
    %538 = arith.addf %533, %537 : vector<32x128xf32>
    %539 = vector.extract_strided_slice %107 {offsets = [5, 0], sizes = [1, 128], strides = [1, 1]} : vector<8x128xf32> to vector<1x128xf32>
    %540 = vector.broadcast %76 : vector<32x1xf32> to vector<32x128xf32>
    %541 = vector.broadcast %539 : vector<1x128xf32> to vector<32x128xf32>
    %542 = arith.mulf %540, %541 : vector<32x128xf32>
    %543 = arith.addf %538, %542 : vector<32x128xf32>
    %544 = vector.extract_strided_slice %113 {offsets = [5, 0], sizes = [1, 128], strides = [1, 1]} : vector<8x128xf32> to vector<1x128xf32>
    %545 = vector.broadcast %79 : vector<32x1xf32> to vector<32x128xf32>
    %546 = vector.broadcast %544 : vector<1x128xf32> to vector<32x128xf32>
    %547 = arith.mulf %545, %546 : vector<32x128xf32>
    %548 = arith.addf %543, %547 : vector<32x128xf32>
    %549 = vector.extract_strided_slice %133 {offsets = [5, 0], sizes = [1, 128], strides = [1, 1]} : vector<8x128xf32> to vector<1x128xf32>
    %550 = vector.broadcast %82 : vector<32x1xf32> to vector<32x128xf32>
    %551 = vector.broadcast %549 : vector<1x128xf32> to vector<32x128xf32>
    %552 = arith.mulf %550, %551 : vector<32x128xf32>
    %553 = arith.addf %548, %552 : vector<32x128xf32>
    %554 = vector.extract_strided_slice %138 {offsets = [5, 0], sizes = [1, 128], strides = [1, 1]} : vector<8x128xf32> to vector<1x128xf32>
    %555 = vector.broadcast %85 : vector<32x1xf32> to vector<32x128xf32>
    %556 = vector.broadcast %554 : vector<1x128xf32> to vector<32x128xf32>
    %557 = arith.mulf %555, %556 : vector<32x128xf32>
    %558 = arith.addf %553, %557 : vector<32x128xf32>
    %559 = vector.extract_strided_slice %143 {offsets = [5, 0], sizes = [1, 128], strides = [1, 1]} : vector<8x128xf32> to vector<1x128xf32>
    %560 = vector.broadcast %88 : vector<32x1xf32> to vector<32x128xf32>
    %561 = vector.broadcast %559 : vector<1x128xf32> to vector<32x128xf32>
    %562 = arith.mulf %560, %561 : vector<32x128xf32>
    %563 = arith.addf %558, %562 : vector<32x128xf32>
    %564 = vector.broadcast %91 : vector<32x1xf32> to vector<32x128xf32>
    %565 = arith.addf %563, %564 : vector<32x128xf32>
    %cst_156 = arith.constant 0.000000e+00 : f32
    %566 = vector.broadcast %cst_156 : f32 to vector<32x128xf32>
    %567 = arith.maximumf %565, %566 : vector<32x128xf32>
    %c0_157 = arith.constant 0 : index
    %c0_158 = arith.constant 0 : index
    %568 = vector.load %arg13[%c0_157, %c0_158] : memref<3x32xf32, #tpu.memory_space<vmem>>, vector<3x32xf32>
    %cst_159 = arith.constant dense<0.000000e+00> : vector<3x128xf32>
    %569 = tpu.matmul %568, %567, %cst_159 {dimension_numbers = #tpu.dot_dimension_numbers<[1], [0], [0], [1], [0, 0, 1, 1], [], []>} : vector<3x32xf32>, vector<32x128xf32>, vector<3x128xf32> -> vector<3x128xf32>
    %570 = vector.extract_strided_slice %569 {offsets = [0, 0], sizes = [1, 128], strides = [1, 1]} : vector<3x128xf32> to vector<1x128xf32>
    %c1_i32_160 = arith.constant 1 : i32
    %571 = tpu.dynamic_rotate %570 by %c1_i32_160 dim 1 : vector<1x128xf32>, i32 -> vector<1x128xf32>
    %c0_i32_161 = arith.constant 0 : i32
    %572 = vector.broadcast %c0_i32_161 : i32 to vector<1x128xi32>
    %573 = arith.cmpi eq, %95, %572 : vector<1x128xi32>
    %cst_162 = arith.constant 0.000000e+00 : f32
    %574 = vector.broadcast %cst_162 : f32 to vector<1x128xf32>
    %575 = arith.select %573, %574, %571 : vector<1x128xi1>, vector<1x128xf32>
    %576 = vector.extract_strided_slice %569 {offsets = [2, 0], sizes = [1, 128], strides = [1, 1]} : vector<3x128xf32> to vector<1x128xf32>
    %c127_i32_163 = arith.constant 127 : i32
    %577 = tpu.dynamic_rotate %576 by %c127_i32_163 dim 1 : vector<1x128xf32>, i32 -> vector<1x128xf32>
    %c127_i32_164 = arith.constant 127 : i32
    %578 = vector.broadcast %c127_i32_164 : i32 to vector<1x128xi32>
    %579 = arith.cmpi eq, %95, %578 : vector<1x128xi32>
    %cst_165 = arith.constant 0.000000e+00 : f32
    %580 = vector.broadcast %cst_165 : f32 to vector<1x128xf32>
    %581 = arith.select %579, %580, %577 : vector<1x128xi1>, vector<1x128xf32>
    %582 = vector.extract_strided_slice %569 {offsets = [1, 0], sizes = [1, 128], strides = [1, 1]} : vector<3x128xf32> to vector<1x128xf32>
    %583 = arith.addf %582, %575 : vector<1x128xf32>
    %584 = arith.addf %583, %581 : vector<1x128xf32>
    %585 = vector.broadcast %144 : f32 to vector<1x128xf32>
    %586 = arith.addf %584, %585 : vector<1x128xf32>
    %587 = arith.negf %586 : vector<1x128xf32>
    %588 = math.exp %587 : vector<1x128xf32>
    %cst_166 = arith.constant 1.000000e+00 : f32
    %589 = vector.broadcast %cst_166 : f32 to vector<1x128xf32>
    %590 = arith.addf %589, %588 : vector<1x128xf32>
    %591 = arith.divf %589, %590 : vector<1x128xf32>
    %c0_167 = arith.constant 0 : index
    %c5_168 = arith.constant 5 : index
    %c0_169 = arith.constant 0 : index
    %592 = vector.load %arg15[%c0_167, %c5_168, %c0_169] : memref<1x8x128xf32, #tpu.memory_space<vmem>>, vector<1x1x128xf32>
    %593 = vector.shape_cast %592 : vector<1x1x128xf32> to vector<1x128xf32>
    %594 = vector.shape_cast %591 : vector<1x128xf32> to vector<1x1x128xf32>
    tpu.vector_store %arg15[%c0_167, %c5_168, %c0_169], %594 {strides = array<i32>} : memref<1x8x128xf32, #tpu.memory_space<vmem>>, vector<1x1x128xf32>,
    %595 = vector.extract_strided_slice %118 {offsets = [6, 0], sizes = [1, 128], strides = [1, 1]} : vector<8x128xf32> to vector<1x128xf32>
    %596 = vector.broadcast %64 : vector<32x1xf32> to vector<32x128xf32>
    %597 = vector.broadcast %595 : vector<1x128xf32> to vector<32x128xf32>
    %598 = arith.mulf %596, %597 : vector<32x128xf32>
    %599 = vector.extract_strided_slice %123 {offsets = [6, 0], sizes = [1, 128], strides = [1, 1]} : vector<8x128xf32> to vector<1x128xf32>
    %600 = vector.broadcast %67 : vector<32x1xf32> to vector<32x128xf32>
    %601 = vector.broadcast %599 : vector<1x128xf32> to vector<32x128xf32>
    %602 = arith.mulf %600, %601 : vector<32x128xf32>
    %603 = arith.addf %598, %602 : vector<32x128xf32>
    %604 = vector.extract_strided_slice %128 {offsets = [6, 0], sizes = [1, 128], strides = [1, 1]} : vector<8x128xf32> to vector<1x128xf32>
    %605 = vector.broadcast %70 : vector<32x1xf32> to vector<32x128xf32>
    %606 = vector.broadcast %604 : vector<1x128xf32> to vector<32x128xf32>
    %607 = arith.mulf %605, %606 : vector<32x128xf32>
    %608 = arith.addf %603, %607 : vector<32x128xf32>
    %609 = vector.extract_strided_slice %101 {offsets = [6, 0], sizes = [1, 128], strides = [1, 1]} : vector<8x128xf32> to vector<1x128xf32>
    %610 = vector.broadcast %73 : vector<32x1xf32> to vector<32x128xf32>
    %611 = vector.broadcast %609 : vector<1x128xf32> to vector<32x128xf32>
    %612 = arith.mulf %610, %611 : vector<32x128xf32>
    %613 = arith.addf %608, %612 : vector<32x128xf32>
    %614 = vector.extract_strided_slice %107 {offsets = [6, 0], sizes = [1, 128], strides = [1, 1]} : vector<8x128xf32> to vector<1x128xf32>
    %615 = vector.broadcast %76 : vector<32x1xf32> to vector<32x128xf32>
    %616 = vector.broadcast %614 : vector<1x128xf32> to vector<32x128xf32>
    %617 = arith.mulf %615, %616 : vector<32x128xf32>
    %618 = arith.addf %613, %617 : vector<32x128xf32>
    %619 = vector.extract_strided_slice %113 {offsets = [6, 0], sizes = [1, 128], strides = [1, 1]} : vector<8x128xf32> to vector<1x128xf32>
    %620 = vector.broadcast %79 : vector<32x1xf32> to vector<32x128xf32>
    %621 = vector.broadcast %619 : vector<1x128xf32> to vector<32x128xf32>
    %622 = arith.mulf %620, %621 : vector<32x128xf32>
    %623 = arith.addf %618, %622 : vector<32x128xf32>
    %624 = vector.extract_strided_slice %133 {offsets = [6, 0], sizes = [1, 128], strides = [1, 1]} : vector<8x128xf32> to vector<1x128xf32>
    %625 = vector.broadcast %82 : vector<32x1xf32> to vector<32x128xf32>
    %626 = vector.broadcast %624 : vector<1x128xf32> to vector<32x128xf32>
    %627 = arith.mulf %625, %626 : vector<32x128xf32>
    %628 = arith.addf %623, %627 : vector<32x128xf32>
    %629 = vector.extract_strided_slice %138 {offsets = [6, 0], sizes = [1, 128], strides = [1, 1]} : vector<8x128xf32> to vector<1x128xf32>
    %630 = vector.broadcast %85 : vector<32x1xf32> to vector<32x128xf32>
    %631 = vector.broadcast %629 : vector<1x128xf32> to vector<32x128xf32>
    %632 = arith.mulf %630, %631 : vector<32x128xf32>
    %633 = arith.addf %628, %632 : vector<32x128xf32>
    %634 = vector.extract_strided_slice %143 {offsets = [6, 0], sizes = [1, 128], strides = [1, 1]} : vector<8x128xf32> to vector<1x128xf32>
    %635 = vector.broadcast %88 : vector<32x1xf32> to vector<32x128xf32>
    %636 = vector.broadcast %634 : vector<1x128xf32> to vector<32x128xf32>
    %637 = arith.mulf %635, %636 : vector<32x128xf32>
    %638 = arith.addf %633, %637 : vector<32x128xf32>
    %639 = vector.broadcast %91 : vector<32x1xf32> to vector<32x128xf32>
    %640 = arith.addf %638, %639 : vector<32x128xf32>
    %cst_170 = arith.constant 0.000000e+00 : f32
    %641 = vector.broadcast %cst_170 : f32 to vector<32x128xf32>
    %642 = arith.maximumf %640, %641 : vector<32x128xf32>
    %c0_171 = arith.constant 0 : index
    %c0_172 = arith.constant 0 : index
    %643 = vector.load %arg13[%c0_171, %c0_172] : memref<3x32xf32, #tpu.memory_space<vmem>>, vector<3x32xf32>
    %cst_173 = arith.constant dense<0.000000e+00> : vector<3x128xf32>
    %644 = tpu.matmul %643, %642, %cst_173 {dimension_numbers = #tpu.dot_dimension_numbers<[1], [0], [0], [1], [0, 0, 1, 1], [], []>} : vector<3x32xf32>, vector<32x128xf32>, vector<3x128xf32> -> vector<3x128xf32>
    %645 = vector.extract_strided_slice %644 {offsets = [0, 0], sizes = [1, 128], strides = [1, 1]} : vector<3x128xf32> to vector<1x128xf32>
    %c1_i32_174 = arith.constant 1 : i32
    %646 = tpu.dynamic_rotate %645 by %c1_i32_174 dim 1 : vector<1x128xf32>, i32 -> vector<1x128xf32>
    %c0_i32_175 = arith.constant 0 : i32
    %647 = vector.broadcast %c0_i32_175 : i32 to vector<1x128xi32>
    %648 = arith.cmpi eq, %95, %647 : vector<1x128xi32>
    %cst_176 = arith.constant 0.000000e+00 : f32
    %649 = vector.broadcast %cst_176 : f32 to vector<1x128xf32>
    %650 = arith.select %648, %649, %646 : vector<1x128xi1>, vector<1x128xf32>
    %651 = vector.extract_strided_slice %644 {offsets = [2, 0], sizes = [1, 128], strides = [1, 1]} : vector<3x128xf32> to vector<1x128xf32>
    %c127_i32_177 = arith.constant 127 : i32
    %652 = tpu.dynamic_rotate %651 by %c127_i32_177 dim 1 : vector<1x128xf32>, i32 -> vector<1x128xf32>
    %c127_i32_178 = arith.constant 127 : i32
    %653 = vector.broadcast %c127_i32_178 : i32 to vector<1x128xi32>
    %654 = arith.cmpi eq, %95, %653 : vector<1x128xi32>
    %cst_179 = arith.constant 0.000000e+00 : f32
    %655 = vector.broadcast %cst_179 : f32 to vector<1x128xf32>
    %656 = arith.select %654, %655, %652 : vector<1x128xi1>, vector<1x128xf32>
    %657 = vector.extract_strided_slice %644 {offsets = [1, 0], sizes = [1, 128], strides = [1, 1]} : vector<3x128xf32> to vector<1x128xf32>
    %658 = arith.addf %657, %650 : vector<1x128xf32>
    %659 = arith.addf %658, %656 : vector<1x128xf32>
    %660 = vector.broadcast %144 : f32 to vector<1x128xf32>
    %661 = arith.addf %659, %660 : vector<1x128xf32>
    %662 = arith.negf %661 : vector<1x128xf32>
    %663 = math.exp %662 : vector<1x128xf32>
    %cst_180 = arith.constant 1.000000e+00 : f32
    %664 = vector.broadcast %cst_180 : f32 to vector<1x128xf32>
    %665 = arith.addf %664, %663 : vector<1x128xf32>
    %666 = arith.divf %664, %665 : vector<1x128xf32>
    %c0_181 = arith.constant 0 : index
    %c6_182 = arith.constant 6 : index
    %c0_183 = arith.constant 0 : index
    %667 = vector.load %arg15[%c0_181, %c6_182, %c0_183] : memref<1x8x128xf32, #tpu.memory_space<vmem>>, vector<1x1x128xf32>
    %668 = vector.shape_cast %667 : vector<1x1x128xf32> to vector<1x128xf32>
    %669 = vector.shape_cast %666 : vector<1x128xf32> to vector<1x1x128xf32>
    tpu.vector_store %arg15[%c0_181, %c6_182, %c0_183], %669 {strides = array<i32>} : memref<1x8x128xf32, #tpu.memory_space<vmem>>, vector<1x1x128xf32>,
    %670 = vector.extract_strided_slice %118 {offsets = [7, 0], sizes = [1, 128], strides = [1, 1]} : vector<8x128xf32> to vector<1x128xf32>
    %671 = vector.broadcast %64 : vector<32x1xf32> to vector<32x128xf32>
    %672 = vector.broadcast %670 : vector<1x128xf32> to vector<32x128xf32>
    %673 = arith.mulf %671, %672 : vector<32x128xf32>
    %674 = vector.extract_strided_slice %123 {offsets = [7, 0], sizes = [1, 128], strides = [1, 1]} : vector<8x128xf32> to vector<1x128xf32>
    %675 = vector.broadcast %67 : vector<32x1xf32> to vector<32x128xf32>
    %676 = vector.broadcast %674 : vector<1x128xf32> to vector<32x128xf32>
    %677 = arith.mulf %675, %676 : vector<32x128xf32>
    %678 = arith.addf %673, %677 : vector<32x128xf32>
    %679 = vector.extract_strided_slice %128 {offsets = [7, 0], sizes = [1, 128], strides = [1, 1]} : vector<8x128xf32> to vector<1x128xf32>
    %680 = vector.broadcast %70 : vector<32x1xf32> to vector<32x128xf32>
    %681 = vector.broadcast %679 : vector<1x128xf32> to vector<32x128xf32>
    %682 = arith.mulf %680, %681 : vector<32x128xf32>
    %683 = arith.addf %678, %682 : vector<32x128xf32>
    %684 = vector.extract_strided_slice %101 {offsets = [7, 0], sizes = [1, 128], strides = [1, 1]} : vector<8x128xf32> to vector<1x128xf32>
    %685 = vector.broadcast %73 : vector<32x1xf32> to vector<32x128xf32>
    %686 = vector.broadcast %684 : vector<1x128xf32> to vector<32x128xf32>
    %687 = arith.mulf %685, %686 : vector<32x128xf32>
    %688 = arith.addf %683, %687 : vector<32x128xf32>
    %689 = vector.extract_strided_slice %107 {offsets = [7, 0], sizes = [1, 128], strides = [1, 1]} : vector<8x128xf32> to vector<1x128xf32>
    %690 = vector.broadcast %76 : vector<32x1xf32> to vector<32x128xf32>
    %691 = vector.broadcast %689 : vector<1x128xf32> to vector<32x128xf32>
    %692 = arith.mulf %690, %691 : vector<32x128xf32>
    %693 = arith.addf %688, %692 : vector<32x128xf32>
    %694 = vector.extract_strided_slice %113 {offsets = [7, 0], sizes = [1, 128], strides = [1, 1]} : vector<8x128xf32> to vector<1x128xf32>
    %695 = vector.broadcast %79 : vector<32x1xf32> to vector<32x128xf32>
    %696 = vector.broadcast %694 : vector<1x128xf32> to vector<32x128xf32>
    %697 = arith.mulf %695, %696 : vector<32x128xf32>
    %698 = arith.addf %693, %697 : vector<32x128xf32>
    %699 = vector.extract_strided_slice %133 {offsets = [7, 0], sizes = [1, 128], strides = [1, 1]} : vector<8x128xf32> to vector<1x128xf32>
    %700 = vector.broadcast %82 : vector<32x1xf32> to vector<32x128xf32>
    %701 = vector.broadcast %699 : vector<1x128xf32> to vector<32x128xf32>
    %702 = arith.mulf %700, %701 : vector<32x128xf32>
    %703 = arith.addf %698, %702 : vector<32x128xf32>
    %704 = vector.extract_strided_slice %138 {offsets = [7, 0], sizes = [1, 128], strides = [1, 1]} : vector<8x128xf32> to vector<1x128xf32>
    %705 = vector.broadcast %85 : vector<32x1xf32> to vector<32x128xf32>
    %706 = vector.broadcast %704 : vector<1x128xf32> to vector<32x128xf32>
    %707 = arith.mulf %705, %706 : vector<32x128xf32>
    %708 = arith.addf %703, %707 : vector<32x128xf32>
    %709 = vector.extract_strided_slice %143 {offsets = [7, 0], sizes = [1, 128], strides = [1, 1]} : vector<8x128xf32> to vector<1x128xf32>
    %710 = vector.broadcast %88 : vector<32x1xf32> to vector<32x128xf32>
    %711 = vector.broadcast %709 : vector<1x128xf32> to vector<32x128xf32>
    %712 = arith.mulf %710, %711 : vector<32x128xf32>
    %713 = arith.addf %708, %712 : vector<32x128xf32>
    %714 = vector.broadcast %91 : vector<32x1xf32> to vector<32x128xf32>
    %715 = arith.addf %713, %714 : vector<32x128xf32>
    %cst_184 = arith.constant 0.000000e+00 : f32
    %716 = vector.broadcast %cst_184 : f32 to vector<32x128xf32>
    %717 = arith.maximumf %715, %716 : vector<32x128xf32>
    %c0_185 = arith.constant 0 : index
    %c0_186 = arith.constant 0 : index
    %718 = vector.load %arg13[%c0_185, %c0_186] : memref<3x32xf32, #tpu.memory_space<vmem>>, vector<3x32xf32>
    %cst_187 = arith.constant dense<0.000000e+00> : vector<3x128xf32>
    %719 = tpu.matmul %718, %717, %cst_187 {dimension_numbers = #tpu.dot_dimension_numbers<[1], [0], [0], [1], [0, 0, 1, 1], [], []>} : vector<3x32xf32>, vector<32x128xf32>, vector<3x128xf32> -> vector<3x128xf32>
    %720 = vector.extract_strided_slice %719 {offsets = [0, 0], sizes = [1, 128], strides = [1, 1]} : vector<3x128xf32> to vector<1x128xf32>
    %c1_i32_188 = arith.constant 1 : i32
    %721 = tpu.dynamic_rotate %720 by %c1_i32_188 dim 1 : vector<1x128xf32>, i32 -> vector<1x128xf32>
    %c0_i32_189 = arith.constant 0 : i32
    %722 = vector.broadcast %c0_i32_189 : i32 to vector<1x128xi32>
    %723 = arith.cmpi eq, %95, %722 : vector<1x128xi32>
    %cst_190 = arith.constant 0.000000e+00 : f32
    %724 = vector.broadcast %cst_190 : f32 to vector<1x128xf32>
    %725 = arith.select %723, %724, %721 : vector<1x128xi1>, vector<1x128xf32>
    %726 = vector.extract_strided_slice %719 {offsets = [2, 0], sizes = [1, 128], strides = [1, 1]} : vector<3x128xf32> to vector<1x128xf32>
    %c127_i32_191 = arith.constant 127 : i32
    %727 = tpu.dynamic_rotate %726 by %c127_i32_191 dim 1 : vector<1x128xf32>, i32 -> vector<1x128xf32>
    %c127_i32_192 = arith.constant 127 : i32
    %728 = vector.broadcast %c127_i32_192 : i32 to vector<1x128xi32>
    %729 = arith.cmpi eq, %95, %728 : vector<1x128xi32>
    %cst_193 = arith.constant 0.000000e+00 : f32
    %730 = vector.broadcast %cst_193 : f32 to vector<1x128xf32>
    %731 = arith.select %729, %730, %727 : vector<1x128xi1>, vector<1x128xf32>
    %732 = vector.extract_strided_slice %719 {offsets = [1, 0], sizes = [1, 128], strides = [1, 1]} : vector<3x128xf32> to vector<1x128xf32>
    %733 = arith.addf %732, %725 : vector<1x128xf32>
    %734 = arith.addf %733, %731 : vector<1x128xf32>
    %735 = vector.broadcast %144 : f32 to vector<1x128xf32>
    %736 = arith.addf %734, %735 : vector<1x128xf32>
    %737 = arith.negf %736 : vector<1x128xf32>
    %738 = math.exp %737 : vector<1x128xf32>
    %cst_194 = arith.constant 1.000000e+00 : f32
    %739 = vector.broadcast %cst_194 : f32 to vector<1x128xf32>
    %740 = arith.addf %739, %738 : vector<1x128xf32>
    %741 = arith.divf %739, %740 : vector<1x128xf32>
    %c0_195 = arith.constant 0 : index
    %c7_196 = arith.constant 7 : index
    %c0_197 = arith.constant 0 : index
    %742 = vector.load %arg15[%c0_195, %c7_196, %c0_197] : memref<1x8x128xf32, #tpu.memory_space<vmem>>, vector<1x1x128xf32>
    %743 = vector.shape_cast %742 : vector<1x1x128xf32> to vector<1x128xf32>
    %744 = vector.shape_cast %741 : vector<1x128xf32> to vector<1x1x128xf32>
    tpu.vector_store %arg15[%c0_195, %c7_196, %c0_197], %744 {strides = array<i32>} : memref<1x8x128xf32, #tpu.memory_space<vmem>>, vector<1x1x128xf32>,
    return
  }
  func.func @transform_0(%arg0: i32) -> (i32, i32, i32, i32) {
    %c0_i32 = arith.constant 0 : i32
    %c0_i32_0 = arith.constant 0 : i32
    %c0_i32_1 = arith.constant 0 : i32
    %c0_i32_2 = arith.constant 0 : i32
    return %arg0, %c0_i32, %c0_i32_0, %c0_i32_1 : i32, i32, i32, i32
  }
  func.func @transform_1(%arg0: i32) -> (i32, i32, i32, i32) {
    %c0_i32 = arith.constant 0 : i32
    %c0_i32_0 = arith.constant 0 : i32
    %c0_i32_1 = arith.constant 0 : i32
    %c0_i32_2 = arith.constant 0 : i32
    return %arg0, %c0_i32, %c0_i32_0, %c0_i32_1 : i32, i32, i32, i32
  }
  func.func @transform_2(%arg0: i32) -> (i32, i32) {
    %c0_i32 = arith.constant 0 : i32
    %c0_i32_0 = arith.constant 0 : i32
    %c0_i32_1 = arith.constant 0 : i32
    return %c0_i32, %c0_i32_0 : i32, i32
  }
  func.func @transform_3(%arg0: i32) -> (i32, i32) {
    %c0_i32 = arith.constant 0 : i32
    %c0_i32_0 = arith.constant 0 : i32
    %c0_i32_1 = arith.constant 0 : i32
    return %c0_i32, %c0_i32_0 : i32, i32
  }
  func.func @transform_4(%arg0: i32) -> (i32, i32) {
    %c0_i32 = arith.constant 0 : i32
    %c0_i32_0 = arith.constant 0 : i32
    %c0_i32_1 = arith.constant 0 : i32
    return %c0_i32, %c0_i32_0 : i32, i32
  }
  func.func @transform_5(%arg0: i32) -> (i32, i32) {
    %c0_i32 = arith.constant 0 : i32
    %c0_i32_0 = arith.constant 0 : i32
    %c0_i32_1 = arith.constant 0 : i32
    return %c0_i32, %c0_i32_0 : i32, i32
  }
  func.func @transform_6(%arg0: i32) -> (i32, i32) {
    %c0_i32 = arith.constant 0 : i32
    %c0_i32_0 = arith.constant 0 : i32
    %c0_i32_1 = arith.constant 0 : i32
    return %c0_i32, %c0_i32_0 : i32, i32
  }
  func.func @transform_7(%arg0: i32) -> (i32, i32) {
    %c0_i32 = arith.constant 0 : i32
    %c0_i32_0 = arith.constant 0 : i32
    %c0_i32_1 = arith.constant 0 : i32
    return %c0_i32, %c0_i32_0 : i32, i32
  }
  func.func @transform_8(%arg0: i32) -> (i32, i32) {
    %c0_i32 = arith.constant 0 : i32
    %c0_i32_0 = arith.constant 0 : i32
    %c0_i32_1 = arith.constant 0 : i32
    return %c0_i32, %c0_i32_0 : i32, i32
  }
  func.func @transform_9(%arg0: i32) -> (i32, i32) {
    %c0_i32 = arith.constant 0 : i32
    %c0_i32_0 = arith.constant 0 : i32
    %c0_i32_1 = arith.constant 0 : i32
    return %c0_i32, %c0_i32_0 : i32, i32
  }
  func.func @transform_10(%arg0: i32) -> (i32, i32, i32) {
    %c0_i32 = arith.constant 0 : i32
    %c0_i32_0 = arith.constant 0 : i32
    %c0_i32_1 = arith.constant 0 : i32
    %c0_i32_2 = arith.constant 0 : i32
    return %c0_i32, %c0_i32_0, %c0_i32_1 : i32, i32, i32
  }
  func.func @transform_11(%arg0: i32) -> (i32, i32) {
    %c0_i32 = arith.constant 0 : i32
    %c0_i32_0 = arith.constant 0 : i32
    %c0_i32_1 = arith.constant 0 : i32
    return %c0_i32, %c0_i32_0 : i32, i32
  }
  func.func @transform_12(%arg0: i32) -> (i32, i32) {
    %c0_i32 = arith.constant 0 : i32
    %c0_i32_0 = arith.constant 0 : i32
    %c0_i32_1 = arith.constant 0 : i32
    return %c0_i32, %c0_i32_0 : i32, i32
  }
  func.func @transform_13(%arg0: i32) -> (i32, i32) {
    %c0_i32 = arith.constant 0 : i32
    %c0_i32_0 = arith.constant 0 : i32
    %c0_i32_1 = arith.constant 0 : i32
    return %c0_i32, %c0_i32_0 : i32, i32
  }
  func.func @transform_14(%arg0: i32) -> (i32, i32, i32) {
    %c0_i32 = arith.constant 0 : i32
    %c0_i32_0 = arith.constant 0 : i32
    %c0_i32_1 = arith.constant 0 : i32
    return %arg0, %c0_i32, %c0_i32_0 : i32, i32, i32
  }
}

</mosaic_0001>

<llo_original>
// kernel: probabilistic_segmentation_unet_forward.1
$region0: #{probabilistic_segmentation_unet_forward.1}
  #allocation0 [shape = 'u32[]', space=smem, size = 0x4, offset = 0x4, fixed_abs, tag = 'smem constant byte address 0x4 - core index']
  #allocation1 [shape = 'u32[72,128]{1,0:T(1,128)}', space=vmem, size = 0x9000, scoped, tag = 'internal scratch']
  #allocation2 [shape = 'f32[18,18,4]{2,1,0:T(8,128)}', space=vmem, size = 0x36000, scoped, tag = 'scratch operand']
  #allocation3 [shape = 'f32[1,1]{1,0:T(1,128)S(6)}', space=smem, size = 0x200, scoped, tag = 'scoped memory for probabilistic_segmentation_unet_forward.1']
  %s0 = inlined_call_operand.vmem [shape: f32[2,16,16,4], index: 0, kind: input, shape index: {}]
  %s1 = inlined_call_operand.vmem [shape: f32[2,3,8,128], index: 1, kind: input, shape index: {}]
  %s2 = inlined_call_operand.vmem [shape: f32[1,4], index: 2, kind: input, shape index: {}]
  %s3 = inlined_call_operand.vmem [shape: f32[1,4], index: 3, kind: input, shape index: {}]
  %s4 = inlined_call_operand.vmem [shape: f32[36,32], index: 4, kind: input, shape index: {}]
  %s5 = inlined_call_operand.vmem [shape: f32[1,32], index: 5, kind: input, shape index: {}]
  %s6 = inlined_call_operand.vmem [shape: f32[32,32], index: 6, kind: input, shape index: {}]
  %s7 = inlined_call_operand.vmem [shape: f32[1,32], index: 7, kind: input, shape index: {}]
  %s8 = inlined_call_operand.vmem [shape: f32[32,32], index: 8, kind: input, shape index: {}]
  %s9 = inlined_call_operand.vmem [shape: f32[1,32], index: 9, kind: input, shape index: {}]
  %s10 = inlined_call_operand.vmem [shape: f32[9,32,1], index: 10, kind: input, shape index: {}]
  %s11 = inlined_call_operand.vmem [shape: f32[32,1], index: 11, kind: input, shape index: {}]
  %s12 = inlined_call_operand.vmem [shape: f32[3,32], index: 12, kind: input, shape index: {}]
  %s13 = inlined_call_operand.<no memory space> [shape: f32[1,1], index: 13, kind: input, shape index: {}]
  %s14 = inlined_call_operand.hbm [shape: f32[2,8,128], index: 14, kind: output, shape index: {}]
  %s15 = sld [smem:[#allocation0]]
  $region89: #{probabilistic_segmentation_unet_forward.1} parent=0
    _
  %s17 = ssub.s32 1, %s15
  %s18 = scalar_select 0, %s17, %s15
  %19 = sst [smem:[#allocation3]] %s13
  $region1: #{probabilistic_segmentation_unet_forward.1} parent=0
    #allocation4 [shape = 'u8[8192]{0}', space=vmem, size = 0x2000, scoped, tag = 'output window, operand 0']
    #allocation5 [shape = 's32[2]{0}', space=sflag, size = 0x8, scoped, tag = 'scoped memory for probabilistic_segmentation_unet_forward.1']
    %20 = vsyncpa [#allocation5], 0
    %s21 = scalar_lea.sflag [#allocation5], 1
    %22 = vsyncpa %s21, 0
    loop: start=0, step=1, limit=4
    $region2: #{probabilistic_segmentation_unet_forward.1} parent=1 // loop_pre_header
      _
    $region3: #{probabilistic_segmentation_unet_forward.1} parent=1 // loop_header
      %s24 = sphi 0, %s28
      %p25 = scmp.ge.s32.totalorder %s24, 4
      %s34 = sphi 0, %s36
      %s37 = sphi 0, %s34
      %s38 = sphi 0, %s37
      %s54 = sphi 0, %s38
      %s60 = sphi 0, %s62
      %s63 = sphi 0, %s60
      %s64 = sphi 0, %s63
      %s80 = sphi 0, %s64
      %s84 = sphi 0, %s84
      %s86 = sphi 0, %s84
      %s87 = sphi 0, %s86
      %s101 = sphi 0, %s87
      %s105 = sphi 0, %s105
      %s107 = sphi 0, %s105
      %s108 = sphi 0, %s107
      %s122 = sphi 0, %s108
      %s126 = sphi 0, %s126
      %s128 = sphi 0, %s126
      %s129 = sphi 0, %s128
      %s143 = sphi 0, %s129
      %s147 = sphi 0, %s147
      %s149 = sphi 0, %s147
      %s150 = sphi 0, %s149
      %s164 = sphi 0, %s150
      %s168 = sphi 0, %s168
      %s170 = sphi 0, %s168
      %s171 = sphi 0, %s170
      %s185 = sphi 0, %s171
      %s189 = sphi 0, %s189
      %s191 = sphi 0, %s189
      %s192 = sphi 0, %s191
      %s206 = sphi 0, %s192
      %s210 = sphi 0, %s210
      %s212 = sphi 0, %s210
      %s213 = sphi 0, %s212
      %s227 = sphi 0, %s213
      %s231 = sphi 0, %s231
      %s233 = sphi 0, %s231
      %s234 = sphi 0, %s233
      %s248 = sphi 0, %s234
      %s252 = sphi 0, %s252
      %s254 = sphi 0, %s252
      %s255 = sphi 0, %s254
      %s269 = sphi 0, %s255
      %s273 = sphi 0, %s273
      %s275 = sphi 0, %s273
      %s276 = sphi 0, %s275
      %s290 = sphi 0, %s276
      %s294 = sphi 0, %s294
      %s296 = sphi 0, %s294
      %s297 = sphi 0, %s296
      %s311 = sphi 0, %s297
      %s315 = sphi 0, %s315
      %s317 = sphi 0, %s315
      %s318 = sphi 0, %s317
      %s332 = sphi 0, %s318
      %s338 = sphi 0, %s340
      %s341 = sphi 0, %s338
      %s342 = sphi 0, %s341
      %s358 = sphi 0, %s342
    $region4: #{probabilistic_segmentation_unet_forward.1} parent=1 // loop_header_branch
      %27 = sbr.rel (%p25) target = $region8
    $region5: #{probabilistic_segmentation_unet_forward.1} parent=1 // loop_body
      %s29 = ssub.s32 %s24, 1
      %s30 = ssub.s32 %s24, 2
      %s31 = sadd.s32 %s24, 1
      %s32 = ssub.s32 %s24, %s31
      %p33 = scmp.eq.s32.totalorder %s32, 0
      %s35 = sadd.s32 %s34, 1
      %s36 = scalar_select %p33, %s34, %s35
      %p39 = pneg %p33
      %p40 = scmp.eq.s32.totalorder %s24, 1
      %p41 = por %p39, %p40
      %p42 = scmp.ne.s32.totalorder %s34, %s37
      %p43 = scmp.eq.s32.totalorder %s24, 0
      %p44 = por %p42, %p43
      %p45 = scmp.ne.s32.totalorder %s34, %s37
      %p46 = scmp.eq.s32.totalorder %s29, 1
      %p47 = por %p45, %p46
      %p48 = scmp.ne.s32.totalorder %s37, %s38
      %p49 = scmp.eq.s32.totalorder %s29, 0
      %p50 = por %p48, %p49
      %p51 = scmp.ne.s32.totalorder %s37, %s38
      %p52 = scmp.eq.s32.totalorder %s30, 1
      %p53 = por %p51, %p52
      %p55 = scmp.ne.s32.totalorder %s38, %s54
      %p56 = scmp.eq.s32.totalorder %s30, 0
      %p57 = por %p55, %p56
      %s58 = ssub.s32 %s24, %s31
      %p59 = scmp.eq.s32.totalorder %s58, 0
      %s61 = sadd.s32 %s60, 1
      %s62 = scalar_select %p59, %s60, %s61
      %p65 = pneg %p59
      %p66 = scmp.eq.s32.totalorder %s24, 1
      %p67 = por %p65, %p66
      %p68 = scmp.ne.s32.totalorder %s60, %s63
      %p69 = scmp.eq.s32.totalorder %s24, 0
      %p70 = por %p68, %p69
      %p71 = scmp.ne.s32.totalorder %s60, %s63
      %p72 = scmp.eq.s32.totalorder %s29, 1
      %p73 = por %p71, %p72
      %p74 = scmp.ne.s32.totalorder %s63, %s64
      %p75 = scmp.eq.s32.totalorder %s29, 0
      %p76 = por %p74, %p75
      %p77 = scmp.ne.s32.totalorder %s63, %s64
      %p78 = scmp.eq.s32.totalorder %s30, 1
      %p79 = por %p77, %p78
      %p81 = scmp.ne.s32.totalorder %s64, %s80
      %p82 = scmp.eq.s32.totalorder %s30, 0
      %p83 = por %p81, %p82
      %s85 = sadd.s32 %s84, 1
      %p88 = scmp.eq.s32.totalorder %s24, 1
      %p89 = scmp.ne.s32.totalorder %s84, %s86
      %p90 = scmp.eq.s32.totalorder %s24, 0
      %p91 = por %p89, %p90
      %p92 = scmp.ne.s32.totalorder %s84, %s86
      %p93 = scmp.eq.s32.totalorder %s29, 1
      %p94 = por %p92, %p93
      %p95 = scmp.ne.s32.totalorder %s86, %s87
      %p96 = scmp.eq.s32.totalorder %s29, 0
      %p97 = por %p95, %p96
      %p98 = scmp.ne.s32.totalorder %s86, %s87
      %p99 = scmp.eq.s32.totalorder %s30, 1
      %p100 = por %p98, %p99
      %p102 = scmp.ne.s32.totalorder %s87, %s101
      %p103 = scmp.eq.s32.totalorder %s30, 0
      %p104 = por %p102, %p103
      %s106 = sadd.s32 %s105, 1
      %p109 = scmp.eq.s32.totalorder %s24, 1
      %p110 = scmp.ne.s32.totalorder %s105, %s107
      %p111 = scmp.eq.s32.totalorder %s24, 0
      %p112 = por %p110, %p111
      %p113 = scmp.ne.s32.totalorder %s105, %s107
      %p114 = scmp.eq.s32.totalorder %s29, 1
      %p115 = por %p113, %p114
      %p116 = scmp.ne.s32.totalorder %s107, %s108
      %p117 = scmp.eq.s32.totalorder %s29, 0
      %p118 = por %p116, %p117
      %p119 = scmp.ne.s32.totalorder %s107, %s108
      %p120 = scmp.eq.s32.totalorder %s30, 1
      %p121 = por %p119, %p120
      %p123 = scmp.ne.s32.totalorder %s108, %s122
      %p124 = scmp.eq.s32.totalorder %s30, 0
      %p125 = por %p123, %p124
      %s127 = sadd.s32 %s126, 1
      %p130 = scmp.eq.s32.totalorder %s24, 1
      %p131 = scmp.ne.s32.totalorder %s126, %s128
      %p132 = scmp.eq.s32.totalorder %s24, 0
      %p133 = por %p131, %p132
      %p134 = scmp.ne.s32.totalorder %s126, %s128
      %p135 = scmp.eq.s32.totalorder %s29, 1
      %p136 = por %p134, %p135
      %p137 = scmp.ne.s32.totalorder %s128, %s129
      %p138 = scmp.eq.s32.totalorder %s29, 0
      %p139 = por %p137, %p138
      %p140 = scmp.ne.s32.totalorder %s128, %s129
      %p141 = scmp.eq.s32.totalorder %s30, 1
      %p142 = por %p140, %p141
      %p144 = scmp.ne.s32.totalorder %s129, %s143
      %p145 = scmp.eq.s32.totalorder %s30, 0
      %p146 = por %p144, %p145
      %s148 = sadd.s32 %s147, 1
      %p151 = scmp.eq.s32.totalorder %s24, 1
      %p152 = scmp.ne.s32.totalorder %s147, %s149
      %p153 = scmp.eq.s32.totalorder %s24, 0
      %p154 = por %p152, %p153
      %p155 = scmp.ne.s32.totalorder %s147, %s149
      %p156 = scmp.eq.s32.totalorder %s29, 1
      %p157 = por %p155, %p156
      %p158 = scmp.ne.s32.totalorder %s149, %s150
      %p159 = scmp.eq.s32.totalorder %s29, 0
      %p160 = por %p158, %p159
      %p161 = scmp.ne.s32.totalorder %s149, %s150
      %p162 = scmp.eq.s32.totalorder %s30, 1
      %p163 = por %p161, %p162
      %p165 = scmp.ne.s32.totalorder %s150, %s164
      %p166 = scmp.eq.s32.totalorder %s30, 0
      %p167 = por %p165, %p166
      %s169 = sadd.s32 %s168, 1
      %p172 = scmp.eq.s32.totalorder %s24, 1
      %p173 = scmp.ne.s32.totalorder %s168, %s170
      %p174 = scmp.eq.s32.totalorder %s24, 0
      %p175 = por %p173, %p174
      %p176 = scmp.ne.s32.totalorder %s168, %s170
      %p177 = scmp.eq.s32.totalorder %s29, 1
      %p178 = por %p176, %p177
      %p179 = scmp.ne.s32.totalorder %s170, %s171
      %p180 = scmp.eq.s32.totalorder %s29, 0
      %p181 = por %p179, %p180
      %p182 = scmp.ne.s32.totalorder %s170, %s171
      %p183 = scmp.eq.s32.totalorder %s30, 1
      %p184 = por %p182, %p183
      %p186 = scmp.ne.s32.totalorder %s171, %s185
      %p187 = scmp.eq.s32.totalorder %s30, 0
      %p188 = por %p186, %p187
      %s190 = sadd.s32 %s189, 1
      %p193 = scmp.eq.s32.totalorder %s24, 1
      %p194 = scmp.ne.s32.totalorder %s189, %s191
      %p195 = scmp.eq.s32.totalorder %s24, 0
      %p196 = por %p194, %p195
      %p197 = scmp.ne.s32.totalorder %s189, %s191
      %p198 = scmp.eq.s32.totalorder %s29, 1
      %p199 = por %p197, %p198
      %p200 = scmp.ne.s32.totalorder %s191, %s192
      %p201 = scmp.eq.s32.totalorder %s29, 0
      %p202 = por %p200, %p201
      %p203 = scmp.ne.s32.totalorder %s191, %s192
      %p204 = scmp.eq.s32.totalorder %s30, 1
      %p205 = por %p203, %p204
      %p207 = scmp.ne.s32.totalorder %s192, %s206
      %p208 = scmp.eq.s32.totalorder %s30, 0
      %p209 = por %p207, %p208
      %s211 = sadd.s32 %s210, 1
      %p214 = scmp.eq.s32.totalorder %s24, 1
      %p215 = scmp.ne.s32.totalorder %s210, %s212
      %p216 = scmp.eq.s32.totalorder %s24, 0
      %p217 = por %p215, %p216
      %p218 = scmp.ne.s32.totalorder %s210, %s212
      %p219 = scmp.eq.s32.totalorder %s29, 1
      %p220 = por %p218, %p219
      %p221 = scmp.ne.s32.totalorder %s212, %s213
      %p222 = scmp.eq.s32.totalorder %s29, 0
      %p223 = por %p221, %p222
      %p224 = scmp.ne.s32.totalorder %s212, %s213
      %p225 = scmp.eq.s32.totalorder %s30, 1
      %p226 = por %p224, %p225
      %p228 = scmp.ne.s32.totalorder %s213, %s227
      %p229 = scmp.eq.s32.totalorder %s30, 0
      %p230 = por %p228, %p229
      %s232 = sadd.s32 %s231, 1
      %p235 = scmp.eq.s32.totalorder %s24, 1
      %p236 = scmp.ne.s32.totalorder %s231, %s233
      %p237 = scmp.eq.s32.totalorder %s24, 0
      %p238 = por %p236, %p237
      %p239 = scmp.ne.s32.totalorder %s231, %s233
      %p240 = scmp.eq.s32.totalorder %s29, 1
      %p241 = por %p239, %p240
      %p242 = scmp.ne.s32.totalorder %s233, %s234
      %p243 = scmp.eq.s32.totalorder %s29, 0
      %p244 = por %p242, %p243
      %p245 = scmp.ne.s32.totalorder %s233, %s234
      %p246 = scmp.eq.s32.totalorder %s30, 1
      %p247 = por %p245, %p246
      %p249 = scmp.ne.s32.totalorder %s234, %s248
      %p250 = scmp.eq.s32.totalorder %s30, 0
      %p251 = por %p249, %p250
      %s253 = sadd.s32 %s252, 1
      %p256 = scmp.eq.s32.totalorder %s24, 1
      %p257 = scmp.ne.s32.totalorder %s252, %s254
      %p258 = scmp.eq.s32.totalorder %s24, 0
      %p259 = por %p257, %p258
      %p260 = scmp.ne.s32.totalorder %s252, %s254
      %p261 = scmp.eq.s32.totalorder %s29, 1
      %p262 = por %p260, %p261
      %p263 = scmp.ne.s32.totalorder %s254, %s255
      %p264 = scmp.eq.s32.totalorder %s29, 0
      %p265 = por %p263, %p264
      %p266 = scmp.ne.s32.totalorder %s254, %s255
      %p267 = scmp.eq.s32.totalorder %s30, 1
      %p268 = por %p266, %p267
      %p270 = scmp.ne.s32.totalorder %s255, %s269
      %p271 = scmp.eq.s32.totalorder %s30, 0
      %p272 = por %p270, %p271
      %s274 = sadd.s32 %s273, 1
      %p277 = scmp.eq.s32.totalorder %s24, 1
      %p278 = scmp.ne.s32.totalorder %s273, %s275
      %p279 = scmp.eq.s32.totalorder %s24, 0
      %p280 = por %p278, %p279
      %p281 = scmp.ne.s32.totalorder %s273, %s275
      %p282 = scmp.eq.s32.totalorder %s29, 1
      %p283 = por %p281, %p282
      %p284 = scmp.ne.s32.totalorder %s275, %s276
      %p285 = scmp.eq.s32.totalorder %s29, 0
      %p286 = por %p284, %p285
      %p287 = scmp.ne.s32.totalorder %s275, %s276
      %p288 = scmp.eq.s32.totalorder %s30, 1
      %p289 = por %p287, %p288
      %p291 = scmp.ne.s32.totalorder %s276, %s290
      %p292 = scmp.eq.s32.totalorder %s30, 0
      %p293 = por %p291, %p292
      %s295 = sadd.s32 %s294, 1
      %p298 = scmp.eq.s32.totalorder %s24, 1
      %p299 = scmp.ne.s32.totalorder %s294, %s296
      %p300 = scmp.eq.s32.totalorder %s24, 0
      %p301 = por %p299, %p300
      %p302 = scmp.ne.s32.totalorder %s294, %s296
      %p303 = scmp.eq.s32.totalorder %s29, 1
      %p304 = por %p302, %p303
      %p305 = scmp.ne.s32.totalorder %s296, %s297
      %p306 = scmp.eq.s32.totalorder %s29, 0
      %p307 = por %p305, %p306
      %p308 = scmp.ne.s32.totalorder %s296, %s297
      %p309 = scmp.eq.s32.totalorder %s30, 1
      %p310 = por %p308, %p309
      %p312 = scmp.ne.s32.totalorder %s297, %s311
      %p313 = scmp.eq.s32.totalorder %s30, 0
      %p314 = por %p312, %p313
      %s316 = sadd.s32 %s315, 1
      %p319 = scmp.eq.s32.totalorder %s24, 1
      %p320 = scmp.ne.s32.totalorder %s315, %s317
      %p321 = scmp.eq.s32.totalorder %s24, 0
      %p322 = por %p320, %p321
      %p323 = scmp.ne.s32.totalorder %s315, %s317
      %p324 = scmp.eq.s32.totalorder %s29, 1
      %p325 = por %p323, %p324
      %p326 = scmp.ne.s32.totalorder %s317, %s318
      %p327 = scmp.eq.s32.totalorder %s29, 0
      %p328 = por %p326, %p327
      %p329 = scmp.ne.s32.totalorder %s317, %s318
      %p330 = scmp.eq.s32.totalorder %s30, 1
      %p331 = por %p329, %p330
      %p333 = scmp.ne.s32.totalorder %s318, %s332
      %p334 = scmp.eq.s32.totalorder %s30, 0
      %p335 = por %p333, %p334
      %s336 = ssub.s32 %s24, %s31
      %p337 = scmp.eq.s32.totalorder %s336, 0
      %s339 = sadd.s32 %s338, 1
      %s340 = scalar_select %p337, %s338, %s339
      %p343 = pneg %p337
      %p344 = scmp.eq.s32.totalorder %s24, 1
      %p345 = por %p343, %p344
      %p346 = scmp.ne.s32.totalorder %s338, %s341
      %p347 = scmp.eq.s32.totalorder %s24, 0
      %p348 = por %p346, %p347
      %p349 = scmp.ne.s32.totalorder %s338, %s341
      %p350 = scmp.eq.s32.totalorder %s29, 1
      %p351 = por %p349, %p350
      %p352 = scmp.ne.s32.totalorder %s341, %s342
      %p353 = scmp.eq.s32.totalorder %s29, 0
      %p354 = por %p352, %p353
      %p355 = scmp.ne.s32.totalorder %s341, %s342
      %p356 = scmp.eq.s32.totalorder %s30, 1
      %p357 = por %p355, %p356
      %p359 = scmp.ne.s32.totalorder %s342, %s358
      %p360 = scmp.eq.s32.totalorder %s30, 0
      %p361 = por %p359, %p360
      %p362 = scmp.le.s32.totalorder 1, %s24
      %p363 = scmp.lt.s32.totalorder %s24, 3
      %p364 = pnand %p362, %p363
      %p365 = pneg %p364
      // Predicated region
      $region9: #{probabilistic_segmentation_unet_forward.1} parent=5 // pred_check
        _
      $region10: #{probabilistic_segmentation_unet_forward.1} parent=5 // pred_check_branch
        %367 = sbr.rel (%p364) target = $region12
      $region11: #{probabilistic_segmentation_unet_forward.1} parent=5 // pred_region
        %s368 = ssub.s32 %s24, 1
        // Predicated region
        $region13: #{probabilistic_segmentation_unet_forward.1} parent=11 // pred_check
          %p369 = pneg %p97
        $region14: #{probabilistic_segmentation_unet_forward.1} parent=11 // pred_check_branch
          %371 = sbr.rel (%p369) target = $region16
        $region15: #{probabilistic_segmentation_unet_forward.1} parent=11 // pred_region
          _
        $region16: #{probabilistic_segmentation_unet_forward.1} parent=11 // pred_fallthru
          _
        // Predicated region
        $region17: #{probabilistic_segmentation_unet_forward.1} parent=11 // pred_check
          %p372 = pneg %p118
        $region18: #{probabilistic_segmentation_unet_forward.1} parent=11 // pred_check_branch
          %374 = sbr.rel (%p372) target = $region20
        $region19: #{probabilistic_segmentation_unet_forward.1} parent=11 // pred_region
          _
        $region20: #{probabilistic_segmentation_unet_forward.1} parent=11 // pred_fallthru
          _
        // Predicated region
        $region21: #{probabilistic_segmentation_unet_forward.1} parent=11 // pred_check
          %p375 = pneg %p139
        $region22: #{probabilistic_segmentation_unet_forward.1} parent=11 // pred_check_branch
          %377 = sbr.rel (%p375) target = $region24
        $region23: #{probabilistic_segmentation_unet_forward.1} parent=11 // pred_region
          _
        $region24: #{probabilistic_segmentation_unet_forward.1} parent=11 // pred_fallthru
          _
        // Predicated region
        $region25: #{probabilistic_segmentation_unet_forward.1} parent=11 // pred_check
          %p378 = pneg %p160
        $region26: #{probabilistic_segmentation_unet_forward.1} parent=11 // pred_check_branch
          %380 = sbr.rel (%p378) target = $region28
        $region27: #{probabilistic_segmentation_unet_forward.1} parent=11 // pred_region
          _
        $region28: #{probabilistic_segmentation_unet_forward.1} parent=11 // pred_fallthru
          _
        // Predicated region
        $region29: #{probabilistic_segmentation_unet_forward.1} parent=11 // pred_check
          %p381 = pneg %p181
        $region30: #{probabilistic_segmentation_unet_forward.1} parent=11 // pred_check_branch
          %383 = sbr.rel (%p381) target = $region32
        $region31: #{probabilistic_segmentation_unet_forward.1} parent=11 // pred_region
          _
        $region32: #{probabilistic_segmentation_unet_forward.1} parent=11 // pred_fallthru
          _
        // Predicated region
        $region33: #{probabilistic_segmentation_unet_forward.1} parent=11 // pred_check
          %p384 = pneg %p202
        $region34: #{probabilistic_segmentation_unet_forward.1} parent=11 // pred_check_branch
          %386 = sbr.rel (%p384) target = $region36
        $region35: #{probabilistic_segmentation_unet_forward.1} parent=11 // pred_region
          _
        $region36: #{probabilistic_segmentation_unet_forward.1} parent=11 // pred_fallthru
          _
        // Predicated region
        $region37: #{probabilistic_segmentation_unet_forward.1} parent=11 // pred_check
          %p387 = pneg %p223
        $region38: #{probabilistic_segmentation_unet_forward.1} parent=11 // pred_check_branch
          %389 = sbr.rel (%p387) target = $region40
        $region39: #{probabilistic_segmentation_unet_forward.1} parent=11 // pred_region
          _
        $region40: #{probabilistic_segmentation_unet_forward.1} parent=11 // pred_fallthru
          _
        // Predicated region
        $region41: #{probabilistic_segmentation_unet_forward.1} parent=11 // pred_check
          %p390 = pneg %p244
        $region42: #{probabilistic_segmentation_unet_forward.1} parent=11 // pred_check_branch
          %392 = sbr.rel (%p390) target = $region44
        $region43: #{probabilistic_segmentation_unet_forward.1} parent=11 // pred_region
          _
        $region44: #{probabilistic_segmentation_unet_forward.1} parent=11 // pred_fallthru
          _
        // Predicated region
        $region45: #{probabilistic_segmentation_unet_forward.1} parent=11 // pred_check
          %p393 = pneg %p265
        $region46: #{probabilistic_segmentation_unet_forward.1} parent=11 // pred_check_branch
          %395 = sbr.rel (%p393) target = $region48
        $region47: #{probabilistic_segmentation_unet_forward.1} parent=11 // pred_region
          _
        $region48: #{probabilistic_segmentation_unet_forward.1} parent=11 // pred_fallthru
          _
        // Predicated region
        $region49: #{probabilistic_segmentation_unet_forward.1} parent=11 // pred_check
          %p396 = pneg %p286
        $region50: #{probabilistic_segmentation_unet_forward.1} parent=11 // pred_check_branch
          %398 = sbr.rel (%p396) target = $region52
        $region51: #{probabilistic_segmentation_unet_forward.1} parent=11 // pred_region
          _
        $region52: #{probabilistic_segmentation_unet_forward.1} parent=11 // pred_fallthru
          _
        // Predicated region
        $region53: #{probabilistic_segmentation_unet_forward.1} parent=11 // pred_check
          %p399 = pneg %p307
        $region54: #{probabilistic_segmentation_unet_forward.1} parent=11 // pred_check_branch
          %401 = sbr.rel (%p399) target = $region56
        $region55: #{probabilistic_segmentation_unet_forward.1} parent=11 // pred_region
          _
        $region56: #{probabilistic_segmentation_unet_forward.1} parent=11 // pred_fallthru
          _
        // Predicated region
        $region57: #{probabilistic_segmentation_unet_forward.1} parent=11 // pred_check
          %p402 = pneg %p328
        $region58: #{probabilistic_segmentation_unet_forward.1} parent=11 // pred_check_branch
          %404 = sbr.rel (%p402) target = $region60
        $region59: #{probabilistic_segmentation_unet_forward.1} parent=11 // pred_region
          _
        $region60: #{probabilistic_segmentation_unet_forward.1} parent=11 // pred_fallthru
          _
      $region12: #{probabilistic_segmentation_unet_forward.1} parent=5 // pred_fallthru
        _
      %p405 = scmp.lt.s32.totalorder %s24, 2
      // Predicated region
      $region61: #{probabilistic_segmentation_unet_forward.1} parent=5 // pred_check
        %p406 = pneg %p405
      $region62: #{probabilistic_segmentation_unet_forward.1} parent=5 // pred_check_branch
        %408 = sbr.rel (%p406) target = $region64
      $region63: #{probabilistic_segmentation_unet_forward.1} parent=5 // pred_region
        // Predicated region
        $region65: #{probabilistic_segmentation_unet_forward.1} parent=63 // pred_check
          %p409 = pneg %p44
        $region66: #{probabilistic_segmentation_unet_forward.1} parent=63 // pred_check_branch
          %411 = sbr.rel (%p409) target = $region68
        $region67: #{probabilistic_segmentation_unet_forward.1} parent=63 // pred_region
          %p412 = scmp.lt.s32.totalorder %s24, 1
          %s413 = scalar_select %p412, %s24, 1
          %s414 = smul.addr %s413, 32
          %s415 = smul.addr %s414, 8
          %s416 = scalar_lea.vmem %s0, %s415
        $region68: #{probabilistic_segmentation_unet_forward.1} parent=63 // pred_fallthru
          _
        // Predicated region
        $region69: #{probabilistic_segmentation_unet_forward.1} parent=63 // pred_check
          %p417 = pneg %p70
        $region70: #{probabilistic_segmentation_unet_forward.1} parent=63 // pred_check_branch
          %419 = sbr.rel (%p417) target = $region72
        $region71: #{probabilistic_segmentation_unet_forward.1} parent=63 // pred_region
          %p420 = scmp.lt.s32.totalorder %s24, 1
          %s421 = scalar_select %p420, %s24, 1
          %s422 = smul.addr %s421, 3
          %s423 = smul.addr %s422, 8
          %s424 = scalar_lea.vmem %s1, %s423
        $region72: #{probabilistic_segmentation_unet_forward.1} parent=63 // pred_fallthru
          _
      $region64: #{probabilistic_segmentation_unet_forward.1} parent=5 // pred_fallthru
        _
      %p425 = scmp.le.s32.totalorder 1, %s24
      %p426 = scmp.lt.s32.totalorder %s24, 3
      %p427 = pnand %p425, %p426
      %p428 = pneg %p427
      // Predicated region
      $region73: #{probabilistic_segmentation_unet_forward.1} parent=5 // pred_check
        _
      $region74: #{probabilistic_segmentation_unet_forward.1} parent=5 // pred_check_branch
        %430 = sbr.rel (%p427) target = $region76
      $region75: #{probabilistic_segmentation_unet_forward.1} parent=5 // pred_region
        %s431 = ssub.s32 %s24, 1
        %p432 = scmp.lt.s32.totalorder %s29, 1
        %s433 = scalar_select %p432, %s29, 1
        %s434 = smul.addr %s433, 32
        %s435 = smul.addr %s434, 8
        %s436 = scalar_lea.vmem %s0, %s435
        %p437 = pneg %p50
        %p438 = pneg %p47
        %p439 = scmp.lt.s32.totalorder %s29, 1
        %s440 = scalar_select %p439, %s29, 1
        %s441 = smul.addr %s440, 3
        %s442 = smul.addr %s441, 8
        %s443 = scalar_lea.vmem %s1, %s442
        %p444 = pneg %p76
        %p445 = pneg %p73
        %p446 = pneg %p97
        %p447 = pneg %p94
        %p448 = pneg %p118
        %p449 = pneg %p115
        %p450 = pneg %p139
        %p451 = pneg %p136
        %p452 = pneg %p160
        %p453 = pneg %p157
        %p454 = pneg %p181
        %p455 = pneg %p178
        %p456 = pneg %p202
        %p457 = pneg %p199
        %p458 = pneg %p223
        %p459 = pneg %p220
        %p460 = pneg %p244
        %p461 = pneg %p241
        %p462 = pneg %p265
        %p463 = pneg %p262
        %p464 = pneg %p286
        %p465 = pneg %p283
        %p466 = pneg %p307
        %p467 = pneg %p304
        %p468 = pneg %p328
        %p469 = pneg %p325
        %p470 = pneg %p354
        %p471 = pneg %p351
        %s472 = sand.u32 %s341, 1
        %s473 = scalar_lea.sflag [#allocation5], %s472
        %s474 = sand.u32 %s341, 1
        %s475 = smul.addr %s474, 8
        %s476 = scalar_lea.vmem [#allocation4], %s475
        %p477 = scmp.lt.s32.totalorder %s29, 1
        %s478 = scalar_select %p477, %s29, 1
        %s479 = smul.addr %s478, 32
        %s480 = smul.addr %s479, 8
        %s481 = scalar_lea.vmem %s0, %s480
        %p482 = scmp.lt.s32.totalorder %s29, 1
        %s483 = scalar_select %p482, %s29, 1
        %s484 = smul.addr %s483, 3
        %s485 = smul.addr %s484, 8
        %s486 = scalar_lea.vmem %s1, %s485
        %v487 = vld [vmem:[%s481] sm:$0xff]
        %v488 = vld [vmem:[%s481 + $0x8] sm:$0xff]
        %v489 = vld [vmem:[%s481 + $0x10] sm:$0xff]
        %v490 = vld [vmem:[%s481 + $0x18] sm:$0xff]
        %v491 = vld [vmem:[%s481 + $0x20] sm:$0xff]
        %v492 = vld [vmem:[%s481 + $0x28] sm:$0xff]
        %v493 = vld [vmem:[%s481 + $0x30] sm:$0xff]
        %v494 = vld [vmem:[%s481 + $0x38] sm:$0xff]
        %v495 = vld [vmem:[%s481 + $0x40] sm:$0xff]
        %v496 = vld [vmem:[%s481 + $0x48] sm:$0xff]
        %v497 = vld [vmem:[%s481 + $0x50] sm:$0xff]
        %v498 = vld [vmem:[%s481 + $0x58] sm:$0xff]
        %v499 = vld [vmem:[%s481 + $0x60] sm:$0xff]
        %v500 = vld [vmem:[%s481 + $0x68] sm:$0xff]
        %v501 = vld [vmem:[%s481 + $0x70] sm:$0xff]
        %v502 = vld [vmem:[%s481 + $0x78] sm:$0xff]
        %v503 = vld [vmem:[%s481 + $0x80] sm:$0xff]
        %v504 = vld [vmem:[%s481 + $0x88] sm:$0xff]
        %v505 = vld [vmem:[%s481 + $0x90] sm:$0xff]
        %v506 = vld [vmem:[%s481 + $0x98] sm:$0xff]
        %v507 = vld [vmem:[%s481 + $0xa0] sm:$0xff]
        %v508 = vld [vmem:[%s481 + $0xa8] sm:$0xff]
        %v509 = vld [vmem:[%s481 + $0xb0] sm:$0xff]
        %v510 = vld [vmem:[%s481 + $0xb8] sm:$0xff]
        %v511 = vld [vmem:[%s481 + $0xc0] sm:$0xff]
        %v512 = vld [vmem:[%s481 + $0xc8] sm:$0xff]
        %v513 = vld [vmem:[%s481 + $0xd0] sm:$0xff]
        %v514 = vld [vmem:[%s481 + $0xd8] sm:$0xff]
        %v515 = vld [vmem:[%s481 + $0xe0] sm:$0xff]
        %v516 = vld [vmem:[%s481 + $0xe8] sm:$0xff]
        %v517 = vld [vmem:[%s481 + $0xf0] sm:$0xff]
        %v518 = vld [vmem:[%s481 + $0xf8] sm:$0xff]
        %v519 = vld [vmem:[%s2] sm:$0x1]
        %v521 = vperm.slane %v519, 0
        %v523 = vmul.f32 %v487, %v521
        %v524 = vmul.f32 %v488, %v521
        %v525 = vmul.f32 %v489, %v521
        %v526 = vmul.f32 %v490, %v521
        %v527 = vmul.f32 %v491, %v521
        %v528 = vmul.f32 %v492, %v521
        %v529 = vmul.f32 %v493, %v521
        %v530 = vmul.f32 %v494, %v521
        %v531 = vmul.f32 %v495, %v521
        %v532 = vmul.f32 %v496, %v521
        %v533 = vmul.f32 %v497, %v521
        %v534 = vmul.f32 %v498, %v521
        %v535 = vmul.f32 %v499, %v521
        %v536 = vmul.f32 %v500, %v521
        %v537 = vmul.f32 %v501, %v521
        %v538 = vmul.f32 %v502, %v521
        %v539 = vmul.f32 %v503, %v521
        %v540 = vmul.f32 %v504, %v521
        %v541 = vmul.f32 %v505, %v521
        %v542 = vmul.f32 %v506, %v521
        %v543 = vmul.f32 %v507, %v521
        %v544 = vmul.f32 %v508, %v521
        %v545 = vmul.f32 %v509, %v521
        %v546 = vmul.f32 %v510, %v521
        %v547 = vmul.f32 %v511, %v521
        %v548 = vmul.f32 %v512, %v521
        %v549 = vmul.f32 %v513, %v521
        %v550 = vmul.f32 %v514, %v521
        %v551 = vmul.f32 %v515, %v521
        %v552 = vmul.f32 %v516, %v521
        %v553 = vmul.f32 %v517, %v521
        %v554 = vmul.f32 %v518, %v521
        %v555 = vld [vmem:[%s3] sm:$0x1]
        %v557 = vperm.slane %v555, 0
        %v559 = vadd.f32 %v523, %v557
        %v560 = vadd.f32 %v524, %v557
        %v561 = vadd.f32 %v525, %v557
        %v562 = vadd.f32 %v526, %v557
        %v563 = vadd.f32 %v527, %v557
        %v564 = vadd.f32 %v528, %v557
        %v565 = vadd.f32 %v529, %v557
        %v566 = vadd.f32 %v530, %v557
        %v567 = vadd.f32 %v531, %v557
        %v568 = vadd.f32 %v532, %v557
        %v569 = vadd.f32 %v533, %v557
        %v570 = vadd.f32 %v534, %v557
        %v571 = vadd.f32 %v535, %v557
        %v572 = vadd.f32 %v536, %v557
        %v573 = vadd.f32 %v537, %v557
        %v574 = vadd.f32 %v538, %v557
        %v575 = vadd.f32 %v539, %v557
        %v576 = vadd.f32 %v540, %v557
        %v577 = vadd.f32 %v541, %v557
        %v578 = vadd.f32 %v542, %v557
        %v579 = vadd.f32 %v543, %v557
        %v580 = vadd.f32 %v544, %v557
        %v581 = vadd.f32 %v545, %v557
        %v582 = vadd.f32 %v546, %v557
        %v583 = vadd.f32 %v547, %v557
        %v584 = vadd.f32 %v548, %v557
        %v585 = vadd.f32 %v549, %v557
        %v586 = vadd.f32 %v550, %v557
        %v587 = vadd.f32 %v551, %v557
        %v588 = vadd.f32 %v552, %v557
        %v589 = vadd.f32 %v553, %v557
        %v590 = vadd.f32 %v554, %v557
        %vm591 = vcmask 31744
        %592 = vst.msk [vmem:[#allocation2] sm:$0xff] %vm591, 0.0
        %593 = vst.msk [vmem:[#allocation2 + $0x8] sm:$0xff] %vm591, 0.0
        %vm594 = vcmask 25600
        %595 = vst.msk [vmem:[#allocation2 + $0x10] sm:$0x3] %vm594, 0.0
        %596 = vst.msk [vmem:[#allocation2 + $0x18] sm:$0xff] %vm591, 0.0
        %597 = vst.msk [vmem:[#allocation2 + $0x20] sm:$0xff] %vm591, 0.0
        %598 = vst.msk [vmem:[#allocation2 + $0x28] sm:$0x3] %vm594, 0.0
        %599 = vst.msk [vmem:[#allocation2 + $0x30] sm:$0xff] %vm591, 0.0
        %600 = vst.msk [vmem:[#allocation2 + $0x38] sm:$0xff] %vm591, 0.0
        %601 = vst.msk [vmem:[#allocation2 + $0x40] sm:$0x3] %vm594, 0.0
        %602 = vst.msk [vmem:[#allocation2 + $0x48] sm:$0xff] %vm591, 0.0
        %603 = vst.msk [vmem:[#allocation2 + $0x50] sm:$0xff] %vm591, 0.0
        %604 = vst.msk [vmem:[#allocation2 + $0x58] sm:$0x3] %vm594, 0.0
        %605 = vst.msk [vmem:[#allocation2 + $0x60] sm:$0xff] %vm591, 0.0
        %606 = vst.msk [vmem:[#allocation2 + $0x68] sm:$0xff] %vm591, 0.0
        %607 = vst.msk [vmem:[#allocation2 + $0x70] sm:$0x3] %vm594, 0.0
        %608 = vst.msk [vmem:[#allocation2 + $0x78] sm:$0xff] %vm591, 0.0
        %609 = vst.msk [vmem:[#allocation2 + $0x80] sm:$0xff] %vm591, 0.0
        %610 = vst.msk [vmem:[#allocation2 + $0x88] sm:$0x3] %vm594, 0.0
        %611 = vst.msk [vmem:[#allocation2 + $0x90] sm:$0xff] %vm591, 0.0
        %612 = vst.msk [vmem:[#allocation2 + $0x98] sm:$0xff] %vm591, 0.0
        %613 = vst.msk [vmem:[#allocation2 + $0xa0] sm:$0x3] %vm594, 0.0
        %614 = vst.msk [vmem:[#allocation2 + $0xa8] sm:$0xff] %vm591, 0.0
        %615 = vst.msk [vmem:[#allocation2 + $0xb0] sm:$0xff] %vm591, 0.0
        %616 = vst.msk [vmem:[#allocation2 + $0xb8] sm:$0x3] %vm594, 0.0
        %617 = vst.msk [vmem:[#allocation2 + $0xc0] sm:$0xff] %vm591, 0.0
        %618 = vst.msk [vmem:[#allocation2 + $0xc8] sm:$0xff] %vm591, 0.0
        %619 = vst.msk [vmem:[#allocation2 + $0xd0] sm:$0x3] %vm594, 0.0
        %620 = vst.msk [vmem:[#allocation2 + $0xd8] sm:$0xff] %vm591, 0.0
        %621 = vst.msk [vmem:[#allocation2 + $0xe0] sm:$0xff] %vm591, 0.0
        %622 = vst.msk [vmem:[#allocation2 + $0xe8] sm:$0x3] %vm594, 0.0
        %623 = vst.msk [vmem:[#allocation2 + $0xf0] sm:$0xff] %vm591, 0.0
        %624 = vst.msk [vmem:[#allocation2 + $0xf8] sm:$0xff] %vm591, 0.0
        %625 = vst.msk [vmem:[#allocation2 + $0x100] sm:$0x3] %vm594, 0.0
        %626 = vst.msk [vmem:[#allocation2 + $0x108] sm:$0xff] %vm591, 0.0
        %627 = vst.msk [vmem:[#allocation2 + $0x110] sm:$0xff] %vm591, 0.0
        %628 = vst.msk [vmem:[#allocation2 + $0x118] sm:$0x3] %vm594, 0.0
        %629 = vst.msk [vmem:[#allocation2 + $0x120] sm:$0xff] %vm591, 0.0
        %630 = vst.msk [vmem:[#allocation2 + $0x128] sm:$0xff] %vm591, 0.0
        %631 = vst.msk [vmem:[#allocation2 + $0x130] sm:$0x3] %vm594, 0.0
        %632 = vst.msk [vmem:[#allocation2 + $0x138] sm:$0xff] %vm591, 0.0
        %633 = vst.msk [vmem:[#allocation2 + $0x140] sm:$0xff] %vm591, 0.0
        %634 = vst.msk [vmem:[#allocation2 + $0x148] sm:$0x3] %vm594, 0.0
        %635 = vst.msk [vmem:[#allocation2 + $0x150] sm:$0xff] %vm591, 0.0
        %636 = vst.msk [vmem:[#allocation2 + $0x158] sm:$0xff] %vm591, 0.0
        %637 = vst.msk [vmem:[#allocation2 + $0x160] sm:$0x3] %vm594, 0.0
        %638 = vst.msk [vmem:[#allocation2 + $0x168] sm:$0xff] %vm591, 0.0
        %639 = vst.msk [vmem:[#allocation2 + $0x170] sm:$0xff] %vm591, 0.0
        %640 = vst.msk [vmem:[#allocation2 + $0x178] sm:$0x3] %vm594, 0.0
        %641 = vst.msk [vmem:[#allocation2 + $0x180] sm:$0xff] %vm591, 0.0
        %642 = vst.msk [vmem:[#allocation2 + $0x188] sm:$0xff] %vm591, 0.0
        %643 = vst.msk [vmem:[#allocation2 + $0x190] sm:$0x3] %vm594, 0.0
        %644 = vst.msk [vmem:[#allocation2 + $0x198] sm:$0xff] %vm591, 0.0
        %645 = vst.msk [vmem:[#allocation2 + $0x1a0] sm:$0xff] %vm591, 0.0
        %646 = vst.msk [vmem:[#allocation2 + $0x1a8] sm:$0x3] %vm594, 0.0
        %s647 = scalar_lea.vmem [#allocation2], 24
        %648 = vst.msk [vmem:[%s647 + $0x1] sm:$0xff] %vm591, %v559
        %649 = vst.msk [vmem:[%s647 + $0x9] sm:$0xff] %vm591, %v560
        %650 = vst.msk [vmem:[%s647 + $0x19] sm:$0xff] %vm591, %v561
        %651 = vst.msk [vmem:[%s647 + $0x21] sm:$0xff] %vm591, %v562
        %652 = vst.msk [vmem:[%s647 + $0x31] sm:$0xff] %vm591, %v563
        %653 = vst.msk [vmem:[%s647 + $0x39] sm:$0xff] %vm591, %v564
        %654 = vst.msk [vmem:[%s647 + $0x49] sm:$0xff] %vm591, %v565
        %655 = vst.msk [vmem:[%s647 + $0x51] sm:$0xff] %vm591, %v566
        %656 = vst.msk [vmem:[%s647 + $0x61] sm:$0xff] %vm591, %v567
        %657 = vst.msk [vmem:[%s647 + $0x69] sm:$0xff] %vm591, %v568
        %658 = vst.msk [vmem:[%s647 + $0x79] sm:$0xff] %vm591, %v569
        %659 = vst.msk [vmem:[%s647 + $0x81] sm:$0xff] %vm591, %v570
        %660 = vst.msk [vmem:[%s647 + $0x91] sm:$0xff] %vm591, %v571
        %661 = vst.msk [vmem:[%s647 + $0x99] sm:$0xff] %vm591, %v572
        %662 = vst.msk [vmem:[%s647 + $0xa9] sm:$0xff] %vm591, %v573
        %663 = vst.msk [vmem:[%s647 + $0xb1] sm:$0xff] %vm591, %v574
        %664 = vst.msk [vmem:[%s647 + $0xc1] sm:$0xff] %vm591, %v575
        %665 = vst.msk [vmem:[%s647 + $0xc9] sm:$0xff] %vm591, %v576
        %666 = vst.msk [vmem:[%s647 + $0xd9] sm:$0xff] %vm591, %v577
        %667 = vst.msk [vmem:[%s647 + $0xe1] sm:$0xff] %vm591, %v578
        %668 = vst.msk [vmem:[%s647 + $0xf1] sm:$0xff] %vm591, %v579
        %669 = vst.msk [vmem:[%s647 + $0xf9] sm:$0xff] %vm591, %v580
        %670 = vst.msk [vmem:[%s647 + $0x109] sm:$0xff] %vm591, %v581
        %671 = vst.msk [vmem:[%s647 + $0x111] sm:$0xff] %vm591, %v582
        %672 = vst.msk [vmem:[%s647 + $0x121] sm:$0xff] %vm591, %v583
        %673 = vst.msk [vmem:[%s647 + $0x129] sm:$0xff] %vm591, %v584
        %674 = vst.msk [vmem:[%s647 + $0x139] sm:$0xff] %vm591, %v585
        %675 = vst.msk [vmem:[%s647 + $0x141] sm:$0xff] %vm591, %v586
        %676 = vst.msk [vmem:[%s647 + $0x151] sm:$0xff] %vm591, %v587
        %677 = vst.msk [vmem:[%s647 + $0x159] sm:$0xff] %vm591, %v588
        %678 = vst.msk [vmem:[%s647 + $0x169] sm:$0xff] %vm591, %v589
        %679 = vst.msk [vmem:[%s647 + $0x171] sm:$0xff] %vm591, %v590
        %v680 = vld [vmem:[#allocation2] sm:$0xff]
        %v681 = vld [vmem:[#allocation2 + $0x8] sm:$0xff]
        %v682 = vld [vmem:[#allocation2 + $0x10] sm:$0x3]
        %v683 = vld [vmem:[#allocation2 + $0x18] sm:$0xff]
        %v684 = vld [vmem:[#allocation2 + $0x20] sm:$0xff]
        %v685 = vld [vmem:[#allocation2 + $0x28] sm:$0x3]
        %v686 = vld [vmem:[#allocation2 + $0x30] sm:$0xff]
        %v687 = vld [vmem:[#allocation2 + $0x38] sm:$0xff]
        %v688 = vld [vmem:[#allocation2 + $0x40] sm:$0x3]
        %v689 = vld [vmem:[#allocation2 + $0x48] sm:$0xff]
        %v690 = vld [vmem:[#allocation2 + $0x50] sm:$0xff]
        %v691 = vld [vmem:[#allocation2 + $0x58] sm:$0x3]
        %v692 = vld [vmem:[#allocation2 + $0x60] sm:$0xff]
        %v693 = vld [vmem:[#allocation2 + $0x68] sm:$0xff]
        %v694 = vld [vmem:[#allocation2 + $0x70] sm:$0x3]
        %v695 = vld [vmem:[#allocation2 + $0x78] sm:$0xff]
        %v696 = vld [vmem:[#allocation2 + $0x80] sm:$0xff]
        %v697 = vld [vmem:[#allocation2 + $0x88] sm:$0x3]
        %v698 = vld [vmem:[#allocation2 + $0x90] sm:$0xff]
        %v699 = vld [vmem:[#allocation2 + $0x98] sm:$0xff]
        %v700 = vld [vmem:[#allocation2 + $0xa0] sm:$0x3]
        %v701 = vld [vmem:[#allocation2 + $0xa8] sm:$0xff]
        %v702 = vld [vmem:[#allocation2 + $0xb0] sm:$0xff]
        %v703 = vld [vmem:[#allocation2 + $0xb8] sm:$0x3]
        %v704 = vld [vmem:[#allocation2 + $0xc0] sm:$0xff]
        %v705 = vld [vmem:[#allocation2 + $0xc8] sm:$0xff]
        %v706 = vld [vmem:[#allocation2 + $0xd0] sm:$0x3]
        %v707 = vld [vmem:[#allocation2 + $0xd8] sm:$0xff]
        %v708 = vld [vmem:[#allocation2 + $0xe0] sm:$0xff]
        %v709 = vld [vmem:[#allocation2 + $0xe8] sm:$0x3]
        %v710 = vld [vmem:[#allocation2 + $0xf0] sm:$0xff]
        %v711 = vld [vmem:[#allocation2 + $0xf8] sm:$0xff]
        %v712 = vld [vmem:[#allocation2 + $0x100] sm:$0x3]
        %v713 = vld [vmem:[#allocation2 + $0x108] sm:$0xff]
        %v714 = vld [vmem:[#allocation2 + $0x110] sm:$0xff]
        %v715 = vld [vmem:[#allocation2 + $0x118] sm:$0x3]
        %v716 = vld [vmem:[#allocation2 + $0x120] sm:$0xff]
        %v717 = vld [vmem:[#allocation2 + $0x128] sm:$0xff]
        %v718 = vld [vmem:[#allocation2 + $0x130] sm:$0x3]
        %v719 = vld [vmem:[#allocation2 + $0x138] sm:$0xff]
        %v720 = vld [vmem:[#allocation2 + $0x140] sm:$0xff]
        %v721 = vld [vmem:[#allocation2 + $0x148] sm:$0x3]
        %v722 = vld [vmem:[#allocation2 + $0x150] sm:$0xff]
        %v723 = vld [vmem:[#allocation2 + $0x158] sm:$0xff]
        %v724 = vld [vmem:[#allocation2 + $0x160] sm:$0x3]
        %v725 = vld [vmem:[#allocation2 + $0x168] sm:$0xff]
        %v726 = vld [vmem:[#allocation2 + $0x170] sm:$0xff]
        %v727 = vld [vmem:[#allocation2 + $0x178] sm:$0x3]
        %v728 = vld [vmem:[#allocation2 + $0x180] sm:$0xff]
        %v729 = vld [vmem:[#allocation2 + $0x188] sm:$0xff]
        %v730 = vld [vmem:[#allocation2 + $0x190] sm:$0x3]
        %v731 = vld [vmem:[#allocation2 + $0x198] sm:$0xff]
        %v732 = vld [vmem:[#allocation2 + $0x1a0] sm:$0xff]
        %v733 = vld [vmem:[#allocation2 + $0x1a8] sm:$0x3]
        %vm782 = vcmask 1046528
        %v783 = vrot.slane %v680, 1
        %v784 = vrot.slane %v681, 1
        %v785 = vsel %vm782, %v783, %v784
        %v786 = vrot.slane %v682, 1
        %v787 = vsel %vm782, %v784, %v786
        %v788 = vrot.slane %v683, 1
        %v789 = vrot.slane %v684, 1
        %v790 = vsel %vm782, %v788, %v789
        %v791 = vrot.slane %v685, 1
        %v792 = vsel %vm782, %v789, %v791
        %v793 = vrot.slane %v686, 1
        %v794 = vrot.slane %v687, 1
        %v795 = vsel %vm782, %v793, %v794
        %v796 = vrot.slane %v688, 1
        %v797 = vsel %vm782, %v794, %v796
        %v798 = vrot.slane %v689, 1
        %v799 = vrot.slane %v690, 1
        %v800 = vsel %vm782, %v798, %v799
        %v801 = vrot.slane %v691, 1
        %v802 = vsel %vm782, %v799, %v801
        %v803 = vrot.slane %v692, 1
        %v804 = vrot.slane %v693, 1
        %v805 = vsel %vm782, %v803, %v804
        %v806 = vrot.slane %v694, 1
        %v807 = vsel %vm782, %v804, %v806
        %v808 = vrot.slane %v695, 1
        %v809 = vrot.slane %v696, 1
        %v810 = vsel %vm782, %v808, %v809
        %v811 = vrot.slane %v697, 1
        %v812 = vsel %vm782, %v809, %v811
        %v813 = vrot.slane %v698, 1
        %v814 = vrot.slane %v699, 1
        %v815 = vsel %vm782, %v813, %v814
        %v816 = vrot.slane %v700, 1
        %v817 = vsel %vm782, %v814, %v816
        %v818 = vrot.slane %v701, 1
        %v819 = vrot.slane %v702, 1
        %v820 = vsel %vm782, %v818, %v819
        %v821 = vrot.slane %v703, 1
        %v822 = vsel %vm782, %v819, %v821
        %v823 = vrot.slane %v704, 1
        %v824 = vrot.slane %v705, 1
        %v825 = vsel %vm782, %v823, %v824
        %v826 = vrot.slane %v706, 1
        %v827 = vsel %vm782, %v824, %v826
        %v828 = vrot.slane %v707, 1
        %v829 = vrot.slane %v708, 1
        %v830 = vsel %vm782, %v828, %v829
        %v831 = vrot.slane %v709, 1
        %v832 = vsel %vm782, %v829, %v831
        %v833 = vrot.slane %v710, 1
        %v834 = vrot.slane %v711, 1
        %v835 = vsel %vm782, %v833, %v834
        %v836 = vrot.slane %v712, 1
        %v837 = vsel %vm782, %v834, %v836
        %v838 = vrot.slane %v713, 1
        %v839 = vrot.slane %v714, 1
        %v840 = vsel %vm782, %v838, %v839
        %v841 = vrot.slane %v715, 1
        %v842 = vsel %vm782, %v839, %v841
        %v843 = vrot.slane %v716, 1
        %v844 = vrot.slane %v717, 1
        %v845 = vsel %vm782, %v843, %v844
        %v846 = vrot.slane %v718, 1
        %v847 = vsel %vm782, %v844, %v846
        %v848 = vrot.slane %v719, 1
        %v849 = vrot.slane %v720, 1
        %v850 = vsel %vm782, %v848, %v849
        %v851 = vrot.slane %v721, 1
        %v852 = vsel %vm782, %v849, %v851
        %v853 = vrot.slane %v722, 1
        %v854 = vrot.slane %v723, 1
        %v855 = vsel %vm782, %v853, %v854
        %v856 = vrot.slane %v724, 1
        %v857 = vsel %vm782, %v854, %v856
        %v858 = vrot.slane %v725, 1
        %v859 = vrot.slane %v726, 1
        %v860 = vsel %vm782, %v858, %v859
        %v861 = vrot.slane %v727, 1
        %v862 = vsel %vm782, %v859, %v861
        %863 = vrot.lane.b32.xlu0 %v785, 4
        %v864 = vpop.permute.xlu0 %863
        %865 = vrot.lane.b32.xlu0 %v787, 4
        %v866 = vpop.permute.xlu0 %865
        %867 = vrot.lane.b32.xlu0 %v790, 4
        %v868 = vpop.permute.xlu0 %867
        %869 = vrot.lane.b32.xlu0 %v792, 4
        %v870 = vpop.permute.xlu0 %869
        %871 = vrot.lane.b32.xlu0 %v795, 4
        %v872 = vpop.permute.xlu0 %871
        %873 = vrot.lane.b32.xlu0 %v797, 4
        %v874 = vpop.permute.xlu0 %873
        %875 = vrot.lane.b32.xlu0 %v800, 4
        %v876 = vpop.permute.xlu0 %875
        %877 = vrot.lane.b32.xlu0 %v802, 4
        %v878 = vpop.permute.xlu0 %877
        %879 = vrot.lane.b32.xlu0 %v805, 4
        %v880 = vpop.permute.xlu0 %879
        %881 = vrot.lane.b32.xlu0 %v807, 4
        %v882 = vpop.permute.xlu0 %881
        %883 = vrot.lane.b32.xlu0 %v810, 4
        %v884 = vpop.permute.xlu0 %883
        %885 = vrot.lane.b32.xlu0 %v812, 4
        %v886 = vpop.permute.xlu0 %885
        %887 = vrot.lane.b32.xlu0 %v815, 4
        %v888 = vpop.permute.xlu0 %887
        %889 = vrot.lane.b32.xlu0 %v817, 4
        %v890 = vpop.permute.xlu0 %889
        %891 = vrot.lane.b32.xlu0 %v820, 4
        %v892 = vpop.permute.xlu0 %891
        %893 = vrot.lane.b32.xlu0 %v822, 4
        %v894 = vpop.permute.xlu0 %893
        %895 = vrot.lane.b32.xlu0 %v825, 4
        %v896 = vpop.permute.xlu0 %895
        %897 = vrot.lane.b32.xlu0 %v827, 4
        %v898 = vpop.permute.xlu0 %897
        %899 = vrot.lane.b32.xlu0 %v830, 4
        %v900 = vpop.permute.xlu0 %899
        %901 = vrot.lane.b32.xlu0 %v832, 4
        %v902 = vpop.permute.xlu0 %901
        %903 = vrot.lane.b32.xlu0 %v835, 4
        %v904 = vpop.permute.xlu0 %903
        %905 = vrot.lane.b32.xlu0 %v837, 4
        %v906 = vpop.permute.xlu0 %905
        %907 = vrot.lane.b32.xlu0 %v840, 4
        %v908 = vpop.permute.xlu0 %907
        %909 = vrot.lane.b32.xlu0 %v842, 4
        %v910 = vpop.permute.xlu0 %909
        %911 = vrot.lane.b32.xlu0 %v845, 4
        %v912 = vpop.permute.xlu0 %911
        %913 = vrot.lane.b32.xlu0 %v847, 4
        %v914 = vpop.permute.xlu0 %913
        %915 = vrot.lane.b32.xlu0 %v850, 4
        %v916 = vpop.permute.xlu0 %915
        %917 = vrot.lane.b32.xlu0 %v852, 4
        %v918 = vpop.permute.xlu0 %917
        %919 = vrot.lane.b32.xlu0 %v855, 4
        %v920 = vpop.permute.xlu0 %919
        %921 = vrot.lane.b32.xlu0 %v857, 4
        %v922 = vpop.permute.xlu0 %921
        %923 = vrot.lane.b32.xlu0 %v860, 4
        %v924 = vpop.permute.xlu0 %923
        %925 = vrot.lane.b32.xlu0 %v862, 4
        %v926 = vpop.permute.xlu0 %925
        %vm959 = vcmask 1045504
        %v960 = vrot.slane %v680, 2
        %v961 = vrot.slane %v681, 2
        %v962 = vsel %vm959, %v960, %v961
        %v963 = vrot.slane %v682, 2
        %v964 = vsel %vm959, %v961, %v963
        %v965 = vrot.slane %v683, 2
        %v966 = vrot.slane %v684, 2
        %v967 = vsel %vm959, %v965, %v966
        %v968 = vrot.slane %v685, 2
        %v969 = vsel %vm959, %v966, %v968
        %v970 = vrot.slane %v686, 2
        %v971 = vrot.slane %v687, 2
        %v972 = vsel %vm959, %v970, %v971
        %v973 = vrot.slane %v688, 2
        %v974 = vsel %vm959, %v971, %v973
        %v975 = vrot.slane %v689, 2
        %v976 = vrot.slane %v690, 2
        %v977 = vsel %vm959, %v975, %v976
        %v978 = vrot.slane %v691, 2
        %v979 = vsel %vm959, %v976, %v978
        %v980 = vrot.slane %v692, 2
        %v981 = vrot.slane %v693, 2
        %v982 = vsel %vm959, %v980, %v981
        %v983 = vrot.slane %v694, 2
        %v984 = vsel %vm959, %v981, %v983
        %v985 = vrot.slane %v695, 2
        %v986 = vrot.slane %v696, 2
        %v987 = vsel %vm959, %v985, %v986
        %v988 = vrot.slane %v697, 2
        %v989 = vsel %vm959, %v986, %v988
        %v990 = vrot.slane %v698, 2
        %v991 = vrot.slane %v699, 2
        %v992 = vsel %vm959, %v990, %v991
        %v993 = vrot.slane %v700, 2
        %v994 = vsel %vm959, %v991, %v993
        %v995 = vrot.slane %v701, 2
        %v996 = vrot.slane %v702, 2
        %v997 = vsel %vm959, %v995, %v996
        %v998 = vrot.slane %v703, 2
        %v999 = vsel %vm959, %v996, %v998
        %v1000 = vrot.slane %v704, 2
        %v1001 = vrot.slane %v705, 2
        %v1002 = vsel %vm959, %v1000, %v1001
        %v1003 = vrot.slane %v706, 2
        %v1004 = vsel %vm959, %v1001, %v1003
        %v1005 = vrot.slane %v707, 2
        %v1006 = vrot.slane %v708, 2
        %v1007 = vsel %vm959, %v1005, %v1006
        %v1008 = vrot.slane %v709, 2
        %v1009 = vsel %vm959, %v1006, %v1008
        %v1010 = vrot.slane %v710, 2
        %v1011 = vrot.slane %v711, 2
        %v1012 = vsel %vm959, %v1010, %v1011
        %v1013 = vrot.slane %v712, 2
        %v1014 = vsel %vm959, %v1011, %v1013
        %v1015 = vrot.slane %v713, 2
        %v1016 = vrot.slane %v714, 2
        %v1017 = vsel %vm959, %v1015, %v1016
        %v1018 = vrot.slane %v715, 2
        %v1019 = vsel %vm959, %v1016, %v1018
        %v1020 = vrot.slane %v716, 2
        %v1021 = vrot.slane %v717, 2
        %v1022 = vsel %vm959, %v1020, %v1021
        %v1023 = vrot.slane %v718, 2
        %v1024 = vsel %vm959, %v1021, %v1023
        %v1025 = vrot.slane %v719, 2
        %v1026 = vrot.slane %v720, 2
        %v1027 = vsel %vm959, %v1025, %v1026
        %v1028 = vrot.slane %v721, 2
        %v1029 = vsel %vm959, %v1026, %v1028
        %v1030 = vrot.slane %v722, 2
        %v1031 = vrot.slane %v723, 2
        %v1032 = vsel %vm959, %v1030, %v1031
        %v1033 = vrot.slane %v724, 2
        %v1034 = vsel %vm959, %v1031, %v1033
        %v1035 = vrot.slane %v725, 2
        %v1036 = vrot.slane %v726, 2
        %v1037 = vsel %vm959, %v1035, %v1036
        %v1038 = vrot.slane %v727, 2
        %v1039 = vsel %vm959, %v1036, %v1038
        %1040 = vrot.lane.b32.xlu0 %v962, 8
        %v1041 = vpop.permute.xlu0 %1040
        %1042 = vrot.lane.b32.xlu0 %v964, 8
        %v1043 = vpop.permute.xlu0 %1042
        %1044 = vrot.lane.b32.xlu0 %v967, 8
        %v1045 = vpop.permute.xlu0 %1044
        %1046 = vrot.lane.b32.xlu0 %v969, 8
        %v1047 = vpop.permute.xlu0 %1046
        %1048 = vrot.lane.b32.xlu0 %v972, 8
        %v1049 = vpop.permute.xlu0 %1048
        %1050 = vrot.lane.b32.xlu0 %v974, 8
        %v1051 = vpop.permute.xlu0 %1050
        %1052 = vrot.lane.b32.xlu0 %v977, 8
        %v1053 = vpop.permute.xlu0 %1052
        %1054 = vrot.lane.b32.xlu0 %v979, 8
        %v1055 = vpop.permute.xlu0 %1054
        %1056 = vrot.lane.b32.xlu0 %v982, 8
        %v1057 = vpop.permute.xlu0 %1056
        %1058 = vrot.lane.b32.xlu0 %v984, 8
        %v1059 = vpop.permute.xlu0 %1058
        %1060 = vrot.lane.b32.xlu0 %v987, 8
        %v1061 = vpop.permute.xlu0 %1060
        %1062 = vrot.lane.b32.xlu0 %v989, 8
        %v1063 = vpop.permute.xlu0 %1062
        %1064 = vrot.lane.b32.xlu0 %v992, 8
        %v1065 = vpop.permute.xlu0 %1064
        %1066 = vrot.lane.b32.xlu0 %v994, 8
        %v1067 = vpop.permute.xlu0 %1066
        %1068 = vrot.lane.b32.xlu0 %v997, 8
        %v1069 = vpop.permute.xlu0 %1068
        %1070 = vrot.lane.b32.xlu0 %v999, 8
        %v1071 = vpop.permute.xlu0 %1070
        %1072 = vrot.lane.b32.xlu0 %v1002, 8
        %v1073 = vpop.permute.xlu0 %1072
        %1074 = vrot.lane.b32.xlu0 %v1004, 8
        %v1075 = vpop.permute.xlu0 %1074
        %1076 = vrot.lane.b32.xlu0 %v1007, 8
        %v1077 = vpop.permute.xlu0 %1076
        %1078 = vrot.lane.b32.xlu0 %v1009, 8
        %v1079 = vpop.permute.xlu0 %1078
        %1080 = vrot.lane.b32.xlu0 %v1012, 8
        %v1081 = vpop.permute.xlu0 %1080
        %1082 = vrot.lane.b32.xlu0 %v1014, 8
        %v1083 = vpop.permute.xlu0 %1082
        %1084 = vrot.lane.b32.xlu0 %v1017, 8
        %v1085 = vpop.permute.xlu0 %1084
        %1086 = vrot.lane.b32.xlu0 %v1019, 8
        %v1087 = vpop.permute.xlu0 %1086
        %1088 = vrot.lane.b32.xlu0 %v1022, 8
        %v1089 = vpop.permute.xlu0 %1088
        %1090 = vrot.lane.b32.xlu0 %v1024, 8
        %v1091 = vpop.permute.xlu0 %1090
        %1092 = vrot.lane.b32.xlu0 %v1027, 8
        %v1093 = vpop.permute.xlu0 %1092
        %1094 = vrot.lane.b32.xlu0 %v1029, 8
        %v1095 = vpop.permute.xlu0 %1094
        %1096 = vrot.lane.b32.xlu0 %v1032, 8
        %v1097 = vpop.permute.xlu0 %1096
        %1098 = vrot.lane.b32.xlu0 %v1034, 8
        %v1099 = vpop.permute.xlu0 %1098
        %1100 = vrot.lane.b32.xlu0 %v1037, 8
        %v1101 = vpop.permute.xlu0 %1100
        %1102 = vrot.lane.b32.xlu0 %v1039, 8
        %v1103 = vpop.permute.xlu0 %1102
        %1138 = vrot.lane.b32.xlu0 %v683, 12
        %v1139 = vpop.permute.xlu0 %1138
        %1140 = vrot.lane.b32.xlu0 %v684, 12
        %v1141 = vpop.permute.xlu0 %1140
        %1142 = vrot.lane.b32.xlu0 %v686, 12
        %v1143 = vpop.permute.xlu0 %1142
        %1144 = vrot.lane.b32.xlu0 %v687, 12
        %v1145 = vpop.permute.xlu0 %1144
        %1146 = vrot.lane.b32.xlu0 %v689, 12
        %v1147 = vpop.permute.xlu0 %1146
        %1148 = vrot.lane.b32.xlu0 %v690, 12
        %v1149 = vpop.permute.xlu0 %1148
        %1150 = vrot.lane.b32.xlu0 %v692, 12
        %v1151 = vpop.permute.xlu0 %1150
        %1152 = vrot.lane.b32.xlu0 %v693, 12
        %v1153 = vpop.permute.xlu0 %1152
        %1154 = vrot.lane.b32.xlu0 %v695, 12
        %v1155 = vpop.permute.xlu0 %1154
        %1156 = vrot.lane.b32.xlu0 %v696, 12
        %v1157 = vpop.permute.xlu0 %1156
        %1158 = vrot.lane.b32.xlu0 %v698, 12
        %v1159 = vpop.permute.xlu0 %1158
        %1160 = vrot.lane.b32.xlu0 %v699, 12
        %v1161 = vpop.permute.xlu0 %1160
        %1162 = vrot.lane.b32.xlu0 %v701, 12
        %v1163 = vpop.permute.xlu0 %1162
        %1164 = vrot.lane.b32.xlu0 %v702, 12
        %v1165 = vpop.permute.xlu0 %1164
        %1166 = vrot.lane.b32.xlu0 %v704, 12
        %v1167 = vpop.permute.xlu0 %1166
        %1168 = vrot.lane.b32.xlu0 %v705, 12
        %v1169 = vpop.permute.xlu0 %1168
        %1170 = vrot.lane.b32.xlu0 %v707, 12
        %v1171 = vpop.permute.xlu0 %1170
        %1172 = vrot.lane.b32.xlu0 %v708, 12
        %v1173 = vpop.permute.xlu0 %1172
        %1174 = vrot.lane.b32.xlu0 %v710, 12
        %v1175 = vpop.permute.xlu0 %1174
        %1176 = vrot.lane.b32.xlu0 %v711, 12
        %v1177 = vpop.permute.xlu0 %1176
        %1178 = vrot.lane.b32.xlu0 %v713, 12
        %v1179 = vpop.permute.xlu0 %1178
        %1180 = vrot.lane.b32.xlu0 %v714, 12
        %v1181 = vpop.permute.xlu0 %1180
        %1182 = vrot.lane.b32.xlu0 %v716, 12
        %v1183 = vpop.permute.xlu0 %1182
        %1184 = vrot.lane.b32.xlu0 %v717, 12
        %v1185 = vpop.permute.xlu0 %1184
        %1186 = vrot.lane.b32.xlu0 %v719, 12
        %v1187 = vpop.permute.xlu0 %1186
        %1188 = vrot.lane.b32.xlu0 %v720, 12
        %v1189 = vpop.permute.xlu0 %1188
        %1190 = vrot.lane.b32.xlu0 %v722, 12
        %v1191 = vpop.permute.xlu0 %1190
        %1192 = vrot.lane.b32.xlu0 %v723, 12
        %v1193 = vpop.permute.xlu0 %1192
        %1194 = vrot.lane.b32.xlu0 %v725, 12
        %v1195 = vpop.permute.xlu0 %1194
        %1196 = vrot.lane.b32.xlu0 %v726, 12
        %v1197 = vpop.permute.xlu0 %1196
        %1198 = vrot.lane.b32.xlu0 %v728, 12
        %v1199 = vpop.permute.xlu0 %1198
        %1200 = vrot.lane.b32.xlu0 %v729, 12
        %v1201 = vpop.permute.xlu0 %1200
        %v1235 = vrot.slane %v728, 1
        %v1236 = vrot.slane %v729, 1
        %v1237 = vsel %vm782, %v1235, %v1236
        %v1238 = vrot.slane %v730, 1
        %v1239 = vsel %vm782, %v1236, %v1238
        %1240 = vrot.lane.b32.xlu0 %v790, 16
        %v1241 = vpop.permute.xlu0 %1240
        %1242 = vrot.lane.b32.xlu0 %v792, 16
        %v1243 = vpop.permute.xlu0 %1242
        %1244 = vrot.lane.b32.xlu0 %v795, 16
        %v1245 = vpop.permute.xlu0 %1244
        %1246 = vrot.lane.b32.xlu0 %v797, 16
        %v1247 = vpop.permute.xlu0 %1246
        %1248 = vrot.lane.b32.xlu0 %v800, 16
        %v1249 = vpop.permute.xlu0 %1248
        %1250 = vrot.lane.b32.xlu0 %v802, 16
        %v1251 = vpop.permute.xlu0 %1250
        %1252 = vrot.lane.b32.xlu0 %v805, 16
        %v1253 = vpop.permute.xlu0 %1252
        %1254 = vrot.lane.b32.xlu0 %v807, 16
        %v1255 = vpop.permute.xlu0 %1254
        %1256 = vrot.lane.b32.xlu0 %v810, 16
        %v1257 = vpop.permute.xlu0 %1256
        %1258 = vrot.lane.b32.xlu0 %v812, 16
        %v1259 = vpop.permute.xlu0 %1258
        %1260 = vrot.lane.b32.xlu0 %v815, 16
        %v1261 = vpop.permute.xlu0 %1260
        %1262 = vrot.lane.b32.xlu0 %v817, 16
        %v1263 = vpop.permute.xlu0 %1262
        %1264 = vrot.lane.b32.xlu0 %v820, 16
        %v1265 = vpop.permute.xlu0 %1264
        %1266 = vrot.lane.b32.xlu0 %v822, 16
        %v1267 = vpop.permute.xlu0 %1266
        %1268 = vrot.lane.b32.xlu0 %v825, 16
        %v1269 = vpop.permute.xlu0 %1268
        %1270 = vrot.lane.b32.xlu0 %v827, 16
        %v1271 = vpop.permute.xlu0 %1270
        %1272 = vrot.lane.b32.xlu0 %v830, 16
        %v1273 = vpop.permute.xlu0 %1272
        %1274 = vrot.lane.b32.xlu0 %v832, 16
        %v1275 = vpop.permute.xlu0 %1274
        %1276 = vrot.lane.b32.xlu0 %v835, 16
        %v1277 = vpop.permute.xlu0 %1276
        %1278 = vrot.lane.b32.xlu0 %v837, 16
        %v1279 = vpop.permute.xlu0 %1278
        %1280 = vrot.lane.b32.xlu0 %v840, 16
        %v1281 = vpop.permute.xlu0 %1280
        %1282 = vrot.lane.b32.xlu0 %v842, 16
        %v1283 = vpop.permute.xlu0 %1282
        %1284 = vrot.lane.b32.xlu0 %v845, 16
        %v1285 = vpop.permute.xlu0 %1284
        %1286 = vrot.lane.b32.xlu0 %v847, 16
        %v1287 = vpop.permute.xlu0 %1286
        %1288 = vrot.lane.b32.xlu0 %v850, 16
        %v1289 = vpop.permute.xlu0 %1288
        %1290 = vrot.lane.b32.xlu0 %v852, 16
        %v1291 = vpop.permute.xlu0 %1290
        %1292 = vrot.lane.b32.xlu0 %v855, 16
        %v1293 = vpop.permute.xlu0 %1292
        %1294 = vrot.lane.b32.xlu0 %v857, 16
        %v1295 = vpop.permute.xlu0 %1294
        %1296 = vrot.lane.b32.xlu0 %v860, 16
        %v1297 = vpop.permute.xlu0 %1296
        %1298 = vrot.lane.b32.xlu0 %v862, 16
        %v1299 = vpop.permute.xlu0 %1298
        %1300 = vrot.lane.b32.xlu0 %v1237, 16
        %v1301 = vpop.permute.xlu0 %1300
        %1302 = vrot.lane.b32.xlu0 %v1239, 16
        %v1303 = vpop.permute.xlu0 %1302
        %v1336 = vrot.slane %v728, 2
        %v1337 = vrot.slane %v729, 2
        %v1338 = vsel %vm959, %v1336, %v1337
        %v1339 = vrot.slane %v730, 2
        %v1340 = vsel %vm959, %v1337, %v1339
        %1341 = vrot.lane.b32.xlu0 %v967, 20
        %v1342 = vpop.permute.xlu0 %1341
        %1343 = vrot.lane.b32.xlu0 %v969, 20
        %v1344 = vpop.permute.xlu0 %1343
        %1345 = vrot.lane.b32.xlu0 %v972, 20
        %v1346 = vpop.permute.xlu0 %1345
        %1347 = vrot.lane.b32.xlu0 %v974, 20
        %v1348 = vpop.permute.xlu0 %1347
        %1349 = vrot.lane.b32.xlu0 %v977, 20
        %v1350 = vpop.permute.xlu0 %1349
        %1351 = vrot.lane.b32.xlu0 %v979, 20
        %v1352 = vpop.permute.xlu0 %1351
        %1353 = vrot.lane.b32.xlu0 %v982, 20
        %v1354 = vpop.permute.xlu0 %1353
        %1355 = vrot.lane.b32.xlu0 %v984, 20
        %v1356 = vpop.permute.xlu0 %1355
        %1357 = vrot.lane.b32.xlu0 %v987, 20
        %v1358 = vpop.permute.xlu0 %1357
        %1359 = vrot.lane.b32.xlu0 %v989, 20
        %v1360 = vpop.permute.xlu0 %1359
        %1361 = vrot.lane.b32.xlu0 %v992, 20
        %v1362 = vpop.permute.xlu0 %1361
        %1363 = vrot.lane.b32.xlu0 %v994, 20
        %v1364 = vpop.permute.xlu0 %1363
        %1365 = vrot.lane.b32.xlu0 %v997, 20
        %v1366 = vpop.permute.xlu0 %1365
        %1367 = vrot.lane.b32.xlu0 %v999, 20
        %v1368 = vpop.permute.xlu0 %1367
        %1369 = vrot.lane.b32.xlu0 %v1002, 20
        %v1370 = vpop.permute.xlu0 %1369
        %1371 = vrot.lane.b32.xlu0 %v1004, 20
        %v1372 = vpop.permute.xlu0 %1371
        %1373 = vrot.lane.b32.xlu0 %v1007, 20
        %v1374 = vpop.permute.xlu0 %1373
        %1375 = vrot.lane.b32.xlu0 %v1009, 20
        %v1376 = vpop.permute.xlu0 %1375
        %1377 = vrot.lane.b32.xlu0 %v1012, 20
        %v1378 = vpop.permute.xlu0 %1377
        %1379 = vrot.lane.b32.xlu0 %v1014, 20
        %v1380 = vpop.permute.xlu0 %1379
        %1381 = vrot.lane.b32.xlu0 %v1017, 20
        %v1382 = vpop.permute.xlu0 %1381
        %1383 = vrot.lane.b32.xlu0 %v1019, 20
        %v1384 = vpop.permute.xlu0 %1383
        %1385 = vrot.lane.b32.xlu0 %v1022, 20
        %v1386 = vpop.permute.xlu0 %1385
        %1387 = vrot.lane.b32.xlu0 %v1024, 20
        %v1388 = vpop.permute.xlu0 %1387
        %1389 = vrot.lane.b32.xlu0 %v1027, 20
        %v1390 = vpop.permute.xlu0 %1389
        %1391 = vrot.lane.b32.xlu0 %v1029, 20
        %v1392 = vpop.permute.xlu0 %1391
        %1393 = vrot.lane.b32.xlu0 %v1032, 20
        %v1394 = vpop.permute.xlu0 %1393
        %1395 = vrot.lane.b32.xlu0 %v1034, 20
        %v1396 = vpop.permute.xlu0 %1395
        %1397 = vrot.lane.b32.xlu0 %v1037, 20
        %v1398 = vpop.permute.xlu0 %1397
        %1399 = vrot.lane.b32.xlu0 %v1039, 20
        %v1400 = vpop.permute.xlu0 %1399
        %1401 = vrot.lane.b32.xlu0 %v1338, 20
        %v1402 = vpop.permute.xlu0 %1401
        %1403 = vrot.lane.b32.xlu0 %v1340, 20
        %v1404 = vpop.permute.xlu0 %1403
        %1439 = vrot.lane.b32.xlu0 %v686, 24
        %v1440 = vpop.permute.xlu0 %1439
        %1441 = vrot.lane.b32.xlu0 %v687, 24
        %v1442 = vpop.permute.xlu0 %1441
        %1443 = vrot.lane.b32.xlu0 %v689, 24
        %v1444 = vpop.permute.xlu0 %1443
        %1445 = vrot.lane.b32.xlu0 %v690, 24
        %v1446 = vpop.permute.xlu0 %1445
        %1447 = vrot.lane.b32.xlu0 %v692, 24
        %v1448 = vpop.permute.xlu0 %1447
        %1449 = vrot.lane.b32.xlu0 %v693, 24
        %v1450 = vpop.permute.xlu0 %1449
        %1451 = vrot.lane.b32.xlu0 %v695, 24
        %v1452 = vpop.permute.xlu0 %1451
        %1453 = vrot.lane.b32.xlu0 %v696, 24
        %v1454 = vpop.permute.xlu0 %1453
        %1455 = vrot.lane.b32.xlu0 %v698, 24
        %v1456 = vpop.permute.xlu0 %1455
        %1457 = vrot.lane.b32.xlu0 %v699, 24
        %v1458 = vpop.permute.xlu0 %1457
        %1459 = vrot.lane.b32.xlu0 %v701, 24
        %v1460 = vpop.permute.xlu0 %1459
        %1461 = vrot.lane.b32.xlu0 %v702, 24
        %v1462 = vpop.permute.xlu0 %1461
        %1463 = vrot.lane.b32.xlu0 %v704, 24
        %v1464 = vpop.permute.xlu0 %1463
        %1465 = vrot.lane.b32.xlu0 %v705, 24
        %v1466 = vpop.permute.xlu0 %1465
        %1467 = vrot.lane.b32.xlu0 %v707, 24
        %v1468 = vpop.permute.xlu0 %1467
        %1469 = vrot.lane.b32.xlu0 %v708, 24
        %v1470 = vpop.permute.xlu0 %1469
        %1471 = vrot.lane.b32.xlu0 %v710, 24
        %v1472 = vpop.permute.xlu0 %1471
        %1473 = vrot.lane.b32.xlu0 %v711, 24
        %v1474 = vpop.permute.xlu0 %1473
        %1475 = vrot.lane.b32.xlu0 %v713, 24
        %v1476 = vpop.permute.xlu0 %1475
        %1477 = vrot.lane.b32.xlu0 %v714, 24
        %v1478 = vpop.permute.xlu0 %1477
        %1479 = vrot.lane.b32.xlu0 %v716, 24
        %v1480 = vpop.permute.xlu0 %1479
        %1481 = vrot.lane.b32.xlu0 %v717, 24
        %v1482 = vpop.permute.xlu0 %1481
        %1483 = vrot.lane.b32.xlu0 %v719, 24
        %v1484 = vpop.permute.xlu0 %1483
        %1485 = vrot.lane.b32.xlu0 %v720, 24
        %v1486 = vpop.permute.xlu0 %1485
        %1487 = vrot.lane.b32.xlu0 %v722, 24
        %v1488 = vpop.permute.xlu0 %1487
        %1489 = vrot.lane.b32.xlu0 %v723, 24
        %v1490 = vpop.permute.xlu0 %1489
        %1491 = vrot.lane.b32.xlu0 %v725, 24
        %v1492 = vpop.permute.xlu0 %1491
        %1493 = vrot.lane.b32.xlu0 %v726, 24
        %v1494 = vpop.permute.xlu0 %1493
        %1495 = vrot.lane.b32.xlu0 %v728, 24
        %v1496 = vpop.permute.xlu0 %1495
        %1497 = vrot.lane.b32.xlu0 %v729, 24
        %v1498 = vpop.permute.xlu0 %1497
        %1499 = vrot.lane.b32.xlu0 %v731, 24
        %v1500 = vpop.permute.xlu0 %1499
        %1501 = vrot.lane.b32.xlu0 %v732, 24
        %v1502 = vpop.permute.xlu0 %1501
        %v1536 = vrot.slane %v731, 1
        %v1537 = vrot.slane %v732, 1
        %v1538 = vsel %vm782, %v1536, %v1537
        %v1539 = vrot.slane %v733, 1
        %v1540 = vsel %vm782, %v1537, %v1539
        %1541 = vrot.lane.b32.xlu0 %v795, 28
        %v1542 = vpop.permute.xlu0 %1541
        %1543 = vrot.lane.b32.xlu0 %v797, 28
        %v1544 = vpop.permute.xlu0 %1543
        %1545 = vrot.lane.b32.xlu0 %v800, 28
        %v1546 = vpop.permute.xlu0 %1545
        %1547 = vrot.lane.b32.xlu0 %v802, 28
        %v1548 = vpop.permute.xlu0 %1547
        %1549 = vrot.lane.b32.xlu0 %v805, 28
        %v1550 = vpop.permute.xlu0 %1549
        %1551 = vrot.lane.b32.xlu0 %v807, 28
        %v1552 = vpop.permute.xlu0 %1551
        %1553 = vrot.lane.b32.xlu0 %v810, 28
        %v1554 = vpop.permute.xlu0 %1553
        %1555 = vrot.lane.b32.xlu0 %v812, 28
        %v1556 = vpop.permute.xlu0 %1555
        %1557 = vrot.lane.b32.xlu0 %v815, 28
        %v1558 = vpop.permute.xlu0 %1557
        %1559 = vrot.lane.b32.xlu0 %v817, 28
        %v1560 = vpop.permute.xlu0 %1559
        %1561 = vrot.lane.b32.xlu0 %v820, 28
        %v1562 = vpop.permute.xlu0 %1561
        %1563 = vrot.lane.b32.xlu0 %v822, 28
        %v1564 = vpop.permute.xlu0 %1563
        %1565 = vrot.lane.b32.xlu0 %v825, 28
        %v1566 = vpop.permute.xlu0 %1565
        %1567 = vrot.lane.b32.xlu0 %v827, 28
        %v1568 = vpop.permute.xlu0 %1567
        %1569 = vrot.lane.b32.xlu0 %v830, 28
        %v1570 = vpop.permute.xlu0 %1569
        %1571 = vrot.lane.b32.xlu0 %v832, 28
        %v1572 = vpop.permute.xlu0 %1571
        %1573 = vrot.lane.b32.xlu0 %v835, 28
        %v1574 = vpop.permute.xlu0 %1573
        %1575 = vrot.lane.b32.xlu0 %v837, 28
        %v1576 = vpop.permute.xlu0 %1575
        %1577 = vrot.lane.b32.xlu0 %v840, 28
        %v1578 = vpop.permute.xlu0 %1577
        %1579 = vrot.lane.b32.xlu0 %v842, 28
        %v1580 = vpop.permute.xlu0 %1579
        %1581 = vrot.lane.b32.xlu0 %v845, 28
        %v1582 = vpop.permute.xlu0 %1581
        %1583 = vrot.lane.b32.xlu0 %v847, 28
        %v1584 = vpop.permute.xlu0 %1583
        %1585 = vrot.lane.b32.xlu0 %v850, 28
        %v1586 = vpop.permute.xlu0 %1585
        %1587 = vrot.lane.b32.xlu0 %v852, 28
        %v1588 = vpop.permute.xlu0 %1587
        %1589 = vrot.lane.b32.xlu0 %v855, 28
        %v1590 = vpop.permute.xlu0 %1589
        %1591 = vrot.lane.b32.xlu0 %v857, 28
        %v1592 = vpop.permute.xlu0 %1591
        %1593 = vrot.lane.b32.xlu0 %v860, 28
        %v1594 = vpop.permute.xlu0 %1593
        %1595 = vrot.lane.b32.xlu0 %v862, 28
        %v1596 = vpop.permute.xlu0 %1595
        %1597 = vrot.lane.b32.xlu0 %v1237, 28
        %v1598 = vpop.permute.xlu0 %1597
        %1599 = vrot.lane.b32.xlu0 %v1239, 28
        %v1600 = vpop.permute.xlu0 %1599
        %1601 = vrot.lane.b32.xlu0 %v1538, 28
        %v1602 = vpop.permute.xlu0 %1601
        %1603 = vrot.lane.b32.xlu0 %v1540, 28
        %v1604 = vpop.permute.xlu0 %1603
        %v1637 = vrot.slane %v731, 2
        %v1638 = vrot.slane %v732, 2
        %v1639 = vsel %vm959, %v1637, %v1638
        %v1640 = vrot.slane %v733, 2
        %v1641 = vsel %vm959, %v1638, %v1640
        %1642 = vrot.lane.b32.xlu0 %v972, 32
        %v1643 = vpop.permute.xlu0 %1642
        %1644 = vrot.lane.b32.xlu0 %v974, 32
        %v1645 = vpop.permute.xlu0 %1644
        %1646 = vrot.lane.b32.xlu0 %v977, 32
        %v1647 = vpop.permute.xlu0 %1646
        %1648 = vrot.lane.b32.xlu0 %v979, 32
        %v1649 = vpop.permute.xlu0 %1648
        %1650 = vrot.lane.b32.xlu0 %v982, 32
        %v1651 = vpop.permute.xlu0 %1650
        %1652 = vrot.lane.b32.xlu0 %v984, 32
        %v1653 = vpop.permute.xlu0 %1652
        %1654 = vrot.lane.b32.xlu0 %v987, 32
        %v1655 = vpop.permute.xlu0 %1654
        %1656 = vrot.lane.b32.xlu0 %v989, 32
        %v1657 = vpop.permute.xlu0 %1656
        %1658 = vrot.lane.b32.xlu0 %v992, 32
        %v1659 = vpop.permute.xlu0 %1658
        %1660 = vrot.lane.b32.xlu0 %v994, 32
        %v1661 = vpop.permute.xlu0 %1660
        %1662 = vrot.lane.b32.xlu0 %v997, 32
        %v1663 = vpop.permute.xlu0 %1662
        %1664 = vrot.lane.b32.xlu0 %v999, 32
        %v1665 = vpop.permute.xlu0 %1664
        %1666 = vrot.lane.b32.xlu0 %v1002, 32
        %v1667 = vpop.permute.xlu0 %1666
        %1668 = vrot.lane.b32.xlu0 %v1004, 32
        %v1669 = vpop.permute.xlu0 %1668
        %1670 = vrot.lane.b32.xlu0 %v1007, 32
        %v1671 = vpop.permute.xlu0 %1670
        %1672 = vrot.lane.b32.xlu0 %v1009, 32
        %v1673 = vpop.permute.xlu0 %1672
        %1674 = vrot.lane.b32.xlu0 %v1012, 32
        %v1675 = vpop.permute.xlu0 %1674
        %1676 = vrot.lane.b32.xlu0 %v1014, 32
        %v1677 = vpop.permute.xlu0 %1676
        %1678 = vrot.lane.b32.xlu0 %v1017, 32
        %v1679 = vpop.permute.xlu0 %1678
        %1680 = vrot.lane.b32.xlu0 %v1019, 32
        %v1681 = vpop.permute.xlu0 %1680
        %1682 = vrot.lane.b32.xlu0 %v1022, 32
        %v1683 = vpop.permute.xlu0 %1682
        %1684 = vrot.lane.b32.xlu0 %v1024, 32
        %v1685 = vpop.permute.xlu0 %1684
        %1686 = vrot.lane.b32.xlu0 %v1027, 32
        %v1687 = vpop.permute.xlu0 %1686
        %1688 = vrot.lane.b32.xlu0 %v1029, 32
        %v1689 = vpop.permute.xlu0 %1688
        %1690 = vrot.lane.b32.xlu0 %v1032, 32
        %v1691 = vpop.permute.xlu0 %1690
        %1692 = vrot.lane.b32.xlu0 %v1034, 32
        %v1693 = vpop.permute.xlu0 %1692
        %1694 = vrot.lane.b32.xlu0 %v1037, 32
        %v1695 = vpop.permute.xlu0 %1694
        %1696 = vrot.lane.b32.xlu0 %v1039, 32
        %v1697 = vpop.permute.xlu0 %1696
        %1698 = vrot.lane.b32.xlu0 %v1338, 32
        %v1699 = vpop.permute.xlu0 %1698
        %1700 = vrot.lane.b32.xlu0 %v1340, 32
        %v1701 = vpop.permute.xlu0 %1700
        %1702 = vrot.lane.b32.xlu0 %v1639, 32
        %v1703 = vpop.permute.xlu0 %1702
        %1704 = vrot.lane.b32.xlu0 %v1641, 32
        %v1705 = vpop.permute.xlu0 %1704
        %v1738 = vsel %vm591, %v680, %v864
        %v1739 = vsel %vm591, %v681, %v866
        %v1740 = vsel %vm591, %v683, %v868
        %v1741 = vsel %vm591, %v684, %v870
        %v1742 = vsel %vm591, %v686, %v872
        %v1743 = vsel %vm591, %v687, %v874
        %v1744 = vsel %vm591, %v689, %v876
        %v1745 = vsel %vm591, %v690, %v878
        %v1746 = vsel %vm591, %v692, %v880
        %v1747 = vsel %vm591, %v693, %v882
        %v1748 = vsel %vm591, %v695, %v884
        %v1749 = vsel %vm591, %v696, %v886
        %v1750 = vsel %vm591, %v698, %v888
        %v1751 = vsel %vm591, %v699, %v890
        %v1752 = vsel %vm591, %v701, %v892
        %v1753 = vsel %vm591, %v702, %v894
        %v1754 = vsel %vm591, %v704, %v896
        %v1755 = vsel %vm591, %v705, %v898
        %v1756 = vsel %vm591, %v707, %v900
        %v1757 = vsel %vm591, %v708, %v902
        %v1758 = vsel %vm591, %v710, %v904
        %v1759 = vsel %vm591, %v711, %v906
        %v1760 = vsel %vm591, %v713, %v908
        %v1761 = vsel %vm591, %v714, %v910
        %v1762 = vsel %vm591, %v716, %v912
        %v1763 = vsel %vm591, %v717, %v914
        %v1764 = vsel %vm591, %v719, %v916
        %v1765 = vsel %vm591, %v720, %v918
        %v1766 = vsel %vm591, %v722, %v920
        %v1767 = vsel %vm591, %v723, %v922
        %v1768 = vsel %vm591, %v725, %v924
        %v1769 = vsel %vm591, %v726, %v926
        %vm1770 = vcmask 64512
        %v1771 = vsel %vm1770, %v1738, %v1041
        %v1772 = vsel %vm1770, %v1739, %v1043
        %v1773 = vsel %vm1770, %v1740, %v1045
        %v1774 = vsel %vm1770, %v1741, %v1047
        %v1775 = vsel %vm1770, %v1742, %v1049
        %v1776 = vsel %vm1770, %v1743, %v1051
        %v1777 = vsel %vm1770, %v1744, %v1053
        %v1778 = vsel %vm1770, %v1745, %v1055
        %v1779 = vsel %vm1770, %v1746, %v1057
        %v1780 = vsel %vm1770, %v1747, %v1059
        %v1781 = vsel %vm1770, %v1748, %v1061
        %v1782 = vsel %vm1770, %v1749, %v1063
        %v1783 = vsel %vm1770, %v1750, %v1065
        %v1784 = vsel %vm1770, %v1751, %v1067
        %v1785 = vsel %vm1770, %v1752, %v1069
        %v1786 = vsel %vm1770, %v1753, %v1071
        %v1787 = vsel %vm1770, %v1754, %v1073
        %v1788 = vsel %vm1770, %v1755, %v1075
        %v1789 = vsel %vm1770, %v1756, %v1077
        %v1790 = vsel %vm1770, %v1757, %v1079
        %v1791 = vsel %vm1770, %v1758, %v1081
        %v1792 = vsel %vm1770, %v1759, %v1083
        %v1793 = vsel %vm1770, %v1760, %v1085
        %v1794 = vsel %vm1770, %v1761, %v1087
        %v1795 = vsel %vm1770, %v1762, %v1089
        %v1796 = vsel %vm1770, %v1763, %v1091
        %v1797 = vsel %vm1770, %v1764, %v1093
        %v1798 = vsel %vm1770, %v1765, %v1095
        %v1799 = vsel %vm1770, %v1766, %v1097
        %v1800 = vsel %vm1770, %v1767, %v1099
        %v1801 = vsel %vm1770, %v1768, %v1101
        %v1802 = vsel %vm1770, %v1769, %v1103
        %vm1803 = vcmask 97280
        %v1804 = vsel %vm1803, %v1771, %v1139
        %v1805 = vsel %vm1803, %v1772, %v1141
        %v1806 = vsel %vm1803, %v1773, %v1143
        %v1807 = vsel %vm1803, %v1774, %v1145
        %v1808 = vsel %vm1803, %v1775, %v1147
        %v1809 = vsel %vm1803, %v1776, %v1149
        %v1810 = vsel %vm1803, %v1777, %v1151
        %v1811 = vsel %vm1803, %v1778, %v1153
        %v1812 = vsel %vm1803, %v1779, %v1155
        %v1813 = vsel %vm1803, %v1780, %v1157
        %v1814 = vsel %vm1803, %v1781, %v1159
        %v1815 = vsel %vm1803, %v1782, %v1161
        %v1816 = vsel %vm1803, %v1783, %v1163
        %v1817 = vsel %vm1803, %v1784, %v1165
        %v1818 = vsel %vm1803, %v1785, %v1167
        %v1819 = vsel %vm1803, %v1786, %v1169
        %v1820 = vsel %vm1803, %v1787, %v1171
        %v1821 = vsel %vm1803, %v1788, %v1173
        %v1822 = vsel %vm1803, %v1789, %v1175
        %v1823 = vsel %vm1803, %v1790, %v1177
        %v1824 = vsel %vm1803, %v1791, %v1179
        %v1825 = vsel %vm1803, %v1792, %v1181
        %v1826 = vsel %vm1803, %v1793, %v1183
        %v1827 = vsel %vm1803, %v1794, %v1185
        %v1828 = vsel %vm1803, %v1795, %v1187
        %v1829 = vsel %vm1803, %v1796, %v1189
        %v1830 = vsel %vm1803, %v1797, %v1191
        %v1831 = vsel %vm1803, %v1798, %v1193
        %v1832 = vsel %vm1803, %v1799, %v1195
        %v1833 = vsel %vm1803, %v1800, %v1197
        %v1834 = vsel %vm1803, %v1801, %v1199
        %v1835 = vsel %vm1803, %v1802, %v1201
        %vm1836 = vcmask 130048
        %v1837 = vsel %vm1836, %v1804, %v1241
        %v1838 = vsel %vm1836, %v1805, %v1243
        %v1839 = vsel %vm1836, %v1806, %v1245
        %v1840 = vsel %vm1836, %v1807, %v1247
        %v1841 = vsel %vm1836, %v1808, %v1249
        %v1842 = vsel %vm1836, %v1809, %v1251
        %v1843 = vsel %vm1836, %v1810, %v1253
        %v1844 = vsel %vm1836, %v1811, %v1255
        %v1845 = vsel %vm1836, %v1812, %v1257
        %v1846 = vsel %vm1836, %v1813, %v1259
        %v1847 = vsel %vm1836, %v1814, %v1261
        %v1848 = vsel %vm1836, %v1815, %v1263
        %v1849 = vsel %vm1836, %v1816, %v1265
        %v1850 = vsel %vm1836, %v1817, %v1267
        %v1851 = vsel %vm1836, %v1818, %v1269
        %v1852 = vsel %vm1836, %v1819, %v1271
        %v1853 = vsel %vm1836, %v1820, %v1273
        %v1854 = vsel %vm1836, %v1821, %v1275
        %v1855 = vsel %vm1836, %v1822, %v1277
        %v1856 = vsel %vm1836, %v1823, %v1279
        %v1857 = vsel %vm1836, %v1824, %v1281
        %v1858 = vsel %vm1836, %v1825, %v1283
        %v1859 = vsel %vm1836, %v1826, %v1285
        %v1860 = vsel %vm1836, %v1827, %v1287
        %v1861 = vsel %vm1836, %v1828, %v1289
        %v1862 = vsel %vm1836, %v1829, %v1291
        %v1863 = vsel %vm1836, %v1830, %v1293
        %v1864 = vsel %vm1836, %v1831, %v1295
        %v1865 = vsel %vm1836, %v1832, %v1297
        %v1866 = vsel %vm1836, %v1833, %v1299
        %v1867 = vsel %vm1836, %v1834, %v1301
        %v1868 = vsel %vm1836, %v1835, %v1303
        %vm1869 = vcmask 162816
        %v1870 = vsel %vm1869, %v1837, %v1342
        %v1871 = vsel %vm1869, %v1838, %v1344
        %v1872 = vsel %vm1869, %v1839, %v1346
        %v1873 = vsel %vm1869, %v1840, %v1348
        %v1874 = vsel %vm1869, %v1841, %v1350
        %v1875 = vsel %vm1869, %v1842, %v1352
        %v1876 = vsel %vm1869, %v1843, %v1354
        %v1877 = vsel %vm1869, %v1844, %v1356
        %v1878 = vsel %vm1869, %v1845, %v1358
        %v1879 = vsel %vm1869, %v1846, %v1360
        %v1880 = vsel %vm1869, %v1847, %v1362
        %v1881 = vsel %vm1869, %v1848, %v1364
        %v1882 = vsel %vm1869, %v1849, %v1366
        %v1883 = vsel %vm1869, %v1850, %v1368
        %v1884 = vsel %vm1869, %v1851, %v1370
        %v1885 = vsel %vm1869, %v1852, %v1372
        %v1886 = vsel %vm1869, %v1853, %v1374
        %v1887 = vsel %vm1869, %v1854, %v1376
        %v1888 = vsel %vm1869, %v1855, %v1378
        %v1889 = vsel %vm1869, %v1856, %v1380
        %v1890 = vsel %vm1869, %v1857, %v1382
        %v1891 = vsel %vm1869, %v1858, %v1384
        %v1892 = vsel %vm1869, %v1859, %v1386
        %v1893 = vsel %vm1869, %v1860, %v1388
        %v1894 = vsel %vm1869, %v1861, %v1390
        %v1895 = vsel %vm1869, %v1862, %v1392
        %v1896 = vsel %vm1869, %v1863, %v1394
        %v1897 = vsel %vm1869, %v1864, %v1396
        %v1898 = vsel %vm1869, %v1865, %v1398
        %v1899 = vsel %vm1869, %v1866, %v1400
        %v1900 = vsel %vm1869, %v1867, %v1402
        %v1901 = vsel %vm1869, %v1868, %v1404
        %vm1902 = vcmask 195584
        %v1903 = vsel %vm1902, %v1870, %v1440
        %v1904 = vsel %vm1902, %v1871, %v1442
        %v1905 = vsel %vm1902, %v1872, %v1444
        %v1906 = vsel %vm1902, %v1873, %v1446
        %v1907 = vsel %vm1902, %v1874, %v1448
        %v1908 = vsel %vm1902, %v1875, %v1450
        %v1909 = vsel %vm1902, %v1876, %v1452
        %v1910 = vsel %vm1902, %v1877, %v1454
        %v1911 = vsel %vm1902, %v1878, %v1456
        %v1912 = vsel %vm1902, %v1879, %v1458
        %v1913 = vsel %vm1902, %v1880, %v1460
        %v1914 = vsel %vm1902, %v1881, %v1462
        %v1915 = vsel %vm1902, %v1882, %v1464
        %v1916 = vsel %vm1902, %v1883, %v1466
        %v1917 = vsel %vm1902, %v1884, %v1468
        %v1918 = vsel %vm1902, %v1885, %v1470
        %v1919 = vsel %vm1902, %v1886, %v1472
        %v1920 = vsel %vm1902, %v1887, %v1474
        %v1921 = vsel %vm1902, %v1888, %v1476
        %v1922 = vsel %vm1902, %v1889, %v1478
        %v1923 = vsel %vm1902, %v1890, %v1480
        %v1924 = vsel %vm1902, %v1891, %v1482
        %v1925 = vsel %vm1902, %v1892, %v1484
        %v1926 = vsel %vm1902, %v1893, %v1486
        %v1927 = vsel %vm1902, %v1894, %v1488
        %v1928 = vsel %vm1902, %v1895, %v1490
        %v1929 = vsel %vm1902, %v1896, %v1492
        %v1930 = vsel %vm1902, %v1897, %v1494
        %v1931 = vsel %vm1902, %v1898, %v1496
        %v1932 = vsel %vm1902, %v1899, %v1498
        %v1933 = vsel %vm1902, %v1900, %v1500
        %v1934 = vsel %vm1902, %v1901, %v1502
        %vm1935 = vcmask 228352
        %v1936 = vsel %vm1935, %v1903, %v1542
        %v1937 = vsel %vm1935, %v1904, %v1544
        %v1938 = vsel %vm1935, %v1905, %v1546
        %v1939 = vsel %vm1935, %v1906, %v1548
        %v1940 = vsel %vm1935, %v1907, %v1550
        %v1941 = vsel %vm1935, %v1908, %v1552
        %v1942 = vsel %vm1935, %v1909, %v1554
        %v1943 = vsel %vm1935, %v1910, %v1556
        %v1944 = vsel %vm1935, %v1911, %v1558
        %v1945 = vsel %vm1935, %v1912, %v1560
        %v1946 = vsel %vm1935, %v1913, %v1562
        %v1947 = vsel %vm1935, %v1914, %v1564
        %v1948 = vsel %vm1935, %v1915, %v1566
        %v1949 = vsel %vm1935, %v1916, %v1568
        %v1950 = vsel %vm1935, %v1917, %v1570
        %v1951 = vsel %vm1935, %v1918, %v1572
        %v1952 = vsel %vm1935, %v1919, %v1574
        %v1953 = vsel %vm1935, %v1920, %v1576
        %v1954 = vsel %vm1935, %v1921, %v1578
        %v1955 = vsel %vm1935, %v1922, %v1580
        %v1956 = vsel %vm1935, %v1923, %v1582
        %v1957 = vsel %vm1935, %v1924, %v1584
        %v1958 = vsel %vm1935, %v1925, %v1586
        %v1959 = vsel %vm1935, %v1926, %v1588
        %v1960 = vsel %vm1935, %v1927, %v1590
        %v1961 = vsel %vm1935, %v1928, %v1592
        %v1962 = vsel %vm1935, %v1929, %v1594
        %v1963 = vsel %vm1935, %v1930, %v1596
        %v1964 = vsel %vm1935, %v1931, %v1598
        %v1965 = vsel %vm1935, %v1932, %v1600
        %v1966 = vsel %vm1935, %v1933, %v1602
        %v1967 = vsel %vm1935, %v1934, %v1604
        %vm1968 = vcmask 261120
        %v1969 = vsel %vm1968, %v1936, %v1643
        %v1970 = vsel %vm1968, %v1937, %v1645
        %v1971 = vsel %vm1968, %v1938, %v1647
        %v1972 = vsel %vm1968, %v1939, %v1649
        %v1973 = vsel %vm1968, %v1940, %v1651
        %v1974 = vsel %vm1968, %v1941, %v1653
        %v1975 = vsel %vm1968, %v1942, %v1655
        %v1976 = vsel %vm1968, %v1943, %v1657
        %v1977 = vsel %vm1968, %v1944, %v1659
        %v1978 = vsel %vm1968, %v1945, %v1661
        %v1979 = vsel %vm1968, %v1946, %v1663
        %v1980 = vsel %vm1968, %v1947, %v1665
        %v1981 = vsel %vm1968, %v1948, %v1667
        %v1982 = vsel %vm1968, %v1949, %v1669
        %v1983 = vsel %vm1968, %v1950, %v1671
        %v1984 = vsel %vm1968, %v1951, %v1673
        %v1985 = vsel %vm1968, %v1952, %v1675
        %v1986 = vsel %vm1968, %v1953, %v1677
        %v1987 = vsel %vm1968, %v1954, %v1679
        %v1988 = vsel %vm1968, %v1955, %v1681
        %v1989 = vsel %vm1968, %v1956, %v1683
        %v1990 = vsel %vm1968, %v1957, %v1685
        %v1991 = vsel %vm1968, %v1958, %v1687
        %v1992 = vsel %vm1968, %v1959, %v1689
        %v1993 = vsel %vm1968, %v1960, %v1691
        %v1994 = vsel %vm1968, %v1961, %v1693
        %v1995 = vsel %vm1968, %v1962, %v1695
        %v1996 = vsel %vm1968, %v1963, %v1697
        %v1997 = vsel %vm1968, %v1964, %v1699
        %v1998 = vsel %vm1968, %v1965, %v1701
        %v1999 = vsel %vm1968, %v1966, %v1703
        %v2000 = vsel %vm1968, %v1967, %v1705
        %v2001 = vld [vmem:[%s4] sm:$0xff]
        %v2002 = vld [vmem:[%s4 + $0x8] sm:$0xff]
        %v2003 = vld [vmem:[%s4 + $0x10] sm:$0xff]
        %v2004 = vld [vmem:[%s4 + $0x18] sm:$0xff]
        %v2005 = vld [vmem:[%s4 + $0x20] sm:$0xf]
        %v2006 = vld [vmem:[%s5] sm:$0x1]
        %v2008 = vperm.slane %v2006, 0
        %vm2010 = vcmask 293888
        %v2012 = vsel %vm2010, %v1969, 0
        %v2015 = vsel %vm2010, %v1970, 0
        %v2018 = vsel %vm2010, %v1971, 0
        %v2021 = vsel %vm2010, %v1972, 0
        %v2024 = vsel %vm2010, %v1973, 0
        %v2027 = vsel %vm2010, %v1974, 0
        %v2030 = vsel %vm2010, %v1975, 0
        %v2033 = vsel %vm2010, %v1976, 0
        %v2036 = vsel %vm2010, %v1977, 0
        %v2039 = vsel %vm2010, %v1978, 0
        %v2042 = vsel %vm2010, %v1979, 0
        %v2045 = vsel %vm2010, %v1980, 0
        %v2048 = vsel %vm2010, %v1981, 0
        %v2051 = vsel %vm2010, %v1982, 0
        %v2054 = vsel %vm2010, %v1983, 0
        %v2057 = vsel %vm2010, %v1984, 0
        %v2060 = vsel %vm2010, %v1985, 0
        %v2063 = vsel %vm2010, %v1986, 0
        %v2066 = vsel %vm2010, %v1987, 0
        %v2069 = vsel %vm2010, %v1988, 0
        %v2072 = vsel %vm2010, %v1989, 0
        %v2075 = vsel %vm2010, %v1990, 0
        %v2078 = vsel %vm2010, %v1991, 0
        %v2081 = vsel %vm2010, %v1992, 0
        %v2084 = vsel %vm2010, %v1993, 0
        %v2087 = vsel %vm2010, %v1994, 0
        %v2090 = vsel %vm2010, %v1995, 0
        %v2093 = vsel %vm2010, %v1996, 0
        %v2096 = vsel %vm2010, %v1997, 0
        %v2099 = vsel %vm2010, %v1998, 0
        %v2102 = vsel %vm2010, %v1999, 0
        %v2105 = vsel %vm2010, %v2000, 0
        %vm2107 = vcmask 1043456
        %v2109 = vsel %vm2107, %v2005, 0
        %2111 = vmatpush.msra.mxu0 0.0
        %2112 = vmatpush.msra.mxu0 0.0
        %2113 = vmatpush.msra.mxu0 0.0
        %2114 = vmatpush.msra.mxu0 0.0
        %2115 = vmatpush.msra.mxu0 0.0
        %2116 = vmatpush.msra.mxu0 0.0
        %2117 = vmatpush.msra.mxu0 0.0
        %2118 = vmatpush.msra.mxu0 0.0
        %2119 = vmatpush.msra.mxu0 0.0
        %2120 = vmatpush.msra.mxu0 0.0
        %2121 = vmatpush.msra.mxu0 0.0
        %2122 = vmatpush.msra.mxu0 %v2109
        %2123 = vmatpush.msra.mxu0 %v2004
        %2124 = vmatpush.msra.mxu0 %v2003
        %2125 = vmatpush.msra.mxu0 %v2002
        %2126 = vmatpush.msra.mxu0 %v2001
        %2127 = vmatmul.f32.gmra.mxu0 %v2012
        %v2128 = vpop.f32.mrf.mxu0
        %v2129 = vadd.f32 %v2008, %v2128
        %2130 = vmatmul.f32.gmra.mxu0 %v2015
        %v2131 = vpop.f32.mrf.mxu0
        %v2132 = vadd.f32 %v2008, %v2131
        %2133 = vmatmul.f32.gmra.mxu0 %v2018
        %v2134 = vpop.f32.mrf.mxu0
        %v2135 = vadd.f32 %v2008, %v2134
        %2136 = vmatmul.f32.gmra.mxu0 %v2021
        %v2137 = vpop.f32.mrf.mxu0
        %v2138 = vadd.f32 %v2008, %v2137
        %2139 = vmatmul.f32.gmra.mxu0 %v2024
        %v2140 = vpop.f32.mrf.mxu0
        %v2141 = vadd.f32 %v2008, %v2140
        %2142 = vmatmul.f32.gmra.mxu0 %v2027
        %v2143 = vpop.f32.mrf.mxu0
        %v2144 = vadd.f32 %v2008, %v2143
        %2145 = vmatmul.f32.gmra.mxu0 %v2030
        %v2146 = vpop.f32.mrf.mxu0
        %v2147 = vadd.f32 %v2008, %v2146
        %2148 = vmatmul.f32.gmra.mxu0 %v2033
        %v2149 = vpop.f32.mrf.mxu0
        %v2150 = vadd.f32 %v2008, %v2149
        %2151 = vmatmul.f32.gmra.mxu0 %v2036
        %v2152 = vpop.f32.mrf.mxu0
        %v2153 = vadd.f32 %v2008, %v2152
        %2154 = vmatmul.f32.gmra.mxu0 %v2039
        %v2155 = vpop.f32.mrf.mxu0
        %v2156 = vadd.f32 %v2008, %v2155
        %2157 = vmatmul.f32.gmra.mxu0 %v2042
        %v2158 = vpop.f32.mrf.mxu0
        %v2159 = vadd.f32 %v2008, %v2158
        %2160 = vmatmul.f32.gmra.mxu0 %v2045
        %v2161 = vpop.f32.mrf.mxu0
        %v2162 = vadd.f32 %v2008, %v2161
        %2163 = vmatmul.f32.gmra.mxu0 %v2048
        %v2164 = vpop.f32.mrf.mxu0
        %v2165 = vadd.f32 %v2008, %v2164
        %2166 = vmatmul.f32.gmra.mxu0 %v2051
        %v2167 = vpop.f32.mrf.mxu0
        %v2168 = vadd.f32 %v2008, %v2167
        %2169 = vmatmul.f32.gmra.mxu0 %v2054
        %v2170 = vpop.f32.mrf.mxu0
        %v2171 = vadd.f32 %v2008, %v2170
        %2172 = vmatmul.f32.gmra.mxu0 %v2057
        %v2173 = vpop.f32.mrf.mxu0
        %v2174 = vadd.f32 %v2008, %v2173
        %2175 = vmatmul.f32.gmra.mxu0 %v2060
        %v2176 = vpop.f32.mrf.mxu0
        %v2177 = vadd.f32 %v2008, %v2176
        %2178 = vmatmul.f32.gmra.mxu0 %v2063
        %v2179 = vpop.f32.mrf.mxu0
        %v2180 = vadd.f32 %v2008, %v2179
        %2181 = vmatmul.f32.gmra.mxu0 %v2066
        %v2182 = vpop.f32.mrf.mxu0
        %v2183 = vadd.f32 %v2008, %v2182
        %2184 = vmatmul.f32.gmra.mxu0 %v2069
        %v2185 = vpop.f32.mrf.mxu0
        %v2186 = vadd.f32 %v2008, %v2185
        %2187 = vmatmul.f32.gmra.mxu0 %v2072
        %v2188 = vpop.f32.mrf.mxu0
        %v2189 = vadd.f32 %v2008, %v2188
        %2190 = vmatmul.f32.gmra.mxu0 %v2075
        %v2191 = vpop.f32.mrf.mxu0
        %v2192 = vadd.f32 %v2008, %v2191
        %2193 = vmatmul.f32.gmra.mxu0 %v2078
        %v2194 = vpop.f32.mrf.mxu0
        %v2195 = vadd.f32 %v2008, %v2194
        %2196 = vmatmul.f32.gmra.mxu0 %v2081
        %v2197 = vpop.f32.mrf.mxu0
        %v2198 = vadd.f32 %v2008, %v2197
        %2199 = vmatmul.f32.gmra.mxu0 %v2084
        %v2200 = vpop.f32.mrf.mxu0
        %v2201 = vadd.f32 %v2008, %v2200
        %2202 = vmatmul.f32.gmra.mxu0 %v2087
        %v2203 = vpop.f32.mrf.mxu0
        %v2204 = vadd.f32 %v2008, %v2203
        %2205 = vmatmul.f32.gmra.mxu0 %v2090
        %v2206 = vpop.f32.mrf.mxu0
        %v2207 = vadd.f32 %v2008, %v2206
        %2208 = vmatmul.f32.gmra.mxu0 %v2093
        %v2209 = vpop.f32.mrf.mxu0
        %v2210 = vadd.f32 %v2008, %v2209
        %2211 = vmatmul.f32.gmra.mxu0 %v2096
        %v2212 = vpop.f32.mrf.mxu0
        %v2213 = vadd.f32 %v2008, %v2212
        %2214 = vmatmul.f32.gmra.mxu0 %v2099
        %v2215 = vpop.f32.mrf.mxu0
        %v2216 = vadd.f32 %v2008, %v2215
        %2217 = vmatmul.f32.gmra.mxu0 %v2102
        %v2218 = vpop.f32.mrf.mxu0
        %v2219 = vadd.f32 %v2008, %v2218
        %2220 = vmatmul.f32.gmra.mxu0 %v2105
        %v2221 = vpop.f32.mrf.mxu0
        %v2222 = vadd.f32 %v2008, %v2221
        %2223 = vdwg.mxu0
        %v2224 = vmax.f32 %v2129, 0.0
        %v2225 = vmax.f32 %v2132, 0.0
        %v2226 = vmax.f32 %v2135, 0.0
        %v2227 = vmax.f32 %v2138, 0.0
        %v2228 = vmax.f32 %v2141, 0.0
        %v2229 = vmax.f32 %v2144, 0.0
        %v2230 = vmax.f32 %v2147, 0.0
        %v2231 = vmax.f32 %v2150, 0.0
        %v2232 = vmax.f32 %v2153, 0.0
        %v2233 = vmax.f32 %v2156, 0.0
        %v2234 = vmax.f32 %v2159, 0.0
        %v2235 = vmax.f32 %v2162, 0.0
        %v2236 = vmax.f32 %v2165, 0.0
        %v2237 = vmax.f32 %v2168, 0.0
        %v2238 = vmax.f32 %v2171, 0.0
        %v2239 = vmax.f32 %v2174, 0.0
        %v2240 = vmax.f32 %v2177, 0.0
        %v2241 = vmax.f32 %v2180, 0.0
        %v2242 = vmax.f32 %v2183, 0.0
        %v2243 = vmax.f32 %v2186, 0.0
        %v2244 = vmax.f32 %v2189, 0.0
        %v2245 = vmax.f32 %v2192, 0.0
        %v2246 = vmax.f32 %v2195, 0.0
        %v2247 = vmax.f32 %v2198, 0.0
        %v2248 = vmax.f32 %v2201, 0.0
        %v2249 = vmax.f32 %v2204, 0.0
        %v2250 = vmax.f32 %v2207, 0.0
        %v2251 = vmax.f32 %v2210, 0.0
        %v2252 = vmax.f32 %v2213, 0.0
        %v2253 = vmax.f32 %v2216, 0.0
        %v2254 = vmax.f32 %v2219, 0.0
        %v2255 = vmax.f32 %v2222, 0.0
        %v2256 = vsel %vm1968, %v2224, 0.0
        %v2257 = vsel %vm1968, %v2225, 0.0
        %v2258 = vadd.f32 %v2256, %v2257
        %v2259 = vsel %vm1968, %v2226, 0.0
        %v2260 = vadd.f32 %v2258, %v2259
        %v2261 = vsel %vm1968, %v2227, 0.0
        %v2262 = vadd.f32 %v2260, %v2261
        %v2263 = vsel %vm1968, %v2228, 0.0
        %v2264 = vadd.f32 %v2262, %v2263
        %v2265 = vsel %vm1968, %v2229, 0.0
        %v2266 = vadd.f32 %v2264, %v2265
        %v2267 = vsel %vm1968, %v2230, 0.0
        %v2268 = vadd.f32 %v2266, %v2267
        %v2269 = vsel %vm1968, %v2231, 0.0
        %v2270 = vadd.f32 %v2268, %v2269
        %v2271 = vsel %vm1968, %v2232, 0.0
        %v2272 = vadd.f32 %v2270, %v2271
        %v2273 = vsel %vm1968, %v2233, 0.0
        %v2274 = vadd.f32 %v2272, %v2273
        %v2275 = vsel %vm1968, %v2234, 0.0
        %v2276 = vadd.f32 %v2274, %v2275
        %v2277 = vsel %vm1968, %v2235, 0.0
        %v2278 = vadd.f32 %v2276, %v2277
        %v2279 = vsel %vm1968, %v2236, 0.0
        %v2280 = vadd.f32 %v2278, %v2279
        %v2281 = vsel %vm1968, %v2237, 0.0
        %v2282 = vadd.f32 %v2280, %v2281
        %v2283 = vsel %vm1968, %v2238, 0.0
        %v2284 = vadd.f32 %v2282, %v2283
        %v2285 = vsel %vm1968, %v2239, 0.0
        %v2286 = vadd.f32 %v2284, %v2285
        %v2287 = vsel %vm1968, %v2240, 0.0
        %v2288 = vadd.f32 %v2286, %v2287
        %v2289 = vsel %vm1968, %v2241, 0.0
        %v2290 = vadd.f32 %v2288, %v2289
        %v2291 = vsel %vm1968, %v2242, 0.0
        %v2292 = vadd.f32 %v2290, %v2291
        %v2293 = vsel %vm1968, %v2243, 0.0
        %v2294 = vadd.f32 %v2292, %v2293
        %v2295 = vsel %vm1968, %v2244, 0.0
        %v2296 = vadd.f32 %v2294, %v2295
        %v2297 = vsel %vm1968, %v2245, 0.0
        %v2298 = vadd.f32 %v2296, %v2297
        %v2299 = vsel %vm1968, %v2246, 0.0
        %v2300 = vadd.f32 %v2298, %v2299
        %v2301 = vsel %vm1968, %v2247, 0.0
        %v2302 = vadd.f32 %v2300, %v2301
        %v2303 = vsel %vm1968, %v2248, 0.0
        %v2304 = vadd.f32 %v2302, %v2303
        %v2305 = vsel %vm1968, %v2249, 0.0
        %v2306 = vadd.f32 %v2304, %v2305
        %v2307 = vsel %vm1968, %v2250, 0.0
        %v2308 = vadd.f32 %v2306, %v2307
        %v2309 = vsel %vm1968, %v2251, 0.0
        %v2310 = vadd.f32 %v2308, %v2309
        %v2311 = vsel %vm1968, %v2252, 0.0
        %v2312 = vadd.f32 %v2310, %v2311
        %v2313 = vsel %vm1968, %v2253, 0.0
        %v2314 = vadd.f32 %v2312, %v2313
        %v2315 = vsel %vm1968, %v2254, 0.0
        %v2316 = vadd.f32 %v2314, %v2315
        %v2317 = vsel %vm1968, %v2255, 0.0
        %v2318 = vadd.f32 %v2316, %v2317
        %v2319 = vrot.slane %v2318, 4
        %v2320 = vadd.f32 %v2318, %v2319
        %v2321 = vrot.slane %v2320, 2
        %v2322 = vadd.f32 %v2320, %v2321
        %v2323 = vrot.slane %v2322, 1
        %v2324 = vadd.f32 %v2322, %v2323
        %v2325 = vrcp.pop 256.0
        %v2326 = vmul.f32 256.0, %v2325
        %v2327 = vsub.f32 1.0, %v2326
        %v2328 = vmul.f32 %v2325, %v2327
        %v2329 = vadd.f32 %v2325, %v2328
        %vm2330 = vweird.f32 %v2325
        %v2331 = vsel %vm2330, %v2325, %v2329
        %v2332 = vmul.f32 %v2324, %v2331
        %v2333 = vld [vmem:[%s6] sm:$0xff]
        %v2334 = vld [vmem:[%s6 + $0x8] sm:$0xff]
        %v2335 = vld [vmem:[%s6 + $0x10] sm:$0xff]
        %v2336 = vld [vmem:[%s6 + $0x18] sm:$0xff]
        %v2337 = vld [vmem:[%s7] sm:$0x1]
        %v2339 = vsel %vm1968, %v2332, 0
        %2341 = vmatpush.msra.mxu0 0.0
        %2342 = vmatpush.msra.mxu0 0.0
        %2343 = vmatpush.msra.mxu0 0.0
        %2344 = vmatpush.msra.mxu0 0.0
        %2345 = vmatpush.msra.mxu0 0.0
        %2346 = vmatpush.msra.mxu0 0.0
        %2347 = vmatpush.msra.mxu0 0.0
        %2348 = vmatpush.msra.mxu0 0.0
        %2349 = vmatpush.msra.mxu0 0.0
        %2350 = vmatpush.msra.mxu0 0.0
        %2351 = vmatpush.msra.mxu0 0.0
        %2352 = vmatpush.msra.mxu0 0.0
        %2353 = vmatpush.msra.mxu0 %v2336
        %2354 = vmatpush.msra.mxu0 %v2335
        %2355 = vmatpush.msra.mxu0 %v2334
        %2356 = vmatpush.msra.mxu0 %v2333
        %2357 = vmatmul.f32.gmra.mxu0 %v2339
        %v2358 = vpop.f32.mrf.mxu0
        %v2359 = vadd.f32 %v2337, %v2358
        %2360 = vdwg.mxu0
        %v2361 = vld [vmem:[%s8] sm:$0xff]
        %v2362 = vld [vmem:[%s8 + $0x8] sm:$0xff]
        %v2363 = vld [vmem:[%s8 + $0x10] sm:$0xff]
        %v2364 = vld [vmem:[%s8 + $0x18] sm:$0xff]
        %v2365 = vld [vmem:[%s9] sm:$0x1]
        %2366 = vmatpush.msra.mxu0 0.0
        %2367 = vmatpush.msra.mxu0 0.0
        %2368 = vmatpush.msra.mxu0 0.0
        %2369 = vmatpush.msra.mxu0 0.0
        %2370 = vmatpush.msra.mxu0 0.0
        %2371 = vmatpush.msra.mxu0 0.0
        %2372 = vmatpush.msra.mxu0 0.0
        %2373 = vmatpush.msra.mxu0 0.0
        %2374 = vmatpush.msra.mxu0 0.0
        %2375 = vmatpush.msra.mxu0 0.0
        %2376 = vmatpush.msra.mxu0 0.0
        %2377 = vmatpush.msra.mxu0 0.0
        %2378 = vmatpush.msra.mxu0 %v2364
        %2379 = vmatpush.msra.mxu0 %v2363
        %2380 = vmatpush.msra.mxu0 %v2362
        %2381 = vmatpush.msra.mxu0 %v2361
        %2382 = vmatmul.f32.gmra.mxu0 %v2339
        %v2383 = vpop.f32.mrf.mxu0
        %v2384 = vadd.f32 %v2365, %v2383
        %2385 = vdwg.mxu0
        %v2386 = vlaneseq
        %v2387 = vshrl.u32 %v2386, 7
        %v2388 = vadd.s32 %v2387, 8
        %v2389 = vadd.s32 %v2387, 16
        %v2390 = vadd.s32 %v2387, 24
        %v2391 = vlaneseq
        %v2392 = vand.u32 %v2391, 127
        %vm2393 = vcmp.eq.s32.totalorder %v2387, %v2392
        %vm2394 = vcmp.eq.s32.totalorder %v2388, %v2392
        %vm2395 = vcmp.eq.s32.totalorder %v2389, %v2392
        %vm2396 = vcmp.eq.s32.totalorder %v2390, %v2392
        %v2397 = vperm.slane %v2359, 0
        %v2398 = vsel %vm2393, %v2397, 0.0
        %v2399 = vsel %vm2394, %v2397, 0.0
        %v2400 = vsel %vm2395, %v2397, 0.0
        %v2401 = vsel %vm2396, %v2397, 0.0
        %v2402 = vsel %vm1968, %v2398, 0.0
        %2403 = vadd.xlane.f32.xlu0 %v2402
        %v2404 = vpop.xlane.xlu0 %2403
        %v2405 = vsel %vm1968, %v2399, 0.0
        %2406 = vadd.xlane.f32.xlu0 %v2405
        %v2407 = vpop.xlane.xlu0 %2406
        %v2408 = vsel %vm1968, %v2400, 0.0
        %2409 = vadd.xlane.f32.xlu0 %v2408
        %v2410 = vpop.xlane.xlu0 %2409
        %v2411 = vsel %vm1968, %v2401, 0.0
        %2412 = vadd.xlane.f32.xlu0 %v2411
        %v2413 = vpop.xlane.xlu0 %2412
        %v2414 = vperm.slane %v2384, 0
        %v2415 = vsel %vm2393, %v2414, 0.0
        %v2416 = vsel %vm2394, %v2414, 0.0
        %v2417 = vsel %vm2395, %v2414, 0.0
        %v2418 = vsel %vm2396, %v2414, 0.0
        %v2419 = vsel %vm1968, %v2415, 0.0
        %2420 = vadd.xlane.f32.xlu0 %v2419
        %v2421 = vpop.xlane.xlu0 %2420
        %v2422 = vsel %vm1968, %v2416, 0.0
        %2423 = vadd.xlane.f32.xlu0 %v2422
        %v2424 = vpop.xlane.xlu0 %2423
        %v2425 = vsel %vm1968, %v2417, 0.0
        %2426 = vadd.xlane.f32.xlu0 %v2425
        %v2427 = vpop.xlane.xlu0 %2426
        %v2428 = vsel %vm1968, %v2418, 0.0
        %2429 = vadd.xlane.f32.xlu0 %v2428
        %v2430 = vpop.xlane.xlu0 %2429
        %v2431 = vld [vmem:[%s10] sm:$0xff]
        %v2432 = vld [vmem:[%s10 + $0x8] sm:$0xff]
        %v2433 = vld [vmem:[%s10 + $0x10] sm:$0xff]
        %v2434 = vld [vmem:[%s10 + $0x18] sm:$0xff]
        %v2435 = vmul.f32 %v2431, %v2404
        %v2436 = vmul.f32 %v2432, %v2407
        %v2437 = vmul.f32 %v2433, %v2410
        %v2438 = vmul.f32 %v2434, %v2413
        %s2439 = scalar_lea.vmem %s10, 32
        %v2440 = vld [vmem:[%s2439] sm:$0xff]
        %v2441 = vld [vmem:[%s2439 + $0x8] sm:$0xff]
        %v2442 = vld [vmem:[%s2439 + $0x10] sm:$0xff]
        %v2443 = vld [vmem:[%s2439 + $0x18] sm:$0xff]
        %v2444 = vmul.f32 %v2440, %v2404
        %v2445 = vmul.f32 %v2441, %v2407
        %v2446 = vmul.f32 %v2442, %v2410
        %v2447 = vmul.f32 %v2443, %v2413
        %s2448 = scalar_lea.vmem %s10, 64
        %v2449 = vld [vmem:[%s2448] sm:$0xff]
        %v2450 = vld [vmem:[%s2448 + $0x8] sm:$0xff]
        %v2451 = vld [vmem:[%s2448 + $0x10] sm:$0xff]
        %v2452 = vld [vmem:[%s2448 + $0x18] sm:$0xff]
        %v2453 = vmul.f32 %v2449, %v2404
        %v2454 = vmul.f32 %v2450, %v2407
        %v2455 = vmul.f32 %v2451, %v2410
        %v2456 = vmul.f32 %v2452, %v2413
        %s2457 = scalar_lea.vmem %s10, 96
        %v2458 = vld [vmem:[%s2457] sm:$0xff]
        %v2459 = vld [vmem:[%s2457 + $0x8] sm:$0xff]
        %v2460 = vld [vmem:[%s2457 + $0x10] sm:$0xff]
        %v2461 = vld [vmem:[%s2457 + $0x18] sm:$0xff]
        %v2462 = vmul.f32 %v2458, %v2404
        %v2463 = vmul.f32 %v2459, %v2407
        %v2464 = vmul.f32 %v2460, %v2410
        %v2465 = vmul.f32 %v2461, %v2413
        %s2466 = scalar_lea.vmem %s10, 128
        %v2467 = vld [vmem:[%s2466] sm:$0xff]
        %v2468 = vld [vmem:[%s2466 + $0x8] sm:$0xff]
        %v2469 = vld [vmem:[%s2466 + $0x10] sm:$0xff]
        %v2470 = vld [vmem:[%s2466 + $0x18] sm:$0xff]
        %v2471 = vmul.f32 %v2467, %v2404
        %v2472 = vmul.f32 %v2468, %v2407
        %v2473 = vmul.f32 %v2469, %v2410
        %v2474 = vmul.f32 %v2470, %v2413
        %s2475 = scalar_lea.vmem %s10, 160
        %v2476 = vld [vmem:[%s2475] sm:$0xff]
        %v2477 = vld [vmem:[%s2475 + $0x8] sm:$0xff]
        %v2478 = vld [vmem:[%s2475 + $0x10] sm:$0xff]
        %v2479 = vld [vmem:[%s2475 + $0x18] sm:$0xff]
        %v2480 = vmul.f32 %v2476, %v2404
        %v2481 = vmul.f32 %v2477, %v2407
        %v2482 = vmul.f32 %v2478, %v2410
        %v2483 = vmul.f32 %v2479, %v2413
        %s2484 = scalar_lea.vmem %s10, 192
        %v2485 = vld [vmem:[%s2484] sm:$0xff]
        %v2486 = vld [vmem:[%s2484 + $0x8] sm:$0xff]
        %v2487 = vld [vmem:[%s2484 + $0x10] sm:$0xff]
        %v2488 = vld [vmem:[%s2484 + $0x18] sm:$0xff]
        %v2489 = vmul.f32 %v2485, %v2404
        %v2490 = vmul.f32 %v2486, %v2407
        %v2491 = vmul.f32 %v2487, %v2410
        %v2492 = vmul.f32 %v2488, %v2413
        %s2493 = scalar_lea.vmem %s10, 224
        %v2494 = vld [vmem:[%s2493] sm:$0xff]
        %v2495 = vld [vmem:[%s2493 + $0x8] sm:$0xff]
        %v2496 = vld [vmem:[%s2493 + $0x10] sm:$0xff]
        %v2497 = vld [vmem:[%s2493 + $0x18] sm:$0xff]
        %v2498 = vmul.f32 %v2494, %v2404
        %v2499 = vmul.f32 %v2495, %v2407
        %v2500 = vmul.f32 %v2496, %v2410
        %v2501 = vmul.f32 %v2497, %v2413
        %s2502 = scalar_lea.vmem %s10, 256
        %v2503 = vld [vmem:[%s2502] sm:$0xff]
        %v2504 = vld [vmem:[%s2502 + $0x8] sm:$0xff]
        %v2505 = vld [vmem:[%s2502 + $0x10] sm:$0xff]
        %v2506 = vld [vmem:[%s2502 + $0x18] sm:$0xff]
        %v2507 = vmul.f32 %v2503, %v2404
        %v2508 = vmul.f32 %v2504, %v2407
        %v2509 = vmul.f32 %v2505, %v2410
        %v2510 = vmul.f32 %v2506, %v2413
        %v2511 = vld [vmem:[%s11] sm:$0xff]
        %v2512 = vld [vmem:[%s11 + $0x8] sm:$0xff]
        %v2513 = vld [vmem:[%s11 + $0x10] sm:$0xff]
        %v2514 = vld [vmem:[%s11 + $0x18] sm:$0xff]
        %v2515 = vmul.f32 %v2511, %v2404
        %v2516 = vmul.f32 %v2512, %v2407
        %v2517 = vmul.f32 %v2513, %v2410
        %v2518 = vmul.f32 %v2514, %v2413
        %v2519 = vadd.f32 %v2515, %v2421
        %v2520 = vadd.f32 %v2516, %v2424
        %v2521 = vadd.f32 %v2517, %v2427
        %v2522 = vadd.f32 %v2518, %v2430
        %v2523 = vld [vmem:[%s486] sm:$0xff]
        %v2524 = vld [vmem:[%s486 + $0x8] sm:$0xff]
        %v2525 = vld [vmem:[%s486 + $0x10] sm:$0xff]
        %v2526 = vmul.f32 %v2523, 0.017124753
        %v2527 = vadd.f32 %v2526, -2.117904
        %v2528 = vmul.f32 %v2524, 0.017507004
        %v2529 = vadd.f32 %v2528, -2.0357144
        %v2530 = vmul.f32 %v2525, 0.017429193
        %v2531 = vadd.f32 %v2530, -1.8044444
        %2532 = vrot.lane.b32.xlu0 %v2527, 1
        %v2533 = vpop.permute.xlu0 %2532
        %vm2534 = vcmp.eq.s32.totalorder %v2392, 0
        %v2535 = vsel %vm2534, 0.0, %v2533
        %2536 = vrot.lane.b32.xlu0 %v2529, 1
        %v2537 = vpop.permute.xlu0 %2536
        %v2538 = vsel %vm2534, 0.0, %v2537
        %2539 = vrot.lane.b32.xlu0 %v2531, 1
        %v2540 = vpop.permute.xlu0 %2539
        %v2541 = vsel %vm2534, 0.0, %v2540
        %2542 = vrot.lane.b32.xlu0 %v2527, 127
        %v2543 = vpop.permute.xlu0 %2542
        %vm2544 = vcmp.eq.s32.totalorder %v2392, 127
        %v2545 = vsel %vm2544, 0.0, %v2543
        %2546 = vrot.lane.b32.xlu0 %v2529, 127
        %v2547 = vpop.permute.xlu0 %2546
        %v2548 = vsel %vm2544, 0.0, %v2547
        %2549 = vrot.lane.b32.xlu0 %v2531, 127
        %v2550 = vpop.permute.xlu0 %2549
        %v2551 = vsel %vm2544, 0.0, %v2550
        %s2552 = sld [smem:[#allocation3]]
        %2554 = vset.pattern.permute.xlu0 0
        %2555 = vperm.xlu0 %2554, %v2435
        %v2556 = vpop.permute.xlu0 %2555
        %2559 = vset.pattern.permute.xlu0 0
        %2560 = vperm.xlu0 %2559, %v2436
        %v2561 = vpop.permute.xlu0 %2560
        %2564 = vset.pattern.permute.xlu0 0
        %2565 = vperm.xlu0 %2564, %v2437
        %v2566 = vpop.permute.xlu0 %2565
        %2569 = vset.pattern.permute.xlu0 0
        %2570 = vperm.xlu0 %2569, %v2438
        %v2571 = vpop.permute.xlu0 %2570
        %v2573 = vperm.slane %v2535, 0
        %v2574 = vmul.f32 %v2556, %v2573
        %v2575 = vmul.f32 %v2561, %v2573
        %v2576 = vmul.f32 %v2566, %v2573
        %v2577 = vmul.f32 %v2571, %v2573
        %2579 = vset.pattern.permute.xlu0 0
        %2580 = vperm.xlu0 %2579, %v2444
        %v2581 = vpop.permute.xlu0 %2580
        %2584 = vset.pattern.permute.xlu0 0
        %2585 = vperm.xlu0 %2584, %v2445
        %v2586 = vpop.permute.xlu0 %2585
        %2589 = vset.pattern.permute.xlu0 0
        %2590 = vperm.xlu0 %2589, %v2446
        %v2591 = vpop.permute.xlu0 %2590
        %2594 = vset.pattern.permute.xlu0 0
        %2595 = vperm.xlu0 %2594, %v2447
        %v2596 = vpop.permute.xlu0 %2595
        %v2598 = vperm.slane %v2538, 0
        %v2599 = vmul.f32 %v2581, %v2598
        %v2600 = vmul.f32 %v2586, %v2598
        %v2601 = vmul.f32 %v2591, %v2598
        %v2602 = vmul.f32 %v2596, %v2598
        %v2603 = vadd.f32 %v2574, %v2599
        %v2604 = vadd.f32 %v2575, %v2600
        %v2605 = vadd.f32 %v2576, %v2601
        %v2606 = vadd.f32 %v2577, %v2602
        %2608 = vset.pattern.permute.xlu0 0
        %2609 = vperm.xlu0 %2608, %v2453
        %v2610 = vpop.permute.xlu0 %2609
        %2613 = vset.pattern.permute.xlu0 0
        %2614 = vperm.xlu0 %2613, %v2454
        %v2615 = vpop.permute.xlu0 %2614
        %2618 = vset.pattern.permute.xlu0 0
        %2619 = vperm.xlu0 %2618, %v2455
        %v2620 = vpop.permute.xlu0 %2619
        %2623 = vset.pattern.permute.xlu0 0
        %2624 = vperm.xlu0 %2623, %v2456
        %v2625 = vpop.permute.xlu0 %2624
        %v2627 = vperm.slane %v2541, 0
        %v2628 = vmul.f32 %v2610, %v2627
        %v2629 = vmul.f32 %v2615, %v2627
        %v2630 = vmul.f32 %v2620, %v2627
        %v2631 = vmul.f32 %v2625, %v2627
        %v2632 = vadd.f32 %v2603, %v2628
        %v2633 = vadd.f32 %v2604, %v2629
        %v2634 = vadd.f32 %v2605, %v2630
        %v2635 = vadd.f32 %v2606, %v2631
        %2637 = vset.pattern.permute.xlu0 0
        %2638 = vperm.xlu0 %2637, %v2462
        %v2639 = vpop.permute.xlu0 %2638
        %2642 = vset.pattern.permute.xlu0 0
        %2643 = vperm.xlu0 %2642, %v2463
        %v2644 = vpop.permute.xlu0 %2643
        %2647 = vset.pattern.permute.xlu0 0
        %2648 = vperm.xlu0 %2647, %v2464
        %v2649 = vpop.permute.xlu0 %2648
        %2652 = vset.pattern.permute.xlu0 0
        %2653 = vperm.xlu0 %2652, %v2465
        %v2654 = vpop.permute.xlu0 %2653
        %v2656 = vperm.slane %v2527, 0
        %v2657 = vmul.f32 %v2639, %v2656
        %v2658 = vmul.f32 %v2644, %v2656
        %v2659 = vmul.f32 %v2649, %v2656
        %v2660 = vmul.f32 %v2654, %v2656
        %v2661 = vadd.f32 %v2632, %v2657
        %v2662 = vadd.f32 %v2633, %v2658
        %v2663 = vadd.f32 %v2634, %v2659
        %v2664 = vadd.f32 %v2635, %v2660
        %2666 = vset.pattern.permute.xlu0 0
        %2667 = vperm.xlu0 %2666, %v2471
        %v2668 = vpop.permute.xlu0 %2667
        %2671 = vset.pattern.permute.xlu0 0
        %2672 = vperm.xlu0 %2671, %v2472
        %v2673 = vpop.permute.xlu0 %2672
        %2676 = vset.pattern.permute.xlu0 0
        %2677 = vperm.xlu0 %2676, %v2473
        %v2678 = vpop.permute.xlu0 %2677
        %2681 = vset.pattern.permute.xlu0 0
        %2682 = vperm.xlu0 %2681, %v2474
        %v2683 = vpop.permute.xlu0 %2682
        %v2685 = vperm.slane %v2529, 0
        %v2686 = vmul.f32 %v2668, %v2685
        %v2687 = vmul.f32 %v2673, %v2685
        %v2688 = vmul.f32 %v2678, %v2685
        %v2689 = vmul.f32 %v2683, %v2685
        %v2690 = vadd.f32 %v2661, %v2686
        %v2691 = vadd.f32 %v2662, %v2687
        %v2692 = vadd.f32 %v2663, %v2688
        %v2693 = vadd.f32 %v2664, %v2689
        %2695 = vset.pattern.permute.xlu0 0
        %2696 = vperm.xlu0 %2695, %v2480
        %v2697 = vpop.permute.xlu0 %2696
        %2700 = vset.pattern.permute.xlu0 0
        %2701 = vperm.xlu0 %2700, %v2481
        %v2702 = vpop.permute.xlu0 %2701
        %2705 = vset.pattern.permute.xlu0 0
        %2706 = vperm.xlu0 %2705, %v2482
        %v2707 = vpop.permute.xlu0 %2706
        %2710 = vset.pattern.permute.xlu0 0
        %2711 = vperm.xlu0 %2710, %v2483
        %v2712 = vpop.permute.xlu0 %2711
        %v2714 = vperm.slane %v2531, 0
        %v2715 = vmul.f32 %v2697, %v2714
        %v2716 = vmul.f32 %v2702, %v2714
        %v2717 = vmul.f32 %v2707, %v2714
        %v2718 = vmul.f32 %v2712, %v2714
        %v2719 = vadd.f32 %v2690, %v2715
        %v2720 = vadd.f32 %v2691, %v2716
        %v2721 = vadd.f32 %v2692, %v2717
        %v2722 = vadd.f32 %v2693, %v2718
        %2724 = vset.pattern.permute.xlu0 0
        %2725 = vperm.xlu0 %2724, %v2489
        %v2726 = vpop.permute.xlu0 %2725
        %2729 = vset.pattern.permute.xlu0 0
        %2730 = vperm.xlu0 %2729, %v2490
        %v2731 = vpop.permute.xlu0 %2730
        %2734 = vset.pattern.permute.xlu0 0
        %2735 = vperm.xlu0 %2734, %v2491
        %v2736 = vpop.permute.xlu0 %2735
        %2739 = vset.pattern.permute.xlu0 0
        %2740 = vperm.xlu0 %2739, %v2492
        %v2741 = vpop.permute.xlu0 %2740
        %v2743 = vperm.slane %v2545, 0
        %v2744 = vmul.f32 %v2726, %v2743
        %v2745 = vmul.f32 %v2731, %v2743
        %v2746 = vmul.f32 %v2736, %v2743
        %v2747 = vmul.f32 %v2741, %v2743
        %v2748 = vadd.f32 %v2719, %v2744
        %v2749 = vadd.f32 %v2720, %v2745
        %v2750 = vadd.f32 %v2721, %v2746
        %v2751 = vadd.f32 %v2722, %v2747
        %2753 = vset.pattern.permute.xlu0 0
        %2754 = vperm.xlu0 %2753, %v2498
        %v2755 = vpop.permute.xlu0 %2754
        %2758 = vset.pattern.permute.xlu0 0
        %2759 = vperm.xlu0 %2758, %v2499
        %v2760 = vpop.permute.xlu0 %2759
        %2763 = vset.pattern.permute.xlu0 0
        %2764 = vperm.xlu0 %2763, %v2500
        %v2765 = vpop.permute.xlu0 %2764
        %2768 = vset.pattern.permute.xlu0 0
        %2769 = vperm.xlu0 %2768, %v2501
        %v2770 = vpop.permute.xlu0 %2769
        %v2772 = vperm.slane %v2548, 0
        %v2773 = vmul.f32 %v2755, %v2772
        %v2774 = vmul.f32 %v2760, %v2772
        %v2775 = vmul.f32 %v2765, %v2772
        %v2776 = vmul.f32 %v2770, %v2772
        %v2777 = vadd.f32 %v2748, %v2773
        %v2778 = vadd.f32 %v2749, %v2774
        %v2779 = vadd.f32 %v2750, %v2775
        %v2780 = vadd.f32 %v2751, %v2776
        %2782 = vset.pattern.permute.xlu0 0
        %2783 = vperm.xlu0 %2782, %v2507
        %v2784 = vpop.permute.xlu0 %2783
        %2787 = vset.pattern.permute.xlu0 0
        %2788 = vperm.xlu0 %2787, %v2508
        %v2789 = vpop.permute.xlu0 %2788
        %2792 = vset.pattern.permute.xlu0 0
        %2793 = vperm.xlu0 %2792, %v2509
        %v2794 = vpop.permute.xlu0 %2793
        %2797 = vset.pattern.permute.xlu0 0
        %2798 = vperm.xlu0 %2797, %v2510
        %v2799 = vpop.permute.xlu0 %2798
        %v2801 = vperm.slane %v2551, 0
        %v2802 = vmul.f32 %v2784, %v2801
        %v2803 = vmul.f32 %v2789, %v2801
        %v2804 = vmul.f32 %v2794, %v2801
        %v2805 = vmul.f32 %v2799, %v2801
        %v2806 = vadd.f32 %v2777, %v2802
        %v2807 = vadd.f32 %v2778, %v2803
        %v2808 = vadd.f32 %v2779, %v2804
        %v2809 = vadd.f32 %v2780, %v2805
        %2811 = vset.pattern.permute.xlu0 0
        %2812 = vperm.xlu0 %2811, %v2519
        %v2813 = vpop.permute.xlu0 %2812
        %2816 = vset.pattern.permute.xlu0 0
        %2817 = vperm.xlu0 %2816, %v2520
        %v2818 = vpop.permute.xlu0 %2817
        %2821 = vset.pattern.permute.xlu0 0
        %2822 = vperm.xlu0 %2821, %v2521
        %v2823 = vpop.permute.xlu0 %2822
        %2826 = vset.pattern.permute.xlu0 0
        %2827 = vperm.xlu0 %2826, %v2522
        %v2828 = vpop.permute.xlu0 %2827
        %v2830 = vadd.f32 %v2806, %v2813
        %v2831 = vadd.f32 %v2807, %v2818
        %v2832 = vadd.f32 %v2808, %v2823
        %v2833 = vadd.f32 %v2809, %v2828
        %v2834 = vmax.f32 %v2830, 0.0
        %v2835 = vmax.f32 %v2831, 0.0
        %v2836 = vmax.f32 %v2832, 0.0
        %v2837 = vmax.f32 %v2833, 0.0
        %v2838 = vld [vmem:[%s12] sm:$0x7]
        %v2840 = vsel %vm1968, %v2838, 0
        %2842 = vmatpush.msra.mxu0 0.0
        %2843 = vmatpush.msra.mxu0 0.0
        %2844 = vmatpush.msra.mxu0 0.0
        %2845 = vmatpush.msra.mxu0 0.0
        %2846 = vmatpush.msra.mxu0 0.0
        %2847 = vmatpush.msra.mxu0 0.0
        %2848 = vmatpush.msra.mxu0 0.0
        %2849 = vmatpush.msra.mxu0 0.0
        %2850 = vmatpush.msra.mxu0 0.0
        %2851 = vmatpush.msra.mxu0 0.0
        %2852 = vmatpush.msra.mxu0 0.0
        %2853 = vmatpush.msra.mxu0 0.0
        %2854 = vmatpush.msra.mxu0 %v2837
        %2855 = vmatpush.msra.mxu0 %v2836
        %2856 = vmatpush.msra.mxu0 %v2835
        %2857 = vmatpush.msra.mxu0 %v2834
        %2858 = vmatmul.f32.gmra.mxu0 %v2840
        %v2859 = vpop.f32.mrf.mxu0
        %v2860 = vadd.f32 0.0, %v2859
        %2861 = vdwg.mxu0
        %2862 = vrot.lane.b32.xlu0 %v2860, 1
        %v2863 = vpop.permute.xlu0 %2862
        %v2864 = vsel %vm2534, 0.0, %v2863
        %v2866 = vrot.slane %v2860, 2
        %2868 = vrot.lane.b32.xlu0 %v2866, 127
        %v2869 = vpop.permute.xlu0 %2868
        %v2870 = vsel %vm2544, 0.0, %v2869
        %v2872 = vrot.slane %v2864, 7
        %v2874 = vadd.f32 %v2860, %v2872
        %v2876 = vrot.slane %v2870, 7
        %v2878 = vadd.f32 %v2874, %v2876
        %v2879 = vstv %s2552
        %v2880 = vadd.f32 %v2878, %v2879
        %v2881 = vxor.u32 %v2880, 2147483648
        %v2882 = vmul.f32 %v2881, 1.442695
        %v2883 = vpow.pop %v2882
        %v2884 = vadd.f32 %v2883, 1.0
        %v2885 = vrcp.pop %v2884
        %v2886 = vmul.f32 %v2884, %v2885
        %v2887 = vsub.f32 1.0, %v2886
        %v2888 = vmul.f32 %v2885, %v2887
        %v2889 = vadd.f32 %v2885, %v2888
        %vm2890 = vweird.f32 %v2884
        %vm2891 = vweird.f32 %v2885
        %vm2892 = vmor %vm2890, %vm2891
        %v2893 = vsel %vm2892, %v2885, %v2889
        %v2894 = vand.u32 2147483647, %v2884
        %vm2895 = vcmp.eq.f32.partialorder %v2894, 8.507059e+37
        %v2896 = vand.u32 %v2884, 2147483648
        %v2897 = vor.u32 1.1754944e-38, %v2896
        %v2898 = vsel %vm2895, %v2897, %v2893
        %v2899 = vmul.f32 1.0, %v2898
        %2900 = vst [vmem:[%s476 - $0x1] sm:$0x2] %v2899
        %v2901 = vperm.slane %v2535, 1
        %v2902 = vmul.f32 %v2556, %v2901
        %v2903 = vmul.f32 %v2561, %v2901
        %v2904 = vmul.f32 %v2566, %v2901
        %v2905 = vmul.f32 %v2571, %v2901
        %v2906 = vperm.slane %v2538, 1
        %v2907 = vmul.f32 %v2581, %v2906
        %v2908 = vmul.f32 %v2586, %v2906
        %v2909 = vmul.f32 %v2591, %v2906
        %v2910 = vmul.f32 %v2596, %v2906
        %v2911 = vadd.f32 %v2902, %v2907
        %v2912 = vadd.f32 %v2903, %v2908
        %v2913 = vadd.f32 %v2904, %v2909
        %v2914 = vadd.f32 %v2905, %v2910
        %v2915 = vperm.slane %v2541, 1
        %v2916 = vmul.f32 %v2610, %v2915
        %v2917 = vmul.f32 %v2615, %v2915
        %v2918 = vmul.f32 %v2620, %v2915
        %v2919 = vmul.f32 %v2625, %v2915
        %v2920 = vadd.f32 %v2911, %v2916
        %v2921 = vadd.f32 %v2912, %v2917
        %v2922 = vadd.f32 %v2913, %v2918
        %v2923 = vadd.f32 %v2914, %v2919
        %v2924 = vperm.slane %v2527, 1
        %v2925 = vmul.f32 %v2639, %v2924
        %v2926 = vmul.f32 %v2644, %v2924
        %v2927 = vmul.f32 %v2649, %v2924
        %v2928 = vmul.f32 %v2654, %v2924
        %v2929 = vadd.f32 %v2920, %v2925
        %v2930 = vadd.f32 %v2921, %v2926
        %v2931 = vadd.f32 %v2922, %v2927
        %v2932 = vadd.f32 %v2923, %v2928
        %v2933 = vperm.slane %v2529, 1
        %v2934 = vmul.f32 %v2668, %v2933
        %v2935 = vmul.f32 %v2673, %v2933
        %v2936 = vmul.f32 %v2678, %v2933
        %v2937 = vmul.f32 %v2683, %v2933
        %v2938 = vadd.f32 %v2929, %v2934
        %v2939 = vadd.f32 %v2930, %v2935
        %v2940 = vadd.f32 %v2931, %v2936
        %v2941 = vadd.f32 %v2932, %v2937
        %v2942 = vperm.slane %v2531, 1
        %v2943 = vmul.f32 %v2697, %v2942
        %v2944 = vmul.f32 %v2702, %v2942
        %v2945 = vmul.f32 %v2707, %v2942
        %v2946 = vmul.f32 %v2712, %v2942
        %v2947 = vadd.f32 %v2938, %v2943
        %v2948 = vadd.f32 %v2939, %v2944
        %v2949 = vadd.f32 %v2940, %v2945
        %v2950 = vadd.f32 %v2941, %v2946
        %v2951 = vperm.slane %v2545, 1
        %v2952 = vmul.f32 %v2726, %v2951
        %v2953 = vmul.f32 %v2731, %v2951
        %v2954 = vmul.f32 %v2736, %v2951
        %v2955 = vmul.f32 %v2741, %v2951
        %v2956 = vadd.f32 %v2947, %v2952
        %v2957 = vadd.f32 %v2948, %v2953
        %v2958 = vadd.f32 %v2949, %v2954
        %v2959 = vadd.f32 %v2950, %v2955
        %v2960 = vperm.slane %v2548, 1
        %v2961 = vmul.f32 %v2755, %v2960
        %v2962 = vmul.f32 %v2760, %v2960
        %v2963 = vmul.f32 %v2765, %v2960
        %v2964 = vmul.f32 %v2770, %v2960
        %v2965 = vadd.f32 %v2956, %v2961
        %v2966 = vadd.f32 %v2957, %v2962
        %v2967 = vadd.f32 %v2958, %v2963
        %v2968 = vadd.f32 %v2959, %v2964
        %v2969 = vperm.slane %v2551, 1
        %v2970 = vmul.f32 %v2784, %v2969
        %v2971 = vmul.f32 %v2789, %v2969
        %v2972 = vmul.f32 %v2794, %v2969
        %v2973 = vmul.f32 %v2799, %v2969
        %v2974 = vadd.f32 %v2965, %v2970
        %v2975 = vadd.f32 %v2966, %v2971
        %v2976 = vadd.f32 %v2967, %v2972
        %v2977 = vadd.f32 %v2968, %v2973
        %v2978 = vadd.f32 %v2974, %v2813
        %v2979 = vadd.f32 %v2975, %v2818
        %v2980 = vadd.f32 %v2976, %v2823
        %v2981 = vadd.f32 %v2977, %v2828
        %v2982 = vmax.f32 %v2978, 0.0
        %v2983 = vmax.f32 %v2979, 0.0
        %v2984 = vmax.f32 %v2980, 0.0
        %v2985 = vmax.f32 %v2981, 0.0
        %v2986 = vld [vmem:[%s12] sm:$0x7]
        %v2988 = vsel %vm1968, %v2986, 0
        %2990 = vmatpush.msra.mxu0 0.0
        %2991 = vmatpush.msra.mxu0 0.0
        %2992 = vmatpush.msra.mxu0 0.0
        %2993 = vmatpush.msra.mxu0 0.0
        %2994 = vmatpush.msra.mxu0 0.0
        %2995 = vmatpush.msra.mxu0 0.0
        %2996 = vmatpush.msra.mxu0 0.0
        %2997 = vmatpush.msra.mxu0 0.0
        %2998 = vmatpush.msra.mxu0 0.0
        %2999 = vmatpush.msra.mxu0 0.0
        %3000 = vmatpush.msra.mxu0 0.0
        %3001 = vmatpush.msra.mxu0 0.0
        %3002 = vmatpush.msra.mxu0 %v2985
        %3003 = vmatpush.msra.mxu0 %v2984
        %3004 = vmatpush.msra.mxu0 %v2983
        %3005 = vmatpush.msra.mxu0 %v2982
        %3006 = vmatmul.f32.gmra.mxu0 %v2988
        %v3007 = vpop.f32.mrf.mxu0
        %v3008 = vadd.f32 0.0, %v3007
        %3009 = vdwg.mxu0
        %3010 = vrot.lane.b32.xlu0 %v3008, 1
        %v3011 = vpop.permute.xlu0 %3010
        %v3012 = vsel %vm2534, 0.0, %v3011
        %v3014 = vrot.slane %v3008, 2
        %3016 = vrot.lane.b32.xlu0 %v3014, 127
        %v3017 = vpop.permute.xlu0 %3016
        %v3018 = vsel %vm2544, 0.0, %v3017
        %v3020 = vrot.slane %v3012, 7
        %v3022 = vadd.f32 %v3008, %v3020
        %v3024 = vrot.slane %v3018, 7
        %v3026 = vadd.f32 %v3022, %v3024
        %v3027 = vadd.f32 %v3026, %v2879
        %v3028 = vxor.u32 %v3027, 2147483648
        %v3029 = vmul.f32 %v3028, 1.442695
        %v3030 = vpow.pop %v3029
        %v3031 = vadd.f32 %v3030, 1.0
        %v3032 = vrcp.pop %v3031
        %v3033 = vmul.f32 %v3031, %v3032
        %v3034 = vsub.f32 1.0, %v3033
        %v3035 = vmul.f32 %v3032, %v3034
        %v3036 = vadd.f32 %v3032, %v3035
        %vm3037 = vweird.f32 %v3031
        %vm3038 = vweird.f32 %v3032
        %vm3039 = vmor %vm3037, %vm3038
        %v3040 = vsel %vm3039, %v3032, %v3036
        %v3041 = vand.u32 2147483647, %v3031
        %vm3042 = vcmp.eq.f32.partialorder %v3041, 8.507059e+37
        %v3043 = vand.u32 %v3031, 2147483648
        %v3044 = vor.u32 1.1754944e-38, %v3043
        %v3045 = vsel %vm3042, %v3044, %v3040
        %v3046 = vmul.f32 1.0, %v3045
        %3047 = vst [vmem:[%s476] sm:$0x2] %v3046
        %v3048 = vperm.slane %v2535, 2
        %v3049 = vmul.f32 %v2556, %v3048
        %v3050 = vmul.f32 %v2561, %v3048
        %v3051 = vmul.f32 %v2566, %v3048
        %v3052 = vmul.f32 %v2571, %v3048
        %v3053 = vperm.slane %v2538, 2
        %v3054 = vmul.f32 %v2581, %v3053
        %v3055 = vmul.f32 %v2586, %v3053
        %v3056 = vmul.f32 %v2591, %v3053
        %v3057 = vmul.f32 %v2596, %v3053
        %v3058 = vadd.f32 %v3049, %v3054
        %v3059 = vadd.f32 %v3050, %v3055
        %v3060 = vadd.f32 %v3051, %v3056
        %v3061 = vadd.f32 %v3052, %v3057
        %v3062 = vperm.slane %v2541, 2
        %v3063 = vmul.f32 %v2610, %v3062
        %v3064 = vmul.f32 %v2615, %v3062
        %v3065 = vmul.f32 %v2620, %v3062
        %v3066 = vmul.f32 %v2625, %v3062
        %v3067 = vadd.f32 %v3058, %v3063
        %v3068 = vadd.f32 %v3059, %v3064
        %v3069 = vadd.f32 %v3060, %v3065
        %v3070 = vadd.f32 %v3061, %v3066
        %v3071 = vperm.slane %v2527, 2
        %v3072 = vmul.f32 %v2639, %v3071
        %v3073 = vmul.f32 %v2644, %v3071
        %v3074 = vmul.f32 %v2649, %v3071
        %v3075 = vmul.f32 %v2654, %v3071
        %v3076 = vadd.f32 %v3067, %v3072
        %v3077 = vadd.f32 %v3068, %v3073
        %v3078 = vadd.f32 %v3069, %v3074
        %v3079 = vadd.f32 %v3070, %v3075
        %v3080 = vperm.slane %v2529, 2
        %v3081 = vmul.f32 %v2668, %v3080
        %v3082 = vmul.f32 %v2673, %v3080
        %v3083 = vmul.f32 %v2678, %v3080
        %v3084 = vmul.f32 %v2683, %v3080
        %v3085 = vadd.f32 %v3076, %v3081
        %v3086 = vadd.f32 %v3077, %v3082
        %v3087 = vadd.f32 %v3078, %v3083
        %v3088 = vadd.f32 %v3079, %v3084
        %v3089 = vperm.slane %v2531, 2
        %v3090 = vmul.f32 %v2697, %v3089
        %v3091 = vmul.f32 %v2702, %v3089
        %v3092 = vmul.f32 %v2707, %v3089
        %v3093 = vmul.f32 %v2712, %v3089
        %v3094 = vadd.f32 %v3085, %v3090
        %v3095 = vadd.f32 %v3086, %v3091
        %v3096 = vadd.f32 %v3087, %v3092
        %v3097 = vadd.f32 %v3088, %v3093
        %v3098 = vperm.slane %v2545, 2
        %v3099 = vmul.f32 %v2726, %v3098
        %v3100 = vmul.f32 %v2731, %v3098
        %v3101 = vmul.f32 %v2736, %v3098
        %v3102 = vmul.f32 %v2741, %v3098
        %v3103 = vadd.f32 %v3094, %v3099
        %v3104 = vadd.f32 %v3095, %v3100
        %v3105 = vadd.f32 %v3096, %v3101
        %v3106 = vadd.f32 %v3097, %v3102
        %v3107 = vperm.slane %v2548, 2
        %v3108 = vmul.f32 %v2755, %v3107
        %v3109 = vmul.f32 %v2760, %v3107
        %v3110 = vmul.f32 %v2765, %v3107
        %v3111 = vmul.f32 %v2770, %v3107
        %v3112 = vadd.f32 %v3103, %v3108
        %v3113 = vadd.f32 %v3104, %v3109
        %v3114 = vadd.f32 %v3105, %v3110
        %v3115 = vadd.f32 %v3106, %v3111
        %v3116 = vperm.slane %v2551, 2
        %v3117 = vmul.f32 %v2784, %v3116
        %v3118 = vmul.f32 %v2789, %v3116
        %v3119 = vmul.f32 %v2794, %v3116
        %v3120 = vmul.f32 %v2799, %v3116
        %v3121 = vadd.f32 %v3112, %v3117
        %v3122 = vadd.f32 %v3113, %v3118
        %v3123 = vadd.f32 %v3114, %v3119
        %v3124 = vadd.f32 %v3115, %v3120
        %v3125 = vadd.f32 %v3121, %v2813
        %v3126 = vadd.f32 %v3122, %v2818
        %v3127 = vadd.f32 %v3123, %v2823
        %v3128 = vadd.f32 %v3124, %v2828
        %v3129 = vmax.f32 %v3125, 0.0
        %v3130 = vmax.f32 %v3126, 0.0
        %v3131 = vmax.f32 %v3127, 0.0
        %v3132 = vmax.f32 %v3128, 0.0
        %v3133 = vld [vmem:[%s12] sm:$0x7]
        %v3135 = vsel %vm1968, %v3133, 0
        %3137 = vmatpush.msra.mxu0 0.0
        %3138 = vmatpush.msra.mxu0 0.0
        %3139 = vmatpush.msra.mxu0 0.0
        %3140 = vmatpush.msra.mxu0 0.0
        %3141 = vmatpush.msra.mxu0 0.0
        %3142 = vmatpush.msra.mxu0 0.0
        %3143 = vmatpush.msra.mxu0 0.0
        %3144 = vmatpush.msra.mxu0 0.0
        %3145 = vmatpush.msra.mxu0 0.0
        %3146 = vmatpush.msra.mxu0 0.0
        %3147 = vmatpush.msra.mxu0 0.0
        %3148 = vmatpush.msra.mxu0 0.0
        %3149 = vmatpush.msra.mxu0 %v3132
        %3150 = vmatpush.msra.mxu0 %v3131
        %3151 = vmatpush.msra.mxu0 %v3130
        %3152 = vmatpush.msra.mxu0 %v3129
        %3153 = vmatmul.f32.gmra.mxu0 %v3135
        %v3154 = vpop.f32.mrf.mxu0
        %v3155 = vadd.f32 0.0, %v3154
        %3156 = vdwg.mxu0
        %3157 = vrot.lane.b32.xlu0 %v3155, 1
        %v3158 = vpop.permute.xlu0 %3157
        %v3159 = vsel %vm2534, 0.0, %v3158
        %v3161 = vrot.slane %v3155, 2
        %3163 = vrot.lane.b32.xlu0 %v3161, 127
        %v3164 = vpop.permute.xlu0 %3163
        %v3165 = vsel %vm2544, 0.0, %v3164
        %v3167 = vrot.slane %v3159, 7
        %v3169 = vadd.f32 %v3155, %v3167
        %v3171 = vrot.slane %v3165, 7
        %v3173 = vadd.f32 %v3169, %v3171
        %v3174 = vadd.f32 %v3173, %v2879
        %v3175 = vxor.u32 %v3174, 2147483648
        %v3176 = vmul.f32 %v3175, 1.442695
        %v3177 = vpow.pop %v3176
        %v3178 = vadd.f32 %v3177, 1.0
        %v3179 = vrcp.pop %v3178
        %v3180 = vmul.f32 %v3178, %v3179
        %v3181 = vsub.f32 1.0, %v3180
        %v3182 = vmul.f32 %v3179, %v3181
        %v3183 = vadd.f32 %v3179, %v3182
        %vm3184 = vweird.f32 %v3178
        %vm3185 = vweird.f32 %v3179
        %vm3186 = vmor %vm3184, %vm3185
        %v3187 = vsel %vm3186, %v3179, %v3183
        %v3188 = vand.u32 2147483647, %v3178
        %vm3189 = vcmp.eq.f32.partialorder %v3188, 8.507059e+37
        %v3190 = vand.u32 %v3178, 2147483648
        %v3191 = vor.u32 1.1754944e-38, %v3190
        %v3192 = vsel %vm3189, %v3191, %v3187
        %v3193 = vmul.f32 1.0, %v3192
        %3194 = vst [vmem:[%s476 + $0x1] sm:$0x2] %v3193
        %v3195 = vperm.slane %v2535, 3
        %v3196 = vmul.f32 %v2556, %v3195
        %v3197 = vmul.f32 %v2561, %v3195
        %v3198 = vmul.f32 %v2566, %v3195
        %v3199 = vmul.f32 %v2571, %v3195
        %v3200 = vperm.slane %v2538, 3
        %v3201 = vmul.f32 %v2581, %v3200
        %v3202 = vmul.f32 %v2586, %v3200
        %v3203 = vmul.f32 %v2591, %v3200
        %v3204 = vmul.f32 %v2596, %v3200
        %v3205 = vadd.f32 %v3196, %v3201
        %v3206 = vadd.f32 %v3197, %v3202
        %v3207 = vadd.f32 %v3198, %v3203
        %v3208 = vadd.f32 %v3199, %v3204
        %v3209 = vperm.slane %v2541, 3
        %v3210 = vmul.f32 %v2610, %v3209
        %v3211 = vmul.f32 %v2615, %v3209
        %v3212 = vmul.f32 %v2620, %v3209
        %v3213 = vmul.f32 %v2625, %v3209
        %v3214 = vadd.f32 %v3205, %v3210
        %v3215 = vadd.f32 %v3206, %v3211
        %v3216 = vadd.f32 %v3207, %v3212
        %v3217 = vadd.f32 %v3208, %v3213
        %v3218 = vperm.slane %v2527, 3
        %v3219 = vmul.f32 %v2639, %v3218
        %v3220 = vmul.f32 %v2644, %v3218
        %v3221 = vmul.f32 %v2649, %v3218
        %v3222 = vmul.f32 %v2654, %v3218
        %v3223 = vadd.f32 %v3214, %v3219
        %v3224 = vadd.f32 %v3215, %v3220
        %v3225 = vadd.f32 %v3216, %v3221
        %v3226 = vadd.f32 %v3217, %v3222
        %v3227 = vperm.slane %v2529, 3
        %v3228 = vmul.f32 %v2668, %v3227
        %v3229 = vmul.f32 %v2673, %v3227
        %v3230 = vmul.f32 %v2678, %v3227
        %v3231 = vmul.f32 %v2683, %v3227
        %v3232 = vadd.f32 %v3223, %v3228
        %v3233 = vadd.f32 %v3224, %v3229
        %v3234 = vadd.f32 %v3225, %v3230
        %v3235 = vadd.f32 %v3226, %v3231
        %v3236 = vperm.slane %v2531, 3
        %v3237 = vmul.f32 %v2697, %v3236
        %v3238 = vmul.f32 %v2702, %v3236
        %v3239 = vmul.f32 %v2707, %v3236
        %v3240 = vmul.f32 %v2712, %v3236
        %v3241 = vadd.f32 %v3232, %v3237
        %v3242 = vadd.f32 %v3233, %v3238
        %v3243 = vadd.f32 %v3234, %v3239
        %v3244 = vadd.f32 %v3235, %v3240
        %v3245 = vperm.slane %v2545, 3
        %v3246 = vmul.f32 %v2726, %v3245
        %v3247 = vmul.f32 %v2731, %v3245
        %v3248 = vmul.f32 %v2736, %v3245
        %v3249 = vmul.f32 %v2741, %v3245
        %v3250 = vadd.f32 %v3241, %v3246
        %v3251 = vadd.f32 %v3242, %v3247
        %v3252 = vadd.f32 %v3243, %v3248
        %v3253 = vadd.f32 %v3244, %v3249
        %v3254 = vperm.slane %v2548, 3
        %v3255 = vmul.f32 %v2755, %v3254
        %v3256 = vmul.f32 %v2760, %v3254
        %v3257 = vmul.f32 %v2765, %v3254
        %v3258 = vmul.f32 %v2770, %v3254
        %v3259 = vadd.f32 %v3250, %v3255
        %v3260 = vadd.f32 %v3251, %v3256
        %v3261 = vadd.f32 %v3252, %v3257
        %v3262 = vadd.f32 %v3253, %v3258
        %v3263 = vperm.slane %v2551, 3
        %v3264 = vmul.f32 %v2784, %v3263
        %v3265 = vmul.f32 %v2789, %v3263
        %v3266 = vmul.f32 %v2794, %v3263
        %v3267 = vmul.f32 %v2799, %v3263
        %v3268 = vadd.f32 %v3259, %v3264
        %v3269 = vadd.f32 %v3260, %v3265
        %v3270 = vadd.f32 %v3261, %v3266
        %v3271 = vadd.f32 %v3262, %v3267
        %v3272 = vadd.f32 %v3268, %v2813
        %v3273 = vadd.f32 %v3269, %v2818
        %v3274 = vadd.f32 %v3270, %v2823
        %v3275 = vadd.f32 %v3271, %v2828
        %v3276 = vmax.f32 %v3272, 0.0
        %v3277 = vmax.f32 %v3273, 0.0
        %v3278 = vmax.f32 %v3274, 0.0
        %v3279 = vmax.f32 %v3275, 0.0
        %v3280 = vld [vmem:[%s12] sm:$0x7]
        %v3282 = vsel %vm1968, %v3280, 0
        %3284 = vmatpush.msra.mxu0 0.0
        %3285 = vmatpush.msra.mxu0 0.0
        %3286 = vmatpush.msra.mxu0 0.0
        %3287 = vmatpush.msra.mxu0 0.0
        %3288 = vmatpush.msra.mxu0 0.0
        %3289 = vmatpush.msra.mxu0 0.0
        %3290 = vmatpush.msra.mxu0 0.0
        %3291 = vmatpush.msra.mxu0 0.0
        %3292 = vmatpush.msra.mxu0 0.0
        %3293 = vmatpush.msra.mxu0 0.0
        %3294 = vmatpush.msra.mxu0 0.0
        %3295 = vmatpush.msra.mxu0 0.0
        %3296 = vmatpush.msra.mxu0 %v3279
        %3297 = vmatpush.msra.mxu0 %v3278
        %3298 = vmatpush.msra.mxu0 %v3277
        %3299 = vmatpush.msra.mxu0 %v3276
        %3300 = vmatmul.f32.gmra.mxu0 %v3282
        %v3301 = vpop.f32.mrf.mxu0
        %v3302 = vadd.f32 0.0, %v3301
        %3303 = vdwg.mxu0
        %3304 = vrot.lane.b32.xlu0 %v3302, 1
        %v3305 = vpop.permute.xlu0 %3304
        %v3306 = vsel %vm2534, 0.0, %v3305
        %v3308 = vrot.slane %v3302, 2
        %3310 = vrot.lane.b32.xlu0 %v3308, 127
        %v3311 = vpop.permute.xlu0 %3310
        %v3312 = vsel %vm2544, 0.0, %v3311
        %v3314 = vrot.slane %v3306, 7
        %v3316 = vadd.f32 %v3302, %v3314
        %v3318 = vrot.slane %v3312, 7
        %v3320 = vadd.f32 %v3316, %v3318
        %v3321 = vadd.f32 %v3320, %v2879
        %v3322 = vxor.u32 %v3321, 2147483648
        %v3323 = vmul.f32 %v3322, 1.442695
        %v3324 = vpow.pop %v3323
        %v3325 = vadd.f32 %v3324, 1.0
        %v3326 = vrcp.pop %v3325
        %v3327 = vmul.f32 %v3325, %v3326
        %v3328 = vsub.f32 1.0, %v3327
        %v3329 = vmul.f32 %v3326, %v3328
        %v3330 = vadd.f32 %v3326, %v3329
        %vm3331 = vweird.f32 %v3325
        %vm3332 = vweird.f32 %v3326
        %vm3333 = vmor %vm3331, %vm3332
        %v3334 = vsel %vm3333, %v3326, %v3330
        %v3335 = vand.u32 2147483647, %v3325
        %vm3336 = vcmp.eq.f32.partialorder %v3335, 8.507059e+37
        %v3337 = vand.u32 %v3325, 2147483648
        %v3338 = vor.u32 1.1754944e-38, %v3337
        %v3339 = vsel %vm3336, %v3338, %v3334
        %v3340 = vmul.f32 1.0, %v3339
        %3341 = vst [vmem:[%s476 + $0x2] sm:$0x2] %v3340
        %v3342 = vperm.slane %v2535, 4
        %v3343 = vmul.f32 %v2556, %v3342
        %v3344 = vmul.f32 %v2561, %v3342
        %v3345 = vmul.f32 %v2566, %v3342
        %v3346 = vmul.f32 %v2571, %v3342
        %v3347 = vperm.slane %v2538, 4
        %v3348 = vmul.f32 %v2581, %v3347
        %v3349 = vmul.f32 %v2586, %v3347
        %v3350 = vmul.f32 %v2591, %v3347
        %v3351 = vmul.f32 %v2596, %v3347
        %v3352 = vadd.f32 %v3343, %v3348
        %v3353 = vadd.f32 %v3344, %v3349
        %v3354 = vadd.f32 %v3345, %v3350
        %v3355 = vadd.f32 %v3346, %v3351
        %v3356 = vperm.slane %v2541, 4
        %v3357 = vmul.f32 %v2610, %v3356
        %v3358 = vmul.f32 %v2615, %v3356
        %v3359 = vmul.f32 %v2620, %v3356
        %v3360 = vmul.f32 %v2625, %v3356
        %v3361 = vadd.f32 %v3352, %v3357
        %v3362 = vadd.f32 %v3353, %v3358
        %v3363 = vadd.f32 %v3354, %v3359
        %v3364 = vadd.f32 %v3355, %v3360
        %v3365 = vperm.slane %v2527, 4
        %v3366 = vmul.f32 %v2639, %v3365
        %v3367 = vmul.f32 %v2644, %v3365
        %v3368 = vmul.f32 %v2649, %v3365
        %v3369 = vmul.f32 %v2654, %v3365
        %v3370 = vadd.f32 %v3361, %v3366
        %v3371 = vadd.f32 %v3362, %v3367
        %v3372 = vadd.f32 %v3363, %v3368
        %v3373 = vadd.f32 %v3364, %v3369
        %v3374 = vperm.slane %v2529, 4
        %v3375 = vmul.f32 %v2668, %v3374
        %v3376 = vmul.f32 %v2673, %v3374
        %v3377 = vmul.f32 %v2678, %v3374
        %v3378 = vmul.f32 %v2683, %v3374
        %v3379 = vadd.f32 %v3370, %v3375
        %v3380 = vadd.f32 %v3371, %v3376
        %v3381 = vadd.f32 %v3372, %v3377
        %v3382 = vadd.f32 %v3373, %v3378
        %v3383 = vperm.slane %v2531, 4
        %v3384 = vmul.f32 %v2697, %v3383
        %v3385 = vmul.f32 %v2702, %v3383
        %v3386 = vmul.f32 %v2707, %v3383
        %v3387 = vmul.f32 %v2712, %v3383
        %v3388 = vadd.f32 %v3379, %v3384
        %v3389 = vadd.f32 %v3380, %v3385
        %v3390 = vadd.f32 %v3381, %v3386
        %v3391 = vadd.f32 %v3382, %v3387
        %v3392 = vperm.slane %v2545, 4
        %v3393 = vmul.f32 %v2726, %v3392
        %v3394 = vmul.f32 %v2731, %v3392
        %v3395 = vmul.f32 %v2736, %v3392
        %v3396 = vmul.f32 %v2741, %v3392
        %v3397 = vadd.f32 %v3388, %v3393
        %v3398 = vadd.f32 %v3389, %v3394
        %v3399 = vadd.f32 %v3390, %v3395
        %v3400 = vadd.f32 %v3391, %v3396
        %v3401 = vperm.slane %v2548, 4
        %v3402 = vmul.f32 %v2755, %v3401
        %v3403 = vmul.f32 %v2760, %v3401
        %v3404 = vmul.f32 %v2765, %v3401
        %v3405 = vmul.f32 %v2770, %v3401
        %v3406 = vadd.f32 %v3397, %v3402
        %v3407 = vadd.f32 %v3398, %v3403
        %v3408 = vadd.f32 %v3399, %v3404
        %v3409 = vadd.f32 %v3400, %v3405
        %v3410 = vperm.slane %v2551, 4
        %v3411 = vmul.f32 %v2784, %v3410
        %v3412 = vmul.f32 %v2789, %v3410
        %v3413 = vmul.f32 %v2794, %v3410
        %v3414 = vmul.f32 %v2799, %v3410
        %v3415 = vadd.f32 %v3406, %v3411
        %v3416 = vadd.f32 %v3407, %v3412
        %v3417 = vadd.f32 %v3408, %v3413
        %v3418 = vadd.f32 %v3409, %v3414
        %v3419 = vadd.f32 %v3415, %v2813
        %v3420 = vadd.f32 %v3416, %v2818
        %v3421 = vadd.f32 %v3417, %v2823
        %v3422 = vadd.f32 %v3418, %v2828
        %v3423 = vmax.f32 %v3419, 0.0
        %v3424 = vmax.f32 %v3420, 0.0
        %v3425 = vmax.f32 %v3421, 0.0
        %v3426 = vmax.f32 %v3422, 0.0
        %v3427 = vld [vmem:[%s12] sm:$0x7]
        %v3429 = vsel %vm1968, %v3427, 0
        %3431 = vmatpush.msra.mxu0 0.0
        %3432 = vmatpush.msra.mxu0 0.0
        %3433 = vmatpush.msra.mxu0 0.0
        %3434 = vmatpush.msra.mxu0 0.0
        %3435 = vmatpush.msra.mxu0 0.0
        %3436 = vmatpush.msra.mxu0 0.0
        %3437 = vmatpush.msra.mxu0 0.0
        %3438 = vmatpush.msra.mxu0 0.0
        %3439 = vmatpush.msra.mxu0 0.0
        %3440 = vmatpush.msra.mxu0 0.0
        %3441 = vmatpush.msra.mxu0 0.0
        %3442 = vmatpush.msra.mxu0 0.0
        %3443 = vmatpush.msra.mxu0 %v3426
        %3444 = vmatpush.msra.mxu0 %v3425
        %3445 = vmatpush.msra.mxu0 %v3424
        %3446 = vmatpush.msra.mxu0 %v3423
        %3447 = vmatmul.f32.gmra.mxu0 %v3429
        %v3448 = vpop.f32.mrf.mxu0
        %v3449 = vadd.f32 0.0, %v3448
        %3450 = vdwg.mxu0
        %3451 = vrot.lane.b32.xlu0 %v3449, 1
        %v3452 = vpop.permute.xlu0 %3451
        %v3453 = vsel %vm2534, 0.0, %v3452
        %v3455 = vrot.slane %v3449, 2
        %3457 = vrot.lane.b32.xlu0 %v3455, 127
        %v3458 = vpop.permute.xlu0 %3457
        %v3459 = vsel %vm2544, 0.0, %v3458
        %v3461 = vrot.slane %v3453, 7
        %v3463 = vadd.f32 %v3449, %v3461
        %v3465 = vrot.slane %v3459, 7
        %v3467 = vadd.f32 %v3463, %v3465
        %v3468 = vadd.f32 %v3467, %v2879
        %v3469 = vxor.u32 %v3468, 2147483648
        %v3470 = vmul.f32 %v3469, 1.442695
        %v3471 = vpow.pop %v3470
        %v3472 = vadd.f32 %v3471, 1.0
        %v3473 = vrcp.pop %v3472
        %v3474 = vmul.f32 %v3472, %v3473
        %v3475 = vsub.f32 1.0, %v3474
        %v3476 = vmul.f32 %v3473, %v3475
        %v3477 = vadd.f32 %v3473, %v3476
        %vm3478 = vweird.f32 %v3472
        %vm3479 = vweird.f32 %v3473
        %vm3480 = vmor %vm3478, %vm3479
        %v3481 = vsel %vm3480, %v3473, %v3477
        %v3482 = vand.u32 2147483647, %v3472
        %vm3483 = vcmp.eq.f32.partialorder %v3482, 8.507059e+37
        %v3484 = vand.u32 %v3472, 2147483648
        %v3485 = vor.u32 1.1754944e-38, %v3484
        %v3486 = vsel %vm3483, %v3485, %v3481
        %v3487 = vmul.f32 1.0, %v3486
        %3488 = vst [vmem:[%s476 + $0x3] sm:$0x2] %v3487
        %v3489 = vperm.slane %v2535, 5
        %v3490 = vmul.f32 %v2556, %v3489
        %v3491 = vmul.f32 %v2561, %v3489
        %v3492 = vmul.f32 %v2566, %v3489
        %v3493 = vmul.f32 %v2571, %v3489
        %v3494 = vperm.slane %v2538, 5
        %v3495 = vmul.f32 %v2581, %v3494
        %v3496 = vmul.f32 %v2586, %v3494
        %v3497 = vmul.f32 %v2591, %v3494
        %v3498 = vmul.f32 %v2596, %v3494
        %v3499 = vadd.f32 %v3490, %v3495
        %v3500 = vadd.f32 %v3491, %v3496
        %v3501 = vadd.f32 %v3492, %v3497
        %v3502 = vadd.f32 %v3493, %v3498
        %v3503 = vperm.slane %v2541, 5
        %v3504 = vmul.f32 %v2610, %v3503
        %v3505 = vmul.f32 %v2615, %v3503
        %v3506 = vmul.f32 %v2620, %v3503
        %v3507 = vmul.f32 %v2625, %v3503
        %v3508 = vadd.f32 %v3499, %v3504
        %v3509 = vadd.f32 %v3500, %v3505
        %v3510 = vadd.f32 %v3501, %v3506
        %v3511 = vadd.f32 %v3502, %v3507
        %v3512 = vperm.slane %v2527, 5
        %v3513 = vmul.f32 %v2639, %v3512
        %v3514 = vmul.f32 %v2644, %v3512
        %v3515 = vmul.f32 %v2649, %v3512
        %v3516 = vmul.f32 %v2654, %v3512
        %v3517 = vadd.f32 %v3508, %v3513
        %v3518 = vadd.f32 %v3509, %v3514
        %v3519 = vadd.f32 %v3510, %v3515
        %v3520 = vadd.f32 %v3511, %v3516
        %v3521 = vperm.slane %v2529, 5
        %v3522 = vmul.f32 %v2668, %v3521
        %v3523 = vmul.f32 %v2673, %v3521
        %v3524 = vmul.f32 %v2678, %v3521
        %v3525 = vmul.f32 %v2683, %v3521
        %v3526 = vadd.f32 %v3517, %v3522
        %v3527 = vadd.f32 %v3518, %v3523
        %v3528 = vadd.f32 %v3519, %v3524
        %v3529 = vadd.f32 %v3520, %v3525
        %v3530 = vperm.slane %v2531, 5
        %v3531 = vmul.f32 %v2697, %v3530
        %v3532 = vmul.f32 %v2702, %v3530
        %v3533 = vmul.f32 %v2707, %v3530
        %v3534 = vmul.f32 %v2712, %v3530
        %v3535 = vadd.f32 %v3526, %v3531
        %v3536 = vadd.f32 %v3527, %v3532
        %v3537 = vadd.f32 %v3528, %v3533
        %v3538 = vadd.f32 %v3529, %v3534
        %v3539 = vperm.slane %v2545, 5
        %v3540 = vmul.f32 %v2726, %v3539
        %v3541 = vmul.f32 %v2731, %v3539
        %v3542 = vmul.f32 %v2736, %v3539
        %v3543 = vmul.f32 %v2741, %v3539
        %v3544 = vadd.f32 %v3535, %v3540
        %v3545 = vadd.f32 %v3536, %v3541
        %v3546 = vadd.f32 %v3537, %v3542
        %v3547 = vadd.f32 %v3538, %v3543
        %v3548 = vperm.slane %v2548, 5
        %v3549 = vmul.f32 %v2755, %v3548
        %v3550 = vmul.f32 %v2760, %v3548
        %v3551 = vmul.f32 %v2765, %v3548
        %v3552 = vmul.f32 %v2770, %v3548
        %v3553 = vadd.f32 %v3544, %v3549
        %v3554 = vadd.f32 %v3545, %v3550
        %v3555 = vadd.f32 %v3546, %v3551
        %v3556 = vadd.f32 %v3547, %v3552
        %v3557 = vperm.slane %v2551, 5
        %v3558 = vmul.f32 %v2784, %v3557
        %v3559 = vmul.f32 %v2789, %v3557
        %v3560 = vmul.f32 %v2794, %v3557
        %v3561 = vmul.f32 %v2799, %v3557
        %v3562 = vadd.f32 %v3553, %v3558
        %v3563 = vadd.f32 %v3554, %v3559
        %v3564 = vadd.f32 %v3555, %v3560
        %v3565 = vadd.f32 %v3556, %v3561
        %v3566 = vadd.f32 %v3562, %v2813
        %v3567 = vadd.f32 %v3563, %v2818
        %v3568 = vadd.f32 %v3564, %v2823
        %v3569 = vadd.f32 %v3565, %v2828
        %v3570 = vmax.f32 %v3566, 0.0
        %v3571 = vmax.f32 %v3567, 0.0
        %v3572 = vmax.f32 %v3568, 0.0
        %v3573 = vmax.f32 %v3569, 0.0
        %v3574 = vld [vmem:[%s12] sm:$0x7]
        %v3576 = vsel %vm1968, %v3574, 0
        %3578 = vmatpush.msra.mxu0 0.0
        %3579 = vmatpush.msra.mxu0 0.0
        %3580 = vmatpush.msra.mxu0 0.0
        %3581 = vmatpush.msra.mxu0 0.0
        %3582 = vmatpush.msra.mxu0 0.0
        %3583 = vmatpush.msra.mxu0 0.0
        %3584 = vmatpush.msra.mxu0 0.0
        %3585 = vmatpush.msra.mxu0 0.0
        %3586 = vmatpush.msra.mxu0 0.0
        %3587 = vmatpush.msra.mxu0 0.0
        %3588 = vmatpush.msra.mxu0 0.0
        %3589 = vmatpush.msra.mxu0 0.0
        %3590 = vmatpush.msra.mxu0 %v3573
        %3591 = vmatpush.msra.mxu0 %v3572
        %3592 = vmatpush.msra.mxu0 %v3571
        %3593 = vmatpush.msra.mxu0 %v3570
        %3594 = vmatmul.f32.gmra.mxu0 %v3576
        %v3595 = vpop.f32.mrf.mxu0
        %v3596 = vadd.f32 0.0, %v3595
        %3597 = vdwg.mxu0
        %3598 = vrot.lane.b32.xlu0 %v3596, 1
        %v3599 = vpop.permute.xlu0 %3598
        %v3600 = vsel %vm2534, 0.0, %v3599
        %v3602 = vrot.slane %v3596, 2
        %3604 = vrot.lane.b32.xlu0 %v3602, 127
        %v3605 = vpop.permute.xlu0 %3604
        %v3606 = vsel %vm2544, 0.0, %v3605
        %v3608 = vrot.slane %v3600, 7
        %v3610 = vadd.f32 %v3596, %v3608
        %v3612 = vrot.slane %v3606, 7
        %v3614 = vadd.f32 %v3610, %v3612
        %v3615 = vadd.f32 %v3614, %v2879
        %v3616 = vxor.u32 %v3615, 2147483648
        %v3617 = vmul.f32 %v3616, 1.442695
        %v3618 = vpow.pop %v3617
        %v3619 = vadd.f32 %v3618, 1.0
        %v3620 = vrcp.pop %v3619
        %v3621 = vmul.f32 %v3619, %v3620
        %v3622 = vsub.f32 1.0, %v3621
        %v3623 = vmul.f32 %v3620, %v3622
        %v3624 = vadd.f32 %v3620, %v3623
        %vm3625 = vweird.f32 %v3619
        %vm3626 = vweird.f32 %v3620
        %vm3627 = vmor %vm3625, %vm3626
        %v3628 = vsel %vm3627, %v3620, %v3624
        %v3629 = vand.u32 2147483647, %v3619
        %vm3630 = vcmp.eq.f32.partialorder %v3629, 8.507059e+37
        %v3631 = vand.u32 %v3619, 2147483648
        %v3632 = vor.u32 1.1754944e-38, %v3631
        %v3633 = vsel %vm3630, %v3632, %v3628
        %v3634 = vmul.f32 1.0, %v3633
        %3635 = vst [vmem:[%s476 + $0x4] sm:$0x2] %v3634
        %v3636 = vperm.slane %v2535, 6
        %v3637 = vmul.f32 %v2556, %v3636
        %v3638 = vmul.f32 %v2561, %v3636
        %v3639 = vmul.f32 %v2566, %v3636
        %v3640 = vmul.f32 %v2571, %v3636
        %v3641 = vperm.slane %v2538, 6
        %v3642 = vmul.f32 %v2581, %v3641
        %v3643 = vmul.f32 %v2586, %v3641
        %v3644 = vmul.f32 %v2591, %v3641
        %v3645 = vmul.f32 %v2596, %v3641
        %v3646 = vadd.f32 %v3637, %v3642
        %v3647 = vadd.f32 %v3638, %v3643
        %v3648 = vadd.f32 %v3639, %v3644
        %v3649 = vadd.f32 %v3640, %v3645
        %v3650 = vperm.slane %v2541, 6
        %v3651 = vmul.f32 %v2610, %v3650
        %v3652 = vmul.f32 %v2615, %v3650
        %v3653 = vmul.f32 %v2620, %v3650
        %v3654 = vmul.f32 %v2625, %v3650
        %v3655 = vadd.f32 %v3646, %v3651
        %v3656 = vadd.f32 %v3647, %v3652
        %v3657 = vadd.f32 %v3648, %v3653
        %v3658 = vadd.f32 %v3649, %v3654
        %v3659 = vperm.slane %v2527, 6
        %v3660 = vmul.f32 %v2639, %v3659
        %v3661 = vmul.f32 %v2644, %v3659
        %v3662 = vmul.f32 %v2649, %v3659
        %v3663 = vmul.f32 %v2654, %v3659
        %v3664 = vadd.f32 %v3655, %v3660
        %v3665 = vadd.f32 %v3656, %v3661
        %v3666 = vadd.f32 %v3657, %v3662
        %v3667 = vadd.f32 %v3658, %v3663
        %v3668 = vperm.slane %v2529, 6
        %v3669 = vmul.f32 %v2668, %v3668
        %v3670 = vmul.f32 %v2673, %v3668
        %v3671 = vmul.f32 %v2678, %v3668
        %v3672 = vmul.f32 %v2683, %v3668
        %v3673 = vadd.f32 %v3664, %v3669
        %v3674 = vadd.f32 %v3665, %v3670
        %v3675 = vadd.f32 %v3666, %v3671
        %v3676 = vadd.f32 %v3667, %v3672
        %v3677 = vperm.slane %v2531, 6
        %v3678 = vmul.f32 %v2697, %v3677
        %v3679 = vmul.f32 %v2702, %v3677
        %v3680 = vmul.f32 %v2707, %v3677
        %v3681 = vmul.f32 %v2712, %v3677
        %v3682 = vadd.f32 %v3673, %v3678
        %v3683 = vadd.f32 %v3674, %v3679
        %v3684 = vadd.f32 %v3675, %v3680
        %v3685 = vadd.f32 %v3676, %v3681
        %v3686 = vperm.slane %v2545, 6
        %v3687 = vmul.f32 %v2726, %v3686
        %v3688 = vmul.f32 %v2731, %v3686
        %v3689 = vmul.f32 %v2736, %v3686
        %v3690 = vmul.f32 %v2741, %v3686
        %v3691 = vadd.f32 %v3682, %v3687
        %v3692 = vadd.f32 %v3683, %v3688
        %v3693 = vadd.f32 %v3684, %v3689
        %v3694 = vadd.f32 %v3685, %v3690
        %v3695 = vperm.slane %v2548, 6
        %v3696 = vmul.f32 %v2755, %v3695
        %v3697 = vmul.f32 %v2760, %v3695
        %v3698 = vmul.f32 %v2765, %v3695
        %v3699 = vmul.f32 %v2770, %v3695
        %v3700 = vadd.f32 %v3691, %v3696
        %v3701 = vadd.f32 %v3692, %v3697
        %v3702 = vadd.f32 %v3693, %v3698
        %v3703 = vadd.f32 %v3694, %v3699
        %v3704 = vperm.slane %v2551, 6
        %v3705 = vmul.f32 %v2784, %v3704
        %v3706 = vmul.f32 %v2789, %v3704
        %v3707 = vmul.f32 %v2794, %v3704
        %v3708 = vmul.f32 %v2799, %v3704
        %v3709 = vadd.f32 %v3700, %v3705
        %v3710 = vadd.f32 %v3701, %v3706
        %v3711 = vadd.f32 %v3702, %v3707
        %v3712 = vadd.f32 %v3703, %v3708
        %v3713 = vadd.f32 %v3709, %v2813
        %v3714 = vadd.f32 %v3710, %v2818
        %v3715 = vadd.f32 %v3711, %v2823
        %v3716 = vadd.f32 %v3712, %v2828
        %v3717 = vmax.f32 %v3713, 0.0
        %v3718 = vmax.f32 %v3714, 0.0
        %v3719 = vmax.f32 %v3715, 0.0
        %v3720 = vmax.f32 %v3716, 0.0
        %v3721 = vld [vmem:[%s12] sm:$0x7]
        %v3723 = vsel %vm1968, %v3721, 0
        %3725 = vmatpush.msra.mxu0 0.0
        %3726 = vmatpush.msra.mxu0 0.0
        %3727 = vmatpush.msra.mxu0 0.0
        %3728 = vmatpush.msra.mxu0 0.0
        %3729 = vmatpush.msra.mxu0 0.0
        %3730 = vmatpush.msra.mxu0 0.0
        %3731 = vmatpush.msra.mxu0 0.0
        %3732 = vmatpush.msra.mxu0 0.0
        %3733 = vmatpush.msra.mxu0 0.0
        %3734 = vmatpush.msra.mxu0 0.0
        %3735 = vmatpush.msra.mxu0 0.0
        %3736 = vmatpush.msra.mxu0 0.0
        %3737 = vmatpush.msra.mxu0 %v3720
        %3738 = vmatpush.msra.mxu0 %v3719
        %3739 = vmatpush.msra.mxu0 %v3718
        %3740 = vmatpush.msra.mxu0 %v3717
        %3741 = vmatmul.f32.gmra.mxu0 %v3723
        %v3742 = vpop.f32.mrf.mxu0
        %v3743 = vadd.f32 0.0, %v3742
        %3744 = vdwg.mxu0
        %3745 = vrot.lane.b32.xlu0 %v3743, 1
        %v3746 = vpop.permute.xlu0 %3745
        %v3747 = vsel %vm2534, 0.0, %v3746
        %v3749 = vrot.slane %v3743, 2
        %3751 = vrot.lane.b32.xlu0 %v3749, 127
        %v3752 = vpop.permute.xlu0 %3751
        %v3753 = vsel %vm2544, 0.0, %v3752
        %v3755 = vrot.slane %v3747, 7
        %v3757 = vadd.f32 %v3743, %v3755
        %v3759 = vrot.slane %v3753, 7
        %v3761 = vadd.f32 %v3757, %v3759
        %v3762 = vadd.f32 %v3761, %v2879
        %v3763 = vxor.u32 %v3762, 2147483648
        %v3764 = vmul.f32 %v3763, 1.442695
        %v3765 = vpow.pop %v3764
        %v3766 = vadd.f32 %v3765, 1.0
        %v3767 = vrcp.pop %v3766
        %v3768 = vmul.f32 %v3766, %v3767
        %v3769 = vsub.f32 1.0, %v3768
        %v3770 = vmul.f32 %v3767, %v3769
        %v3771 = vadd.f32 %v3767, %v3770
        %vm3772 = vweird.f32 %v3766
        %vm3773 = vweird.f32 %v3767
        %vm3774 = vmor %vm3772, %vm3773
        %v3775 = vsel %vm3774, %v3767, %v3771
        %v3776 = vand.u32 2147483647, %v3766
        %vm3777 = vcmp.eq.f32.partialorder %v3776, 8.507059e+37
        %v3778 = vand.u32 %v3766, 2147483648
        %v3779 = vor.u32 1.1754944e-38, %v3778
        %v3780 = vsel %vm3777, %v3779, %v3775
        %v3781 = vmul.f32 1.0, %v3780
        %3782 = vst [vmem:[%s476 + $0x5] sm:$0x2] %v3781
        %v3783 = vperm.slane %v2535, 7
        %v3784 = vmul.f32 %v2556, %v3783
        %v3785 = vmul.f32 %v2561, %v3783
        %v3786 = vmul.f32 %v2566, %v3783
        %v3787 = vmul.f32 %v2571, %v3783
        %v3788 = vperm.slane %v2538, 7
        %v3789 = vmul.f32 %v2581, %v3788
        %v3790 = vmul.f32 %v2586, %v3788
        %v3791 = vmul.f32 %v2591, %v3788
        %v3792 = vmul.f32 %v2596, %v3788
        %v3793 = vadd.f32 %v3784, %v3789
        %v3794 = vadd.f32 %v3785, %v3790
        %v3795 = vadd.f32 %v3786, %v3791
        %v3796 = vadd.f32 %v3787, %v3792
        %v3797 = vperm.slane %v2541, 7
        %v3798 = vmul.f32 %v2610, %v3797
        %v3799 = vmul.f32 %v2615, %v3797
        %v3800 = vmul.f32 %v2620, %v3797
        %v3801 = vmul.f32 %v2625, %v3797
        %v3802 = vadd.f32 %v3793, %v3798
        %v3803 = vadd.f32 %v3794, %v3799
        %v3804 = vadd.f32 %v3795, %v3800
        %v3805 = vadd.f32 %v3796, %v3801
        %v3806 = vperm.slane %v2527, 7
        %v3807 = vmul.f32 %v2639, %v3806
        %v3808 = vmul.f32 %v2644, %v3806
        %v3809 = vmul.f32 %v2649, %v3806
        %v3810 = vmul.f32 %v2654, %v3806
        %v3811 = vadd.f32 %v3802, %v3807
        %v3812 = vadd.f32 %v3803, %v3808
        %v3813 = vadd.f32 %v3804, %v3809
        %v3814 = vadd.f32 %v3805, %v3810
        %v3815 = vperm.slane %v2529, 7
        %v3816 = vmul.f32 %v2668, %v3815
        %v3817 = vmul.f32 %v2673, %v3815
        %v3818 = vmul.f32 %v2678, %v3815
        %v3819 = vmul.f32 %v2683, %v3815
        %v3820 = vadd.f32 %v3811, %v3816
        %v3821 = vadd.f32 %v3812, %v3817
        %v3822 = vadd.f32 %v3813, %v3818
        %v3823 = vadd.f32 %v3814, %v3819
        %v3824 = vperm.slane %v2531, 7
        %v3825 = vmul.f32 %v2697, %v3824
        %v3826 = vmul.f32 %v2702, %v3824
        %v3827 = vmul.f32 %v2707, %v3824
        %v3828 = vmul.f32 %v2712, %v3824
        %v3829 = vadd.f32 %v3820, %v3825
        %v3830 = vadd.f32 %v3821, %v3826
        %v3831 = vadd.f32 %v3822, %v3827
        %v3832 = vadd.f32 %v3823, %v3828
        %v3833 = vperm.slane %v2545, 7
        %v3834 = vmul.f32 %v2726, %v3833
        %v3835 = vmul.f32 %v2731, %v3833
        %v3836 = vmul.f32 %v2736, %v3833
        %v3837 = vmul.f32 %v2741, %v3833
        %v3838 = vadd.f32 %v3829, %v3834
        %v3839 = vadd.f32 %v3830, %v3835
        %v3840 = vadd.f32 %v3831, %v3836
        %v3841 = vadd.f32 %v3832, %v3837
        %v3842 = vperm.slane %v2548, 7
        %v3843 = vmul.f32 %v2755, %v3842
        %v3844 = vmul.f32 %v2760, %v3842
        %v3845 = vmul.f32 %v2765, %v3842
        %v3846 = vmul.f32 %v2770, %v3842
        %v3847 = vadd.f32 %v3838, %v3843
        %v3848 = vadd.f32 %v3839, %v3844
        %v3849 = vadd.f32 %v3840, %v3845
        %v3850 = vadd.f32 %v3841, %v3846
        %v3851 = vperm.slane %v2551, 7
        %v3852 = vmul.f32 %v2784, %v3851
        %v3853 = vmul.f32 %v2789, %v3851
        %v3854 = vmul.f32 %v2794, %v3851
        %v3855 = vmul.f32 %v2799, %v3851
        %v3856 = vadd.f32 %v3847, %v3852
        %v3857 = vadd.f32 %v3848, %v3853
        %v3858 = vadd.f32 %v3849, %v3854
        %v3859 = vadd.f32 %v3850, %v3855
        %v3860 = vadd.f32 %v3856, %v2813
        %v3861 = vadd.f32 %v3857, %v2818
        %v3862 = vadd.f32 %v3858, %v2823
        %v3863 = vadd.f32 %v3859, %v2828
        %v3864 = vmax.f32 %v3860, 0.0
        %v3865 = vmax.f32 %v3861, 0.0
        %v3866 = vmax.f32 %v3862, 0.0
        %v3867 = vmax.f32 %v3863, 0.0
        %v3868 = vld [vmem:[%s12] sm:$0x7]
        %v3870 = vsel %vm1968, %v3868, 0
        %3872 = vmatpush.msra.mxu0 0.0
        %3873 = vmatpush.msra.mxu0 0.0
        %3874 = vmatpush.msra.mxu0 0.0
        %3875 = vmatpush.msra.mxu0 0.0
        %3876 = vmatpush.msra.mxu0 0.0
        %3877 = vmatpush.msra.mxu0 0.0
        %3878 = vmatpush.msra.mxu0 0.0
        %3879 = vmatpush.msra.mxu0 0.0
        %3880 = vmatpush.msra.mxu0 0.0
        %3881 = vmatpush.msra.mxu0 0.0
        %3882 = vmatpush.msra.mxu0 0.0
        %3883 = vmatpush.msra.mxu0 0.0
        %3884 = vmatpush.msra.mxu0 %v3867
        %3885 = vmatpush.msra.mxu0 %v3866
        %3886 = vmatpush.msra.mxu0 %v3865
        %3887 = vmatpush.msra.mxu0 %v3864
        %3888 = vmatmul.f32.gmra.mxu0 %v3870
        %v3889 = vpop.f32.mrf.mxu0
        %v3890 = vadd.f32 0.0, %v3889
        %3891 = vdwg.mxu0
        %3892 = vrot.lane.b32.xlu0 %v3890, 1
        %v3893 = vpop.permute.xlu0 %3892
        %v3894 = vsel %vm2534, 0.0, %v3893
        %v3896 = vrot.slane %v3890, 2
        %3898 = vrot.lane.b32.xlu0 %v3896, 127
        %v3899 = vpop.permute.xlu0 %3898
        %v3900 = vsel %vm2544, 0.0, %v3899
        %v3902 = vrot.slane %v3894, 7
        %v3904 = vadd.f32 %v3890, %v3902
        %v3906 = vrot.slane %v3900, 7
        %v3908 = vadd.f32 %v3904, %v3906
        %v3909 = vadd.f32 %v3908, %v2879
        %v3910 = vxor.u32 %v3909, 2147483648
        %v3911 = vmul.f32 %v3910, 1.442695
        %v3912 = vpow.pop %v3911
        %v3913 = vadd.f32 %v3912, 1.0
        %v3914 = vrcp.pop %v3913
        %v3915 = vmul.f32 %v3913, %v3914
        %v3916 = vsub.f32 1.0, %v3915
        %v3917 = vmul.f32 %v3914, %v3916
        %v3918 = vadd.f32 %v3914, %v3917
        %vm3919 = vweird.f32 %v3913
        %vm3920 = vweird.f32 %v3914
        %vm3921 = vmor %vm3919, %vm3920
        %v3922 = vsel %vm3921, %v3914, %v3918
        %v3923 = vand.u32 2147483647, %v3913
        %vm3924 = vcmp.eq.f32.partialorder %v3923, 8.507059e+37
        %v3925 = vand.u32 %v3913, 2147483648
        %v3926 = vor.u32 1.1754944e-38, %v3925
        %v3927 = vsel %vm3924, %v3926, %v3922
        %v3928 = vmul.f32 1.0, %v3927
        %3929 = vst [vmem:[%s476 + $0x6] sm:$0x2] %v3928
        %s3930 = sand.u32 %s341, 1
        %s3931 = scalar_lea.sflag [#allocation5], %s3930
        %s3932 = sand.u32 %s341, 1
        %s3933 = smul.addr %s3932, 8
        %s3934 = scalar_lea.vmem [#allocation4], %s3933
        // Predicated region
        $region77: #{probabilistic_segmentation_unet_forward.1} parent=75 // pred_check
          %p3935 = pneg %p351
        $region78: #{probabilistic_segmentation_unet_forward.1} parent=75 // pred_check_branch
          %3937 = sbr.rel (%p3935) target = $region80
        $region79: #{probabilistic_segmentation_unet_forward.1} parent=75 // pred_region
          %3939 = vsyncadd %s3931, 0
          %s3940 = smul.addr %s29, 8
          %s3941 = scalar_lea.hbm %s14, %s3940
          %s3943 = sshll.u32 %s3934, 4
          %s3944 = int_to_ptr.vmem [resolvable:$true] %s3943
          %s3945 = sshll.u32 %s3941, 4
          %s3946 = int_to_ptr.hbm [resolvable:$true] %s3945
          %3948 = dma.vmem_to_hbm [thread:$0]  %s3944, 128, %s3946, %s3931
        $region80: #{probabilistic_segmentation_unet_forward.1} parent=75 // pred_fallthru
          _
      $region76: #{probabilistic_segmentation_unet_forward.1} parent=5 // pred_fallthru
        _
      %p3949 = scmp.le.s32.totalorder 2, %s24
      // Predicated region
      $region81: #{probabilistic_segmentation_unet_forward.1} parent=5 // pred_check
        %p3950 = pneg %p3949
      $region82: #{probabilistic_segmentation_unet_forward.1} parent=5 // pred_check_branch
        %3952 = sbr.rel (%p3950) target = $region84
      $region83: #{probabilistic_segmentation_unet_forward.1} parent=5 // pred_region
        %s3953 = ssub.s32 %s24, 2
        // Predicated region
        $region85: #{probabilistic_segmentation_unet_forward.1} parent=83 // pred_check
          %p3954 = pneg %p357
        $region86: #{probabilistic_segmentation_unet_forward.1} parent=83 // pred_check_branch
          %3956 = sbr.rel (%p3954) target = $region88
        $region87: #{probabilistic_segmentation_unet_forward.1} parent=83 // pred_region
          %s3957 = sand.u32 %s342, 1
          %s3958 = scalar_lea.sflag [#allocation5], %s3957
          %s3959 = sand.u32 %s342, 1
          %s3960 = smul.addr %s3959, 8
          %s3961 = scalar_lea.vmem [#allocation4], %s3960
          %3963 = dma.done %s3958, 128
        $region88: #{probabilistic_segmentation_unet_forward.1} parent=83 // pred_fallthru
          _
      $region84: #{probabilistic_segmentation_unet_forward.1} parent=5 // pred_fallthru
        _
    $region6: #{probabilistic_segmentation_unet_forward.1} parent=1 // loop_footer
      %s28 = sadd.s32 1, %s24
    $region7: #{probabilistic_segmentation_unet_forward.1} parent=1 // loop_footer_branch
      %23 = sbr.rel target = $region3
    $region8: #{probabilistic_segmentation_unet_forward.1} parent=1 // loop_exit
      _
    %3964 = vsyncpa [#allocation5], 1
    %s3965 = scalar_lea.sflag [#allocation5], 1
    %3966 = vsyncpa %s3965, 1

</llo_original>
